<compile_context>
chip_gen: v6e
topology: v6e:2x2x1
jax: 0.10.0
libtpu: 0.0.40
codegen_flags: <defaults>
</compile_context>

<pallas_src>
import jax
import jax.numpy as jnp
from jax.experimental import pallas as pl
from jax.experimental.pallas import tpu as pltpu

IN_C = 3
OUT_C = 128
H, W = 6, 7
KH, KW = 3, 3
BN_EPS = 1e-5

H_PAD, W_PAD = H + 2, W + 2          # 8, 9
PROW = W_PAD * IN_C                  # 27   flattened (wp, ci) per padded row
PAD_FLAT = H_PAD * PROW              # 216  flattened (hp, wp, ci) per sample
K_ROW = KH * PROW                    # 81   contraction length per output row
OUT_ROW = W * OUT_C                  # 896  flattened (w, co) per output row
OUT_FLAT = H * OUT_ROW               # 5376 flattened (h, w, co) per sample


def _conv_bn_relu_kernel(x_ref, w_ref, b_ref, o_ref):
    """Fused conv3x3 + BN(eval) + ReLU for one batch tile.

    x_ref: (TB, 216)   padded NHWC input, (hp, wp, ci) flattened into lanes.
    w_ref: (216, 5376) block-banded, BN-scale-folded conv weight;
                       rows=(hp, wp, ci), cols=(h, w, co).
    b_ref: (1, 5376)   fused conv+BN bias, tiled across all (h, w) positions.
    o_ref: (TB, 5376)  output, (h, w, co) flattened into lanes (lane-dense,
                       128-aligned unmasked stores).
    """
    acc = jnp.dot(x_ref[...], w_ref[...],
                  preferred_element_type=jnp.float32)          # (TB, 5376) f32
    o_ref[...] = jnp.maximum(acc + b_ref[...], 0.0).astype(o_ref.dtype)


def _fold_conv_bn(params, mxu_dtype):
    """Fold conv bias + eval-mode BN into one (216, 5376) weight and one bias.

    Small per-row matrix (81, 896):
        Wf[dh*27 + (w+dw)*3 + ci, w*128 + co] = scale[co]*conv_w[co, ci, dh, dw]
    Big block-banded matrix (216, 5376) placing Wf once per output row h:
        Wbig[h*27 + r, h*896 + c] = Wf[r, c]
    bias_big[(h*7 + w)*128 + co] = beta + scale*(conv_b - running_mean)
    """
    w = params["conv_w"].astype(jnp.float32)          # (O, I, KH, KW)
    b = params["conv_b"].astype(jnp.float32)
    inv_std = jax.lax.rsqrt(params["bn_rvar"].astype(jnp.float32) + BN_EPS)
    scale = params["bn_gamma"].astype(jnp.float32) * inv_std          # (128,)
    bias = params["bn_beta"].astype(jnp.float32) + scale * (
        b - params["bn_rmean"].astype(jnp.float32))                   # (128,)

    w_scaled = w * scale[:, None, None, None]         # (O, I, KH, KW)

    wf = jnp.zeros((K_ROW, OUT_ROW), jnp.float32)     # (81, 896)
    for dh in range(KH):
        for dw in range(KW):
            blk = w_scaled[:, :, dh, dw].T            # (I, O) = (3, 128)
            for wcol in range(W):
                r0 = dh * PROW + (wcol + dw) * IN_C
                c0 = wcol * OUT_C
                wf = wf.at[r0:r0 + IN_C, c0:c0 + OUT_C].set(blk)

    # Block-banded expansion: one band of 81 input-lanes per output row h.
    w_big = jnp.zeros((PAD_FLAT, OUT_FLAT), jnp.float32)      # (216, 5376)
    for h in range(H):
        w_big = w_big.at[h * PROW:h * PROW + K_ROW,
                         h * OUT_ROW:(h + 1) * OUT_ROW].set(wf)

    bias_big = jnp.tile(bias, H * W).reshape(1, OUT_FLAT)     # (1, 5376) f32
    return w_big.astype(mxu_dtype), bias_big


def conv_block_forward(s, params, *, block_batch=128,
                       mxu_dtype=jnp.bfloat16, out_dtype=jnp.float32,
                       output_layout="NCHW"):
    """Forward pass of ConvBlock.

    s: any array reshapeable to (-1, 3, 6, 7) (NCHW, like the torch module).
    output_layout: "NCHW" matches torch; "NHWC" skips the final transpose
                   (preferred for downstream Pallas consumers).
    """
    if s.size % (IN_C * H * W) != 0:
        raise ValueError(
            f"input of size {s.size} is not reshapeable to (-1, 3, 6, 7)")

    x = jnp.reshape(s, (-1, IN_C, H, W)).astype(jnp.float32)   # s.view(...)
    n = x.shape[0]

    # NCHW -> NHWC, zero-pad spatial by 1, flatten per sample, cast for MXU.
    x_nhwc = jnp.transpose(x, (0, 2, 3, 1))                    # (N, 6, 7, 3)
    xp = jnp.pad(x_nhwc, ((0, 0), (1, 1), (1, 1), (0, 0)))     # (N, 8, 9, 3)
    x_flat = xp.reshape(n, PAD_FLAT).astype(mxu_dtype)         # (N, 216)

    w_big, bias_big = _fold_conv_bn(params, mxu_dtype)

    # Batch tile: sublane-aligned (multiple of 8); ~11 MiB VMEM at TB=128.
    tb = max(8, min(block_batch, n))
    tb = ((tb + 7) // 8) * 8
    grid = (pl.cdiv(n, tb),)

    out_flat = pl.pallas_call(
        _conv_bn_relu_kernel,
        out_shape=jax.ShapeDtypeStruct((n, OUT_FLAT), out_dtype),
        grid_spec=pltpu.PrefetchScalarGridSpec(
            num_scalar_prefetch=0,
            grid=grid,
            in_specs=[
                pl.BlockSpec((tb, PAD_FLAT), lambda b: (b, 0)),
                pl.BlockSpec((PAD_FLAT, OUT_FLAT), lambda b: (0, 0)),
                pl.BlockSpec((1, OUT_FLAT), lambda b: (0, 0)),
            ],
            out_specs=pl.BlockSpec((tb, OUT_FLAT), lambda b: (b, 0)),
        ),
        compiler_params=pltpu.CompilerParams(
            dimension_semantics=("parallel",),
            vmem_limit_bytes=40 * 1024 * 1024),
    )(x_flat, w_big, bias_big)

    out_nhwc = out_flat.reshape(n, H, W, OUT_C)                # free reshape
    if output_layout == "NHWC":
        return out_nhwc
    return jnp.transpose(out_nhwc, (0, 3, 1, 2))               # (N, 128, 6, 7)


def init_params(key):
    k = jax.random.split(key, 6)
    fan_in = IN_C * KH * KW
    bound = 1.0 / jnp.sqrt(fan_in)
    return {
        "conv_w": jax.random.uniform(k[0], (OUT_C, IN_C, KH, KW),
                                     jnp.float32, -bound, bound),
        "conv_b": jax.random.uniform(k[1], (OUT_C,), jnp.float32, -bound, bound),
        "bn_gamma": 1.0 + 0.1 * jax.random.normal(k[2], (OUT_C,), jnp.float32),
        "bn_beta": 0.1 * jax.random.normal(k[3], (OUT_C,), jnp.float32),
        "bn_rmean": 0.05 * jax.random.normal(k[4], (OUT_C,), jnp.float32),
        "bn_rvar": jnp.abs(1.0 + 0.1 * jax.random.normal(k[5], (OUT_C,),
                                                         jnp.float32)),
    }


def reference_forward(s, params):
    """Pure-JAX reference (lax.conv) for correctness checking (NCHW out)."""
    x = jnp.reshape(s, (-1, IN_C, H, W)).astype(jnp.float32)
    y = jax.lax.conv_general_dilated(
        x, params["conv_w"], window_strides=(1, 1), padding=((1, 1), (1, 1)),
        dimension_numbers=("NCHW", "OIHW", "NCHW"))
    y = y + params["conv_b"].reshape(1, OUT_C, 1, 1)
    inv_std = 1.0 / jnp.sqrt(params["bn_rvar"] + BN_EPS)
    y = (y - params["bn_rmean"].reshape(1, OUT_C, 1, 1)) * \
        (params["bn_gamma"] * inv_std).reshape(1, OUT_C, 1, 1) + \
        params["bn_beta"].reshape(1, OUT_C, 1, 1)
    return jnp.maximum(y, 0.0)


if __name__ == "__main__":
    key = jax.random.PRNGKey(0)
    pkey, k_small, k_big = jax.random.split(key, 3)
    params = init_params(pkey)

    fwd = jax.jit(conv_block_forward,
                  static_argnames=("block_batch", "mxu_dtype", "out_dtype",
                                   "output_layout"))

    # Connect-4 boards: (batch, 3, 6, 7) NCHW, like the torch module.
    x_small = jax.random.normal(k_small, (2, 3, 6, 7), jnp.float32)
    x_big = jax.random.normal(k_big, (32, 3, 6, 7), jnp.float32)

    # 1) Exact-precision path (f32 MXU operands), tiny batch / partial block.
    out_f32 = jax.block_until_ready(
        fwd(x_small, params, mxu_dtype=jnp.float32))
    ref_small = jax.block_until_ready(reference_forward(x_small, params))
    assert out_f32.shape == (2, 128, 6, 7)
    assert jnp.allclose(out_f32, ref_small, atol=1e-4, rtol=1e-4)

    # 2) Default path: bf16 MXU operands, f32 accumulate/epilogue, 4-step
    #    "parallel" grid (block_batch=8).
    out_bf = jax.block_until_ready(fwd(x_big, params, block_batch=8))
    ref_big = jax.block_until_ready(reference_forward(x_big, params))
    assert out_bf.shape == (32, 128, 6, 7)
    assert jnp.allclose(out_bf, ref_big, atol=3e-2, rtol=3e-2)

    # 3) NHWC output path (skips the NCHW transpose HBM pass).
    out_nhwc = jax.block_until_ready(
        fwd(x_big, params, block_batch=8, output_layout="NHWC"))
    assert out_nhwc.shape == (32, 6, 7, 128)
    assert jnp.allclose(jnp.transpose(out_nhwc, (0, 3, 1, 2)), ref_big,
                        atol=3e-2, rtol=3e-2)

    print("KERNEL_OK")
</pallas_src>

<mosaic_0001>
module attributes {stable_mosaic.version = 11 : i64} {
  func.func @_conv_bn_relu_kernel(%arg0: i32, %arg1: memref<8x216xf32, #tpu.memory_space<vmem>>, %arg2: memref<216x5376xf32, #tpu.memory_space<vmem>>, %arg3: memref<1x5376xf32, #tpu.memory_space<vmem>>, %arg4: memref<8x5376xf32, #tpu.memory_space<vmem>>) attributes {dimension_semantics = [#tpu.dimension_semantics<parallel>], iteration_bounds = array<i64: 1>, scalar_prefetch = 0 : i64, scratch_operands = 0 : i64, tpu.core_type = #tpu.core_type<tc>, window_params = [{transform_indices = @transform_0, window_bounds = array<i64: 8, 216>}, {pipeline_mode = #tpu.pipeline_mode<synchronous>, transform_indices = @transform_1, window_bounds = array<i64: 216, 5376>}, {pipeline_mode = #tpu.pipeline_mode<synchronous>, transform_indices = @transform_2, window_bounds = array<i64: 1, 5376>}, {transform_indices = @transform_3, window_bounds = array<i64: 8, 5376>}]} {
    %c0 = arith.constant 0 : index
    %c0_0 = arith.constant 0 : index
    %0 = vector.load %arg1[%c0, %c0_0] : memref<8x216xf32, #tpu.memory_space<vmem>>, vector<8x216xf32>
    %c0_1 = arith.constant 0 : index
    %c0_2 = arith.constant 0 : index
    %1 = vector.load %arg2[%c0_1, %c0_2] : memref<216x5376xf32, #tpu.memory_space<vmem>>, vector<216x5376xf32>
    %cst = arith.constant dense<0.000000e+00> : vector<8x5376xf32>
    %2 = tpu.matmul %0, %1, %cst {dimension_numbers = #tpu.dot_dimension_numbers<[1], [0], [0], [1], [0, 0, 1, 1], [], []>} : vector<8x216xf32>, vector<216x5376xf32>, vector<8x5376xf32> -> vector<8x5376xf32>
    %c0_3 = arith.constant 0 : index
    %c0_4 = arith.constant 0 : index
    %3 = vector.load %arg3[%c0_3, %c0_4] : memref<1x5376xf32, #tpu.memory_space<vmem>>, vector<1x5376xf32>
    %4 = vector.broadcast %3 : vector<1x5376xf32> to vector<8x5376xf32>
    %5 = arith.addf %2, %4 : vector<8x5376xf32>
    %cst_5 = arith.constant 0.000000e+00 : f32
    %6 = vector.broadcast %cst_5 : f32 to vector<8x5376xf32>
    %7 = arith.maximumf %5, %6 : vector<8x5376xf32>
    %c0_6 = arith.constant 0 : index
    %c0_7 = arith.constant 0 : index
    %8 = vector.load %arg4[%c0_6, %c0_7] : memref<8x5376xf32, #tpu.memory_space<vmem>>, vector<8x5376xf32>
    tpu.vector_store %arg4[%c0_6, %c0_7], %7 {strides = array<i32>} : memref<8x5376xf32, #tpu.memory_space<vmem>>, vector<8x5376xf32>,
    return
  }
  func.func @transform_0(%arg0: i32) -> (i32, i32) {
    %c0_i32 = arith.constant 0 : i32
    %c0_i32_0 = arith.constant 0 : i32
    return %arg0, %c0_i32 : i32, i32
  }
  func.func @transform_1(%arg0: i32) -> (i32, i32) {
    %c0_i32 = arith.constant 0 : i32
    %c0_i32_0 = arith.constant 0 : i32
    %c0_i32_1 = arith.constant 0 : i32
    return %c0_i32, %c0_i32_0 : i32, i32
  }
  func.func @transform_2(%arg0: i32) -> (i32, i32) {
    %c0_i32 = arith.constant 0 : i32
    %c0_i32_0 = arith.constant 0 : i32
    %c0_i32_1 = arith.constant 0 : i32
    return %c0_i32, %c0_i32_0 : i32, i32
  }
  func.func @transform_3(%arg0: i32) -> (i32, i32) {
    %c0_i32 = arith.constant 0 : i32
    %c0_i32_0 = arith.constant 0 : i32
    return %arg0, %c0_i32 : i32, i32
  }
}

</mosaic_0001>

<llo_original>
// kernel: conv_block_forward.1
$region0: #{conv_block_forward.1}
  #allocation0 [shape = 'u32[]', space=smem, size = 0x4, offset = 0x4, fixed_abs, tag = 'smem constant byte address 0x4 - core index']
  #allocation1 [shape = 'u32[144,128]{1,0:T(1,128)}', space=vmem, size = 0x12000, scoped, tag = 'internal scratch']
  %s0 = inlined_call_operand.vmem [shape: f32[2,216], index: 0, kind: input, shape index: {}]
  %s1 = inlined_call_operand.vmem [shape: f32[216,5376], index: 1, kind: input, shape index: {}]
  %s2 = inlined_call_operand.vmem [shape: f32[1,5376], index: 2, kind: input, shape index: {}]
  %s3 = inlined_call_operand.vmem [shape: f32[2,5376], index: 3, kind: output, shape index: {}]
  %s4 = sld [smem:[#allocation0]]
  $region44: #{conv_block_forward.1} parent=0
    _
  %s6 = ssub.s32 1, %s4
  %s7 = scalar_select 0, %s6, %s4
  $region1: #{conv_block_forward.1} parent=0
    #allocation2 [shape = 'u8[172032]{0}', space=vmem, size = 0x2a000, scoped, tag = 'output window, operand 0, single buffered']
    // Predicated region
    $region2: #{conv_block_forward.1} parent=1 // pred_check
      _
    $region3: #{conv_block_forward.1} parent=1 // pred_check_branch
      %9 = sbr.rel (0) target = $region5
    $region4: #{conv_block_forward.1} parent=1 // pred_region
      _
    $region5: #{conv_block_forward.1} parent=1 // pred_fallthru
      _
    // Predicated region
    $region6: #{conv_block_forward.1} parent=1 // pred_check
      _
    $region7: #{conv_block_forward.1} parent=1 // pred_check_branch
      %11 = sbr.rel (0) target = $region9
    $region8: #{conv_block_forward.1} parent=1 // pred_region
      _
    $region9: #{conv_block_forward.1} parent=1 // pred_fallthru
      _
    // Predicated region
    $region10: #{conv_block_forward.1} parent=1 // pred_check
      _
    $region11: #{conv_block_forward.1} parent=1 // pred_check_branch
      %13 = sbr.rel (0) target = $region13
    $region12: #{conv_block_forward.1} parent=1 // pred_region
      _
    $region13: #{conv_block_forward.1} parent=1 // pred_fallthru
      _
    %v14 = vld [vmem:[%s0] sm:$0xf]
    %v15 = vld [vmem:[%s0 + $0x4] sm:$0xf]
    %v16 = vld [vmem:[%s0 + $0x8] sm:$0xf]
    %v17 = vld [vmem:[%s0 + $0xc] sm:$0xf]
    %v18 = vld [vmem:[%s1] sm:$0xff]
    %v19 = vld [vmem:[%s1 + $0x8] sm:$0xff]
    %v20 = vld [vmem:[%s1 + $0x10] sm:$0xff]
    %v21 = vld [vmem:[%s1 + $0x18] sm:$0xff]
    %v22 = vld [vmem:[%s1 + $0x20] sm:$0xff]
    %v23 = vld [vmem:[%s1 + $0x28] sm:$0xff]
    %v24 = vld [vmem:[%s1 + $0x30] sm:$0xff]
    %v25 = vld [vmem:[%s1 + $0x38] sm:$0xff]
    %v26 = vld [vmem:[%s1 + $0x40] sm:$0xff]
    %v27 = vld [vmem:[%s1 + $0x48] sm:$0xff]
    %v28 = vld [vmem:[%s1 + $0x50] sm:$0xff]
    %v29 = vld [vmem:[%s1 + $0x58] sm:$0xff]
    %v30 = vld [vmem:[%s1 + $0x60] sm:$0xff]
    %v31 = vld [vmem:[%s1 + $0x68] sm:$0xff]
    %v32 = vld [vmem:[%s1 + $0x70] sm:$0xff]
    %v33 = vld [vmem:[%s1 + $0x78] sm:$0xff]
    %v34 = vld [vmem:[%s1 + $0x80] sm:$0xff]
    %v35 = vld [vmem:[%s1 + $0x88] sm:$0xff]
    %v36 = vld [vmem:[%s1 + $0x90] sm:$0xff]
    %v37 = vld [vmem:[%s1 + $0x98] sm:$0xff]
    %v38 = vld [vmem:[%s1 + $0xa0] sm:$0xff]
    %v39 = vld [vmem:[%s1 + $0xa8] sm:$0xff]
    %v40 = vld [vmem:[%s1 + $0xb0] sm:$0xff]
    %v41 = vld [vmem:[%s1 + $0xb8] sm:$0xff]
    %v42 = vld [vmem:[%s1 + $0xc0] sm:$0xff]
    %v43 = vld [vmem:[%s1 + $0xc8] sm:$0xff]
    %v44 = vld [vmem:[%s1 + $0xd0] sm:$0xff]
    %v45 = vld [vmem:[%s1 + $0xd8] sm:$0xff]
    %v46 = vld [vmem:[%s1 + $0xe0] sm:$0xff]
    %v47 = vld [vmem:[%s1 + $0xe8] sm:$0xff]
    %v48 = vld [vmem:[%s1 + $0xf0] sm:$0xff]
    %v49 = vld [vmem:[%s1 + $0xf8] sm:$0xff]
    %v50 = vld [vmem:[%s1 + $0x100] sm:$0xff]
    %v51 = vld [vmem:[%s1 + $0x108] sm:$0xff]
    %v52 = vld [vmem:[%s1 + $0x110] sm:$0xff]
    %v53 = vld [vmem:[%s1 + $0x118] sm:$0xff]
    %v54 = vld [vmem:[%s1 + $0x120] sm:$0xff]
    %v55 = vld [vmem:[%s1 + $0x128] sm:$0xff]
    %v56 = vld [vmem:[%s1 + $0x130] sm:$0xff]
    %v57 = vld [vmem:[%s1 + $0x138] sm:$0xff]
    %v58 = vld [vmem:[%s1 + $0x140] sm:$0xff]
    %v59 = vld [vmem:[%s1 + $0x148] sm:$0xff]
    %v60 = vld [vmem:[%s1 + $0x150] sm:$0xff]
    %v61 = vld [vmem:[%s1 + $0x158] sm:$0xff]
    %v62 = vld [vmem:[%s1 + $0x160] sm:$0xff]
    %v63 = vld [vmem:[%s1 + $0x168] sm:$0xff]
    %v64 = vld [vmem:[%s1 + $0x170] sm:$0xff]
    %v65 = vld [vmem:[%s1 + $0x178] sm:$0xff]
    %v66 = vld [vmem:[%s1 + $0x180] sm:$0xff]
    %v67 = vld [vmem:[%s1 + $0x188] sm:$0xff]
    %v68 = vld [vmem:[%s1 + $0x190] sm:$0xff]
    %v69 = vld [vmem:[%s1 + $0x198] sm:$0xff]
    %v70 = vld [vmem:[%s1 + $0x1a0] sm:$0xff]
    %v71 = vld [vmem:[%s1 + $0x1a8] sm:$0xff]
    %v72 = vld [vmem:[%s1 + $0x1b0] sm:$0xff]
    %v73 = vld [vmem:[%s1 + $0x1b8] sm:$0xff]
    %v74 = vld [vmem:[%s1 + $0x1c0] sm:$0xff]
    %v75 = vld [vmem:[%s1 + $0x1c8] sm:$0xff]
    %v76 = vld [vmem:[%s1 + $0x1d0] sm:$0xff]
    %v77 = vld [vmem:[%s1 + $0x1d8] sm:$0xff]
    %v78 = vld [vmem:[%s1 + $0x1e0] sm:$0xff]
    %v79 = vld [vmem:[%s1 + $0x1e8] sm:$0xff]
    %v80 = vld [vmem:[%s1 + $0x1f0] sm:$0xff]
    %v81 = vld [vmem:[%s1 + $0x1f8] sm:$0xff]
    %v82 = vld [vmem:[%s1 + $0x200] sm:$0xff]
    %v83 = vld [vmem:[%s1 + $0x208] sm:$0xff]
    %v84 = vld [vmem:[%s1 + $0x210] sm:$0xff]
    %v85 = vld [vmem:[%s1 + $0x218] sm:$0xff]
    %v86 = vld [vmem:[%s1 + $0x220] sm:$0xff]
    %v87 = vld [vmem:[%s1 + $0x228] sm:$0xff]
    %v88 = vld [vmem:[%s1 + $0x230] sm:$0xff]
    %v89 = vld [vmem:[%s1 + $0x238] sm:$0xff]
    %v90 = vld [vmem:[%s1 + $0x240] sm:$0xff]
    %v91 = vld [vmem:[%s1 + $0x248] sm:$0xff]
    %v92 = vld [vmem:[%s1 + $0x250] sm:$0xff]
    %v93 = vld [vmem:[%s1 + $0x258] sm:$0xff]
    %v94 = vld [vmem:[%s1 + $0x260] sm:$0xff]
    %v95 = vld [vmem:[%s1 + $0x268] sm:$0xff]
    %v96 = vld [vmem:[%s1 + $0x270] sm:$0xff]
    %v97 = vld [vmem:[%s1 + $0x278] sm:$0xff]
    %v98 = vld [vmem:[%s1 + $0x280] sm:$0xff]
    %v99 = vld [vmem:[%s1 + $0x288] sm:$0xff]
    %v100 = vld [vmem:[%s1 + $0x290] sm:$0xff]
    %v101 = vld [vmem:[%s1 + $0x298] sm:$0xff]
    %v102 = vld [vmem:[%s1 + $0x2a0] sm:$0xff]
    %v103 = vld [vmem:[%s1 + $0x2a8] sm:$0xff]
    %v104 = vld [vmem:[%s1 + $0x2b0] sm:$0xff]
    %v105 = vld [vmem:[%s1 + $0x2b8] sm:$0xff]
    %v106 = vld [vmem:[%s1 + $0x2c0] sm:$0xff]
    %v107 = vld [vmem:[%s1 + $0x2c8] sm:$0xff]
    %v108 = vld [vmem:[%s1 + $0x2d0] sm:$0xff]
    %v109 = vld [vmem:[%s1 + $0x2d8] sm:$0xff]
    %v110 = vld [vmem:[%s1 + $0x2e0] sm:$0xff]
    %v111 = vld [vmem:[%s1 + $0x2e8] sm:$0xff]
    %v112 = vld [vmem:[%s1 + $0x2f0] sm:$0xff]
    %v113 = vld [vmem:[%s1 + $0x2f8] sm:$0xff]
    %v114 = vld [vmem:[%s1 + $0x300] sm:$0xff]
    %v115 = vld [vmem:[%s1 + $0x308] sm:$0xff]
    %v116 = vld [vmem:[%s1 + $0x310] sm:$0xff]
    %v117 = vld [vmem:[%s1 + $0x318] sm:$0xff]
    %v118 = vld [vmem:[%s1 + $0x320] sm:$0xff]
    %v119 = vld [vmem:[%s1 + $0x328] sm:$0xff]
    %v120 = vld [vmem:[%s1 + $0x330] sm:$0xff]
    %v121 = vld [vmem:[%s1 + $0x338] sm:$0xff]
    %v122 = vld [vmem:[%s1 + $0x340] sm:$0xff]
    %v123 = vld [vmem:[%s1 + $0x348] sm:$0xff]
    %v124 = vld [vmem:[%s1 + $0x350] sm:$0xff]
    %v125 = vld [vmem:[%s1 + $0x358] sm:$0xff]
    %v126 = vld [vmem:[%s1 + $0x360] sm:$0xff]
    %v127 = vld [vmem:[%s1 + $0x368] sm:$0xff]
    %v128 = vld [vmem:[%s1 + $0x370] sm:$0xff]
    %v129 = vld [vmem:[%s1 + $0x378] sm:$0xff]
    %v130 = vld [vmem:[%s1 + $0x380] sm:$0xff]
    %v131 = vld [vmem:[%s1 + $0x388] sm:$0xff]
    %v132 = vld [vmem:[%s1 + $0x390] sm:$0xff]
    %v133 = vld [vmem:[%s1 + $0x398] sm:$0xff]
    %v134 = vld [vmem:[%s1 + $0x3a0] sm:$0xff]
    %v135 = vld [vmem:[%s1 + $0x3a8] sm:$0xff]
    %v136 = vld [vmem:[%s1 + $0x3b0] sm:$0xff]
    %v137 = vld [vmem:[%s1 + $0x3b8] sm:$0xff]
    %v138 = vld [vmem:[%s1 + $0x3c0] sm:$0xff]
    %v139 = vld [vmem:[%s1 + $0x3c8] sm:$0xff]
    %v140 = vld [vmem:[%s1 + $0x3d0] sm:$0xff]
    %v141 = vld [vmem:[%s1 + $0x3d8] sm:$0xff]
    %v142 = vld [vmem:[%s1 + $0x3e0] sm:$0xff]
    %v143 = vld [vmem:[%s1 + $0x3e8] sm:$0xff]
    %v144 = vld [vmem:[%s1 + $0x3f0] sm:$0xff]
    %v145 = vld [vmem:[%s1 + $0x3f8] sm:$0xff]
    %v146 = vld [vmem:[%s1 + $0x400] sm:$0xff]
    %v147 = vld [vmem:[%s1 + $0x408] sm:$0xff]
    %v148 = vld [vmem:[%s1 + $0x410] sm:$0xff]
    %v149 = vld [vmem:[%s1 + $0x418] sm:$0xff]
    %v150 = vld [vmem:[%s1 + $0x420] sm:$0xff]
    %v151 = vld [vmem:[%s1 + $0x428] sm:$0xff]
    %v152 = vld [vmem:[%s1 + $0x430] sm:$0xff]
    %v153 = vld [vmem:[%s1 + $0x438] sm:$0xff]
    %v154 = vld [vmem:[%s1 + $0x440] sm:$0xff]
    %v155 = vld [vmem:[%s1 + $0x448] sm:$0xff]
    %v156 = vld [vmem:[%s1 + $0x450] sm:$0xff]
    %v157 = vld [vmem:[%s1 + $0x458] sm:$0xff]
    %v158 = vld [vmem:[%s1 + $0x460] sm:$0xff]
    %v159 = vld [vmem:[%s1 + $0x468] sm:$0xff]
    %v160 = vld [vmem:[%s1 + $0x470] sm:$0xff]
    %v161 = vld [vmem:[%s1 + $0x478] sm:$0xff]
    %v162 = vld [vmem:[%s1 + $0x480] sm:$0xff]
    %v163 = vld [vmem:[%s1 + $0x488] sm:$0xff]
    %v164 = vld [vmem:[%s1 + $0x490] sm:$0xff]
    %v165 = vld [vmem:[%s1 + $0x498] sm:$0xff]
    %v166 = vld [vmem:[%s1 + $0x4a0] sm:$0xff]
    %v167 = vld [vmem:[%s1 + $0x4a8] sm:$0xff]
    %v168 = vld [vmem:[%s1 + $0x4b0] sm:$0xff]
    %v169 = vld [vmem:[%s1 + $0x4b8] sm:$0xff]
    %v170 = vld [vmem:[%s1 + $0x4c0] sm:$0xff]
    %v171 = vld [vmem:[%s1 + $0x4c8] sm:$0xff]
    %v172 = vld [vmem:[%s1 + $0x4d0] sm:$0xff]
    %v173 = vld [vmem:[%s1 + $0x4d8] sm:$0xff]
    %v174 = vld [vmem:[%s1 + $0x4e0] sm:$0xff]
    %v175 = vld [vmem:[%s1 + $0x4e8] sm:$0xff]
    %v176 = vld [vmem:[%s1 + $0x4f0] sm:$0xff]
    %v177 = vld [vmem:[%s1 + $0x4f8] sm:$0xff]
    %v178 = vld [vmem:[%s1 + $0x500] sm:$0xff]
    %v179 = vld [vmem:[%s1 + $0x508] sm:$0xff]
    %v180 = vld [vmem:[%s1 + $0x510] sm:$0xff]
    %v181 = vld [vmem:[%s1 + $0x518] sm:$0xff]
    %v182 = vld [vmem:[%s1 + $0x520] sm:$0xff]
    %v183 = vld [vmem:[%s1 + $0x528] sm:$0xff]
    %v184 = vld [vmem:[%s1 + $0x530] sm:$0xff]
    %v185 = vld [vmem:[%s1 + $0x538] sm:$0xff]
    %v186 = vld [vmem:[%s1 + $0x540] sm:$0xff]
    %v187 = vld [vmem:[%s1 + $0x548] sm:$0xff]
    %v188 = vld [vmem:[%s1 + $0x550] sm:$0xff]
    %v189 = vld [vmem:[%s1 + $0x558] sm:$0xff]
    %v190 = vld [vmem:[%s1 + $0x560] sm:$0xff]
    %v191 = vld [vmem:[%s1 + $0x568] sm:$0xff]
    %v192 = vld [vmem:[%s1 + $0x570] sm:$0xff]
    %v193 = vld [vmem:[%s1 + $0x578] sm:$0xff]
    %v194 = vld [vmem:[%s1 + $0x580] sm:$0xff]
    %v195 = vld [vmem:[%s1 + $0x588] sm:$0xff]
    %v196 = vld [vmem:[%s1 + $0x590] sm:$0xff]
    %v197 = vld [vmem:[%s1 + $0x598] sm:$0xff]
    %v198 = vld [vmem:[%s1 + $0x5a0] sm:$0xff]
    %v199 = vld [vmem:[%s1 + $0x5a8] sm:$0xff]
    %v200 = vld [vmem:[%s1 + $0x5b0] sm:$0xff]
    %v201 = vld [vmem:[%s1 + $0x5b8] sm:$0xff]
    %v202 = vld [vmem:[%s1 + $0x5c0] sm:$0xff]
    %v203 = vld [vmem:[%s1 + $0x5c8] sm:$0xff]
    %v204 = vld [vmem:[%s1 + $0x5d0] sm:$0xff]
    %v205 = vld [vmem:[%s1 + $0x5d8] sm:$0xff]
    %v206 = vld [vmem:[%s1 + $0x5e0] sm:$0xff]
    %v207 = vld [vmem:[%s1 + $0x5e8] sm:$0xff]
    %v208 = vld [vmem:[%s1 + $0x5f0] sm:$0xff]
    %v209 = vld [vmem:[%s1 + $0x5f8] sm:$0xff]
    %v210 = vld [vmem:[%s1 + $0x600] sm:$0xff]
    %v211 = vld [vmem:[%s1 + $0x608] sm:$0xff]
    %v212 = vld [vmem:[%s1 + $0x610] sm:$0xff]
    %v213 = vld [vmem:[%s1 + $0x618] sm:$0xff]
    %v214 = vld [vmem:[%s1 + $0x620] sm:$0xff]
    %v215 = vld [vmem:[%s1 + $0x628] sm:$0xff]
    %v216 = vld [vmem:[%s1 + $0x630] sm:$0xff]
    %v217 = vld [vmem:[%s1 + $0x638] sm:$0xff]
    %v218 = vld [vmem:[%s1 + $0x640] sm:$0xff]
    %v219 = vld [vmem:[%s1 + $0x648] sm:$0xff]
    %v220 = vld [vmem:[%s1 + $0x650] sm:$0xff]
    %v221 = vld [vmem:[%s1 + $0x658] sm:$0xff]
    %v222 = vld [vmem:[%s1 + $0x660] sm:$0xff]
    %v223 = vld [vmem:[%s1 + $0x668] sm:$0xff]
    %v224 = vld [vmem:[%s1 + $0x670] sm:$0xff]
    %v225 = vld [vmem:[%s1 + $0x678] sm:$0xff]
    %v226 = vld [vmem:[%s1 + $0x680] sm:$0xff]
    %v227 = vld [vmem:[%s1 + $0x688] sm:$0xff]
    %v228 = vld [vmem:[%s1 + $0x690] sm:$0xff]
    %v229 = vld [vmem:[%s1 + $0x698] sm:$0xff]
    %v230 = vld [vmem:[%s1 + $0x6a0] sm:$0xff]
    %v231 = vld [vmem:[%s1 + $0x6a8] sm:$0xff]
    %v232 = vld [vmem:[%s1 + $0x6b0] sm:$0xff]
    %v233 = vld [vmem:[%s1 + $0x6b8] sm:$0xff]
    %v234 = vld [vmem:[%s1 + $0x6c0] sm:$0xff]
    %v235 = vld [vmem:[%s1 + $0x6c8] sm:$0xff]
    %v236 = vld [vmem:[%s1 + $0x6d0] sm:$0xff]
    %v237 = vld [vmem:[%s1 + $0x6d8] sm:$0xff]
    %v238 = vld [vmem:[%s1 + $0x6e0] sm:$0xff]
    %v239 = vld [vmem:[%s1 + $0x6e8] sm:$0xff]
    %v240 = vld [vmem:[%s1 + $0x6f0] sm:$0xff]
    %v241 = vld [vmem:[%s1 + $0x6f8] sm:$0xff]
    %v242 = vld [vmem:[%s1 + $0x700] sm:$0xff]
    %v243 = vld [vmem:[%s1 + $0x708] sm:$0xff]
    %v244 = vld [vmem:[%s1 + $0x710] sm:$0xff]
    %v245 = vld [vmem:[%s1 + $0x718] sm:$0xff]
    %v246 = vld [vmem:[%s1 + $0x720] sm:$0xff]
    %v247 = vld [vmem:[%s1 + $0x728] sm:$0xff]
    %v248 = vld [vmem:[%s1 + $0x730] sm:$0xff]
    %v249 = vld [vmem:[%s1 + $0x738] sm:$0xff]
    %v250 = vld [vmem:[%s1 + $0x740] sm:$0xff]
    %v251 = vld [vmem:[%s1 + $0x748] sm:$0xff]
    %v252 = vld [vmem:[%s1 + $0x750] sm:$0xff]
    %v253 = vld [vmem:[%s1 + $0x758] sm:$0xff]
    %v254 = vld [vmem:[%s1 + $0x760] sm:$0xff]
    %v255 = vld [vmem:[%s1 + $0x768] sm:$0xff]
    %v256 = vld [vmem:[%s1 + $0x770] sm:$0xff]
    %v257 = vld [vmem:[%s1 + $0x778] sm:$0xff]
    %v258 = vld [vmem:[%s1 + $0x780] sm:$0xff]
    %v259 = vld [vmem:[%s1 + $0x788] sm:$0xff]
    %v260 = vld [vmem:[%s1 + $0x790] sm:$0xff]
    %v261 = vld [vmem:[%s1 + $0x798] sm:$0xff]
    %v262 = vld [vmem:[%s1 + $0x7a0] sm:$0xff]
    %v263 = vld [vmem:[%s1 + $0x7a8] sm:$0xff]
    %v264 = vld [vmem:[%s1 + $0x7b0] sm:$0xff]
    %v265 = vld [vmem:[%s1 + $0x7b8] sm:$0xff]
    %v266 = vld [vmem:[%s1 + $0x7c0] sm:$0xff]
    %v267 = vld [vmem:[%s1 + $0x7c8] sm:$0xff]
    %v268 = vld [vmem:[%s1 + $0x7d0] sm:$0xff]
    %v269 = vld [vmem:[%s1 + $0x7d8] sm:$0xff]
    %v270 = vld [vmem:[%s1 + $0x7e0] sm:$0xff]
    %v271 = vld [vmem:[%s1 + $0x7e8] sm:$0xff]
    %v272 = vld [vmem:[%s1 + $0x7f0] sm:$0xff]
    %v273 = vld [vmem:[%s1 + $0x7f8] sm:$0xff]
    %v274 = vld [vmem:[%s1 + $0x800] sm:$0xff]
    %v275 = vld [vmem:[%s1 + $0x808] sm:$0xff]
    %v276 = vld [vmem:[%s1 + $0x810] sm:$0xff]
    %v277 = vld [vmem:[%s1 + $0x818] sm:$0xff]
    %v278 = vld [vmem:[%s1 + $0x820] sm:$0xff]
    %v279 = vld [vmem:[%s1 + $0x828] sm:$0xff]
    %v280 = vld [vmem:[%s1 + $0x830] sm:$0xff]
    %v281 = vld [vmem:[%s1 + $0x838] sm:$0xff]
    %v282 = vld [vmem:[%s1 + $0x840] sm:$0xff]
    %v283 = vld [vmem:[%s1 + $0x848] sm:$0xff]
    %v284 = vld [vmem:[%s1 + $0x850] sm:$0xff]
    %v285 = vld [vmem:[%s1 + $0x858] sm:$0xff]
    %v286 = vld [vmem:[%s1 + $0x860] sm:$0xff]
    %v287 = vld [vmem:[%s1 + $0x868] sm:$0xff]
    %v288 = vld [vmem:[%s1 + $0x870] sm:$0xff]
    %v289 = vld [vmem:[%s1 + $0x878] sm:$0xff]
    %v290 = vld [vmem:[%s1 + $0x880] sm:$0xff]
    %v291 = vld [vmem:[%s1 + $0x888] sm:$0xff]
    %v292 = vld [vmem:[%s1 + $0x890] sm:$0xff]
    %v293 = vld [vmem:[%s1 + $0x898] sm:$0xff]
    %v294 = vld [vmem:[%s1 + $0x8a0] sm:$0xff]
    %v295 = vld [vmem:[%s1 + $0x8a8] sm:$0xff]
    %v296 = vld [vmem:[%s1 + $0x8b0] sm:$0xff]
    %v297 = vld [vmem:[%s1 + $0x8b8] sm:$0xff]
    %v298 = vld [vmem:[%s1 + $0x8c0] sm:$0xff]
    %v299 = vld [vmem:[%s1 + $0x8c8] sm:$0xff]
    %v300 = vld [vmem:[%s1 + $0x8d0] sm:$0xff]
    %v301 = vld [vmem:[%s1 + $0x8d8] sm:$0xff]
    %v302 = vld [vmem:[%s1 + $0x8e0] sm:$0xff]
    %v303 = vld [vmem:[%s1 + $0x8e8] sm:$0xff]
    %v304 = vld [vmem:[%s1 + $0x8f0] sm:$0xff]
    %v305 = vld [vmem:[%s1 + $0x8f8] sm:$0xff]
    %v306 = vld [vmem:[%s1 + $0x900] sm:$0xff]
    %v307 = vld [vmem:[%s1 + $0x908] sm:$0xff]
    %v308 = vld [vmem:[%s1 + $0x910] sm:$0xff]
    %v309 = vld [vmem:[%s1 + $0x918] sm:$0xff]
    %v310 = vld [vmem:[%s1 + $0x920] sm:$0xff]
    %v311 = vld [vmem:[%s1 + $0x928] sm:$0xff]
    %v312 = vld [vmem:[%s1 + $0x930] sm:$0xff]
    %v313 = vld [vmem:[%s1 + $0x938] sm:$0xff]
    %v314 = vld [vmem:[%s1 + $0x940] sm:$0xff]
    %v315 = vld [vmem:[%s1 + $0x948] sm:$0xff]
    %v316 = vld [vmem:[%s1 + $0x950] sm:$0xff]
    %v317 = vld [vmem:[%s1 + $0x958] sm:$0xff]
    %v318 = vld [vmem:[%s1 + $0x960] sm:$0xff]
    %v319 = vld [vmem:[%s1 + $0x968] sm:$0xff]
    %v320 = vld [vmem:[%s1 + $0x970] sm:$0xff]
    %v321 = vld [vmem:[%s1 + $0x978] sm:$0xff]
    %v322 = vld [vmem:[%s1 + $0x980] sm:$0xff]
    %v323 = vld [vmem:[%s1 + $0x988] sm:$0xff]
    %v324 = vld [vmem:[%s1 + $0x990] sm:$0xff]
    %v325 = vld [vmem:[%s1 + $0x998] sm:$0xff]
    %v326 = vld [vmem:[%s1 + $0x9a0] sm:$0xff]
    %v327 = vld [vmem:[%s1 + $0x9a8] sm:$0xff]
    %v328 = vld [vmem:[%s1 + $0x9b0] sm:$0xff]
    %v329 = vld [vmem:[%s1 + $0x9b8] sm:$0xff]
    %v330 = vld [vmem:[%s1 + $0x9c0] sm:$0xff]
    %v331 = vld [vmem:[%s1 + $0x9c8] sm:$0xff]
    %v332 = vld [vmem:[%s1 + $0x9d0] sm:$0xff]
    %v333 = vld [vmem:[%s1 + $0x9d8] sm:$0xff]
    %v334 = vld [vmem:[%s1 + $0x9e0] sm:$0xff]
    %v335 = vld [vmem:[%s1 + $0x9e8] sm:$0xff]
    %v336 = vld [vmem:[%s1 + $0x9f0] sm:$0xff]
    %v337 = vld [vmem:[%s1 + $0x9f8] sm:$0xff]
    %v338 = vld [vmem:[%s1 + $0xa00] sm:$0xff]
    %v339 = vld [vmem:[%s1 + $0xa08] sm:$0xff]
    %v340 = vld [vmem:[%s1 + $0xa10] sm:$0xff]
    %v341 = vld [vmem:[%s1 + $0xa18] sm:$0xff]
    %v342 = vld [vmem:[%s1 + $0xa20] sm:$0xff]
    %v343 = vld [vmem:[%s1 + $0xa28] sm:$0xff]
    %v344 = vld [vmem:[%s1 + $0xa30] sm:$0xff]
    %v345 = vld [vmem:[%s1 + $0xa38] sm:$0xff]
    %v346 = vld [vmem:[%s1 + $0xa40] sm:$0xff]
    %v347 = vld [vmem:[%s1 + $0xa48] sm:$0xff]
    %v348 = vld [vmem:[%s1 + $0xa50] sm:$0xff]
    %v349 = vld [vmem:[%s1 + $0xa58] sm:$0xff]
    %v350 = vld [vmem:[%s1 + $0xa60] sm:$0xff]
    %v351 = vld [vmem:[%s1 + $0xa68] sm:$0xff]
    %v352 = vld [vmem:[%s1 + $0xa70] sm:$0xff]
    %v353 = vld [vmem:[%s1 + $0xa78] sm:$0xff]
    %v354 = vld [vmem:[%s1 + $0xa80] sm:$0xff]
    %v355 = vld [vmem:[%s1 + $0xa88] sm:$0xff]
    %v356 = vld [vmem:[%s1 + $0xa90] sm:$0xff]
    %v357 = vld [vmem:[%s1 + $0xa98] sm:$0xff]
    %v358 = vld [vmem:[%s1 + $0xaa0] sm:$0xff]
    %v359 = vld [vmem:[%s1 + $0xaa8] sm:$0xff]
    %v360 = vld [vmem:[%s1 + $0xab0] sm:$0xff]
    %v361 = vld [vmem:[%s1 + $0xab8] sm:$0xff]
    %v362 = vld [vmem:[%s1 + $0xac0] sm:$0xff]
    %v363 = vld [vmem:[%s1 + $0xac8] sm:$0xff]
    %v364 = vld [vmem:[%s1 + $0xad0] sm:$0xff]
    %v365 = vld [vmem:[%s1 + $0xad8] sm:$0xff]
    %v366 = vld [vmem:[%s1 + $0xae0] sm:$0xff]
    %v367 = vld [vmem:[%s1 + $0xae8] sm:$0xff]
    %v368 = vld [vmem:[%s1 + $0xaf0] sm:$0xff]
    %v369 = vld [vmem:[%s1 + $0xaf8] sm:$0xff]
    %v370 = vld [vmem:[%s1 + $0xb00] sm:$0xff]
    %v371 = vld [vmem:[%s1 + $0xb08] sm:$0xff]
    %v372 = vld [vmem:[%s1 + $0xb10] sm:$0xff]
    %v373 = vld [vmem:[%s1 + $0xb18] sm:$0xff]
    %v374 = vld [vmem:[%s1 + $0xb20] sm:$0xff]
    %v375 = vld [vmem:[%s1 + $0xb28] sm:$0xff]
    %v376 = vld [vmem:[%s1 + $0xb30] sm:$0xff]
    %v377 = vld [vmem:[%s1 + $0xb38] sm:$0xff]
    %v378 = vld [vmem:[%s1 + $0xb40] sm:$0xff]
    %v379 = vld [vmem:[%s1 + $0xb48] sm:$0xff]
    %v380 = vld [vmem:[%s1 + $0xb50] sm:$0xff]
    %v381 = vld [vmem:[%s1 + $0xb58] sm:$0xff]
    %v382 = vld [vmem:[%s1 + $0xb60] sm:$0xff]
    %v383 = vld [vmem:[%s1 + $0xb68] sm:$0xff]
    %v384 = vld [vmem:[%s1 + $0xb70] sm:$0xff]
    %v385 = vld [vmem:[%s1 + $0xb78] sm:$0xff]
    %v386 = vld [vmem:[%s1 + $0xb80] sm:$0xff]
    %v387 = vld [vmem:[%s1 + $0xb88] sm:$0xff]
    %v388 = vld [vmem:[%s1 + $0xb90] sm:$0xff]
    %v389 = vld [vmem:[%s1 + $0xb98] sm:$0xff]
    %v390 = vld [vmem:[%s1 + $0xba0] sm:$0xff]
    %v391 = vld [vmem:[%s1 + $0xba8] sm:$0xff]
    %v392 = vld [vmem:[%s1 + $0xbb0] sm:$0xff]
    %v393 = vld [vmem:[%s1 + $0xbb8] sm:$0xff]
    %v394 = vld [vmem:[%s1 + $0xbc0] sm:$0xff]
    %v395 = vld [vmem:[%s1 + $0xbc8] sm:$0xff]
    %v396 = vld [vmem:[%s1 + $0xbd0] sm:$0xff]
    %v397 = vld [vmem:[%s1 + $0xbd8] sm:$0xff]
    %v398 = vld [vmem:[%s1 + $0xbe0] sm:$0xff]
    %v399 = vld [vmem:[%s1 + $0xbe8] sm:$0xff]
    %v400 = vld [vmem:[%s1 + $0xbf0] sm:$0xff]
    %v401 = vld [vmem:[%s1 + $0xbf8] sm:$0xff]
    %v402 = vld [vmem:[%s1 + $0xc00] sm:$0xff]
    %v403 = vld [vmem:[%s1 + $0xc08] sm:$0xff]
    %v404 = vld [vmem:[%s1 + $0xc10] sm:$0xff]
    %v405 = vld [vmem:[%s1 + $0xc18] sm:$0xff]
    %v406 = vld [vmem:[%s1 + $0xc20] sm:$0xff]
    %v407 = vld [vmem:[%s1 + $0xc28] sm:$0xff]
    %v408 = vld [vmem:[%s1 + $0xc30] sm:$0xff]
    %v409 = vld [vmem:[%s1 + $0xc38] sm:$0xff]
    %v410 = vld [vmem:[%s1 + $0xc40] sm:$0xff]
    %v411 = vld [vmem:[%s1 + $0xc48] sm:$0xff]
    %v412 = vld [vmem:[%s1 + $0xc50] sm:$0xff]
    %v413 = vld [vmem:[%s1 + $0xc58] sm:$0xff]
    %v414 = vld [vmem:[%s1 + $0xc60] sm:$0xff]
    %v415 = vld [vmem:[%s1 + $0xc68] sm:$0xff]
    %v416 = vld [vmem:[%s1 + $0xc70] sm:$0xff]
    %v417 = vld [vmem:[%s1 + $0xc78] sm:$0xff]
    %v418 = vld [vmem:[%s1 + $0xc80] sm:$0xff]
    %v419 = vld [vmem:[%s1 + $0xc88] sm:$0xff]
    %v420 = vld [vmem:[%s1 + $0xc90] sm:$0xff]
    %v421 = vld [vmem:[%s1 + $0xc98] sm:$0xff]
    %v422 = vld [vmem:[%s1 + $0xca0] sm:$0xff]
    %v423 = vld [vmem:[%s1 + $0xca8] sm:$0xff]
    %v424 = vld [vmem:[%s1 + $0xcb0] sm:$0xff]
    %v425 = vld [vmem:[%s1 + $0xcb8] sm:$0xff]
    %v426 = vld [vmem:[%s1 + $0xcc0] sm:$0xff]
    %v427 = vld [vmem:[%s1 + $0xcc8] sm:$0xff]
    %v428 = vld [vmem:[%s1 + $0xcd0] sm:$0xff]
    %v429 = vld [vmem:[%s1 + $0xcd8] sm:$0xff]
    %v430 = vld [vmem:[%s1 + $0xce0] sm:$0xff]
    %v431 = vld [vmem:[%s1 + $0xce8] sm:$0xff]
    %v432 = vld [vmem:[%s1 + $0xcf0] sm:$0xff]
    %v433 = vld [vmem:[%s1 + $0xcf8] sm:$0xff]
    %v434 = vld [vmem:[%s1 + $0xd00] sm:$0xff]
    %v435 = vld [vmem:[%s1 + $0xd08] sm:$0xff]
    %v436 = vld [vmem:[%s1 + $0xd10] sm:$0xff]
    %v437 = vld [vmem:[%s1 + $0xd18] sm:$0xff]
    %v438 = vld [vmem:[%s1 + $0xd20] sm:$0xff]
    %v439 = vld [vmem:[%s1 + $0xd28] sm:$0xff]
    %v440 = vld [vmem:[%s1 + $0xd30] sm:$0xff]
    %v441 = vld [vmem:[%s1 + $0xd38] sm:$0xff]
    %v442 = vld [vmem:[%s1 + $0xd40] sm:$0xff]
    %v443 = vld [vmem:[%s1 + $0xd48] sm:$0xff]
    %v444 = vld [vmem:[%s1 + $0xd50] sm:$0xff]
    %v445 = vld [vmem:[%s1 + $0xd58] sm:$0xff]
    %v446 = vld [vmem:[%s1 + $0xd60] sm:$0xff]
    %v447 = vld [vmem:[%s1 + $0xd68] sm:$0xff]
    %v448 = vld [vmem:[%s1 + $0xd70] sm:$0xff]
    %v449 = vld [vmem:[%s1 + $0xd78] sm:$0xff]
    %v450 = vld [vmem:[%s1 + $0xd80] sm:$0xff]
    %v451 = vld [vmem:[%s1 + $0xd88] sm:$0xff]
    %v452 = vld [vmem:[%s1 + $0xd90] sm:$0xff]
    %v453 = vld [vmem:[%s1 + $0xd98] sm:$0xff]
    %v454 = vld [vmem:[%s1 + $0xda0] sm:$0xff]
    %v455 = vld [vmem:[%s1 + $0xda8] sm:$0xff]
    %v456 = vld [vmem:[%s1 + $0xdb0] sm:$0xff]
    %v457 = vld [vmem:[%s1 + $0xdb8] sm:$0xff]
    %v458 = vld [vmem:[%s1 + $0xdc0] sm:$0xff]
    %v459 = vld [vmem:[%s1 + $0xdc8] sm:$0xff]
    %v460 = vld [vmem:[%s1 + $0xdd0] sm:$0xff]
    %v461 = vld [vmem:[%s1 + $0xdd8] sm:$0xff]
    %v462 = vld [vmem:[%s1 + $0xde0] sm:$0xff]
    %v463 = vld [vmem:[%s1 + $0xde8] sm:$0xff]
    %v464 = vld [vmem:[%s1 + $0xdf0] sm:$0xff]
    %v465 = vld [vmem:[%s1 + $0xdf8] sm:$0xff]
    %v466 = vld [vmem:[%s1 + $0xe00] sm:$0xff]
    %v467 = vld [vmem:[%s1 + $0xe08] sm:$0xff]
    %v468 = vld [vmem:[%s1 + $0xe10] sm:$0xff]
    %v469 = vld [vmem:[%s1 + $0xe18] sm:$0xff]
    %v470 = vld [vmem:[%s1 + $0xe20] sm:$0xff]
    %v471 = vld [vmem:[%s1 + $0xe28] sm:$0xff]
    %v472 = vld [vmem:[%s1 + $0xe30] sm:$0xff]
    %v473 = vld [vmem:[%s1 + $0xe38] sm:$0xff]
    %v474 = vld [vmem:[%s1 + $0xe40] sm:$0xff]
    %v475 = vld [vmem:[%s1 + $0xe48] sm:$0xff]
    %v476 = vld [vmem:[%s1 + $0xe50] sm:$0xff]
    %v477 = vld [vmem:[%s1 + $0xe58] sm:$0xff]
    %v478 = vld [vmem:[%s1 + $0xe60] sm:$0xff]
    %v479 = vld [vmem:[%s1 + $0xe68] sm:$0xff]
    %v480 = vld [vmem:[%s1 + $0xe70] sm:$0xff]
    %v481 = vld [vmem:[%s1 + $0xe78] sm:$0xff]
    %v482 = vld [vmem:[%s1 + $0xe80] sm:$0xff]
    %v483 = vld [vmem:[%s1 + $0xe88] sm:$0xff]
    %v484 = vld [vmem:[%s1 + $0xe90] sm:$0xff]
    %v485 = vld [vmem:[%s1 + $0xe98] sm:$0xff]
    %v486 = vld [vmem:[%s1 + $0xea0] sm:$0xff]
    %v487 = vld [vmem:[%s1 + $0xea8] sm:$0xff]
    %v488 = vld [vmem:[%s1 + $0xeb0] sm:$0xff]
    %v489 = vld [vmem:[%s1 + $0xeb8] sm:$0xff]
    %v490 = vld [vmem:[%s1 + $0xec0] sm:$0xff]
    %v491 = vld [vmem:[%s1 + $0xec8] sm:$0xff]
    %v492 = vld [vmem:[%s1 + $0xed0] sm:$0xff]
    %v493 = vld [vmem:[%s1 + $0xed8] sm:$0xff]
    %v494 = vld [vmem:[%s1 + $0xee0] sm:$0xff]
    %v495 = vld [vmem:[%s1 + $0xee8] sm:$0xff]
    %v496 = vld [vmem:[%s1 + $0xef0] sm:$0xff]
    %v497 = vld [vmem:[%s1 + $0xef8] sm:$0xff]
    %v498 = vld [vmem:[%s1 + $0xf00] sm:$0xff]
    %v499 = vld [vmem:[%s1 + $0xf08] sm:$0xff]
    %v500 = vld [vmem:[%s1 + $0xf10] sm:$0xff]
    %v501 = vld [vmem:[%s1 + $0xf18] sm:$0xff]
    %v502 = vld [vmem:[%s1 + $0xf20] sm:$0xff]
    %v503 = vld [vmem:[%s1 + $0xf28] sm:$0xff]
    %v504 = vld [vmem:[%s1 + $0xf30] sm:$0xff]
    %v505 = vld [vmem:[%s1 + $0xf38] sm:$0xff]
    %v506 = vld [vmem:[%s1 + $0xf40] sm:$0xff]
    %v507 = vld [vmem:[%s1 + $0xf48] sm:$0xff]
    %v508 = vld [vmem:[%s1 + $0xf50] sm:$0xff]
    %v509 = vld [vmem:[%s1 + $0xf58] sm:$0xff]
    %v510 = vld [vmem:[%s1 + $0xf60] sm:$0xff]
    %v511 = vld [vmem:[%s1 + $0xf68] sm:$0xff]
    %v512 = vld [vmem:[%s1 + $0xf70] sm:$0xff]
    %v513 = vld [vmem:[%s1 + $0xf78] sm:$0xff]
    %v514 = vld [vmem:[%s1 + $0xf80] sm:$0xff]
    %v515 = vld [vmem:[%s1 + $0xf88] sm:$0xff]
    %v516 = vld [vmem:[%s1 + $0xf90] sm:$0xff]
    %v517 = vld [vmem:[%s1 + $0xf98] sm:$0xff]
    %v518 = vld [vmem:[%s1 + $0xfa0] sm:$0xff]
    %v519 = vld [vmem:[%s1 + $0xfa8] sm:$0xff]
    %v520 = vld [vmem:[%s1 + $0xfb0] sm:$0xff]
    %v521 = vld [vmem:[%s1 + $0xfb8] sm:$0xff]
    %v522 = vld [vmem:[%s1 + $0xfc0] sm:$0xff]
    %v523 = vld [vmem:[%s1 + $0xfc8] sm:$0xff]
    %v524 = vld [vmem:[%s1 + $0xfd0] sm:$0xff]
    %v525 = vld [vmem:[%s1 + $0xfd8] sm:$0xff]
    %v526 = vld [vmem:[%s1 + $0xfe0] sm:$0xff]
    %v527 = vld [vmem:[%s1 + $0xfe8] sm:$0xff]
    %v528 = vld [vmem:[%s1 + $0xff0] sm:$0xff]
    %v529 = vld [vmem:[%s1 + $0xff8] sm:$0xff]
    %v530 = vld [vmem:[%s1 + $0x1000] sm:$0xff]
    %v531 = vld [vmem:[%s1 + $0x1008] sm:$0xff]
    %v532 = vld [vmem:[%s1 + $0x1010] sm:$0xff]
    %v533 = vld [vmem:[%s1 + $0x1018] sm:$0xff]
    %v534 = vld [vmem:[%s1 + $0x1020] sm:$0xff]
    %v535 = vld [vmem:[%s1 + $0x1028] sm:$0xff]
    %v536 = vld [vmem:[%s1 + $0x1030] sm:$0xff]
    %v537 = vld [vmem:[%s1 + $0x1038] sm:$0xff]
    %v538 = vld [vmem:[%s1 + $0x1040] sm:$0xff]
    %v539 = vld [vmem:[%s1 + $0x1048] sm:$0xff]
    %v540 = vld [vmem:[%s1 + $0x1050] sm:$0xff]
    %v541 = vld [vmem:[%s1 + $0x1058] sm:$0xff]
    %v542 = vld [vmem:[%s1 + $0x1060] sm:$0xff]
    %v543 = vld [vmem:[%s1 + $0x1068] sm:$0xff]
    %v544 = vld [vmem:[%s1 + $0x1070] sm:$0xff]
    %v545 = vld [vmem:[%s1 + $0x1078] sm:$0xff]
    %v546 = vld [vmem:[%s1 + $0x1080] sm:$0xff]
    %v547 = vld [vmem:[%s1 + $0x1088] sm:$0xff]
    %v548 = vld [vmem:[%s1 + $0x1090] sm:$0xff]
    %v549 = vld [vmem:[%s1 + $0x1098] sm:$0xff]
    %v550 = vld [vmem:[%s1 + $0x10a0] sm:$0xff]
    %v551 = vld [vmem:[%s1 + $0x10a8] sm:$0xff]
    %v552 = vld [vmem:[%s1 + $0x10b0] sm:$0xff]
    %v553 = vld [vmem:[%s1 + $0x10b8] sm:$0xff]
    %v554 = vld [vmem:[%s1 + $0x10c0] sm:$0xff]
    %v555 = vld [vmem:[%s1 + $0x10c8] sm:$0xff]
    %v556 = vld [vmem:[%s1 + $0x10d0] sm:$0xff]
    %v557 = vld [vmem:[%s1 + $0x10d8] sm:$0xff]
    %v558 = vld [vmem:[%s1 + $0x10e0] sm:$0xff]
    %v559 = vld [vmem:[%s1 + $0x10e8] sm:$0xff]
    %v560 = vld [vmem:[%s1 + $0x10f0] sm:$0xff]
    %v561 = vld [vmem:[%s1 + $0x10f8] sm:$0xff]
    %v562 = vld [vmem:[%s1 + $0x1100] sm:$0xff]
    %v563 = vld [vmem:[%s1 + $0x1108] sm:$0xff]
    %v564 = vld [vmem:[%s1 + $0x1110] sm:$0xff]
    %v565 = vld [vmem:[%s1 + $0x1118] sm:$0xff]
    %v566 = vld [vmem:[%s1 + $0x1120] sm:$0xff]
    %v567 = vld [vmem:[%s1 + $0x1128] sm:$0xff]
    %v568 = vld [vmem:[%s1 + $0x1130] sm:$0xff]
    %v569 = vld [vmem:[%s1 + $0x1138] sm:$0xff]
    %v570 = vld [vmem:[%s1 + $0x1140] sm:$0xff]
    %v571 = vld [vmem:[%s1 + $0x1148] sm:$0xff]
    %v572 = vld [vmem:[%s1 + $0x1150] sm:$0xff]
    %v573 = vld [vmem:[%s1 + $0x1158] sm:$0xff]
    %v574 = vld [vmem:[%s1 + $0x1160] sm:$0xff]
    %v575 = vld [vmem:[%s1 + $0x1168] sm:$0xff]
    %v576 = vld [vmem:[%s1 + $0x1170] sm:$0xff]
    %v577 = vld [vmem:[%s1 + $0x1178] sm:$0xff]
    %v578 = vld [vmem:[%s1 + $0x1180] sm:$0xff]
    %v579 = vld [vmem:[%s1 + $0x1188] sm:$0xff]
    %v580 = vld [vmem:[%s1 + $0x1190] sm:$0xff]
    %v581 = vld [vmem:[%s1 + $0x1198] sm:$0xff]
    %v582 = vld [vmem:[%s1 + $0x11a0] sm:$0xff]
    %v583 = vld [vmem:[%s1 + $0x11a8] sm:$0xff]
    %v584 = vld [vmem:[%s1 + $0x11b0] sm:$0xff]
    %v585 = vld [vmem:[%s1 + $0x11b8] sm:$0xff]
    %v586 = vld [vmem:[%s1 + $0x11c0] sm:$0xff]
    %v587 = vld [vmem:[%s1 + $0x11c8] sm:$0xff]
    %v588 = vld [vmem:[%s1 + $0x11d0] sm:$0xff]
    %v589 = vld [vmem:[%s1 + $0x11d8] sm:$0xff]
    %v590 = vld [vmem:[%s1 + $0x11e0] sm:$0xff]
    %v591 = vld [vmem:[%s1 + $0x11e8] sm:$0xff]
    %v592 = vld [vmem:[%s1 + $0x11f0] sm:$0xff]
    %v593 = vld [vmem:[%s1 + $0x11f8] sm:$0xff]
    %v594 = vld [vmem:[%s1 + $0x1200] sm:$0xff]
    %v595 = vld [vmem:[%s1 + $0x1208] sm:$0xff]
    %v596 = vld [vmem:[%s1 + $0x1210] sm:$0xff]
    %v597 = vld [vmem:[%s1 + $0x1218] sm:$0xff]
    %v598 = vld [vmem:[%s1 + $0x1220] sm:$0xff]
    %v599 = vld [vmem:[%s1 + $0x1228] sm:$0xff]
    %v600 = vld [vmem:[%s1 + $0x1230] sm:$0xff]
    %v601 = vld [vmem:[%s1 + $0x1238] sm:$0xff]
    %v602 = vld [vmem:[%s1 + $0x1240] sm:$0xff]
    %v603 = vld [vmem:[%s1 + $0x1248] sm:$0xff]
    %v604 = vld [vmem:[%s1 + $0x1250] sm:$0xff]
    %v605 = vld [vmem:[%s1 + $0x1258] sm:$0xff]
    %v606 = vld [vmem:[%s1 + $0x1260] sm:$0xff]
    %v607 = vld [vmem:[%s1 + $0x1268] sm:$0xff]
    %v608 = vld [vmem:[%s1 + $0x1270] sm:$0xff]
    %v609 = vld [vmem:[%s1 + $0x1278] sm:$0xff]
    %v610 = vld [vmem:[%s1 + $0x1280] sm:$0xff]
    %v611 = vld [vmem:[%s1 + $0x1288] sm:$0xff]
    %v612 = vld [vmem:[%s1 + $0x1290] sm:$0xff]
    %v613 = vld [vmem:[%s1 + $0x1298] sm:$0xff]
    %v614 = vld [vmem:[%s1 + $0x12a0] sm:$0xff]
    %v615 = vld [vmem:[%s1 + $0x12a8] sm:$0xff]
    %v616 = vld [vmem:[%s1 + $0x12b0] sm:$0xff]
    %v617 = vld [vmem:[%s1 + $0x12b8] sm:$0xff]
    %v618 = vld [vmem:[%s1 + $0x12c0] sm:$0xff]
    %v619 = vld [vmem:[%s1 + $0x12c8] sm:$0xff]
    %v620 = vld [vmem:[%s1 + $0x12d0] sm:$0xff]
    %v621 = vld [vmem:[%s1 + $0x12d8] sm:$0xff]
    %v622 = vld [vmem:[%s1 + $0x12e0] sm:$0xff]
    %v623 = vld [vmem:[%s1 + $0x12e8] sm:$0xff]
    %v624 = vld [vmem:[%s1 + $0x12f0] sm:$0xff]
    %v625 = vld [vmem:[%s1 + $0x12f8] sm:$0xff]
    %v626 = vld [vmem:[%s1 + $0x1300] sm:$0xff]
    %v627 = vld [vmem:[%s1 + $0x1308] sm:$0xff]
    %v628 = vld [vmem:[%s1 + $0x1310] sm:$0xff]
    %v629 = vld [vmem:[%s1 + $0x1318] sm:$0xff]
    %v630 = vld [vmem:[%s1 + $0x1320] sm:$0xff]
    %v631 = vld [vmem:[%s1 + $0x1328] sm:$0xff]
    %v632 = vld [vmem:[%s1 + $0x1330] sm:$0xff]
    %v633 = vld [vmem:[%s1 + $0x1338] sm:$0xff]
    %v634 = vld [vmem:[%s1 + $0x1340] sm:$0xff]
    %v635 = vld [vmem:[%s1 + $0x1348] sm:$0xff]
    %v636 = vld [vmem:[%s1 + $0x1350] sm:$0xff]
    %v637 = vld [vmem:[%s1 + $0x1358] sm:$0xff]
    %v638 = vld [vmem:[%s1 + $0x1360] sm:$0xff]
    %v639 = vld [vmem:[%s1 + $0x1368] sm:$0xff]
    %v640 = vld [vmem:[%s1 + $0x1370] sm:$0xff]
    %v641 = vld [vmem:[%s1 + $0x1378] sm:$0xff]
    %v642 = vld [vmem:[%s1 + $0x1380] sm:$0xff]
    %v643 = vld [vmem:[%s1 + $0x1388] sm:$0xff]
    %v644 = vld [vmem:[%s1 + $0x1390] sm:$0xff]
    %v645 = vld [vmem:[%s1 + $0x1398] sm:$0xff]
    %v646 = vld [vmem:[%s1 + $0x13a0] sm:$0xff]
    %v647 = vld [vmem:[%s1 + $0x13a8] sm:$0xff]
    %v648 = vld [vmem:[%s1 + $0x13b0] sm:$0xff]
    %v649 = vld [vmem:[%s1 + $0x13b8] sm:$0xff]
    %v650 = vld [vmem:[%s1 + $0x13c0] sm:$0xff]
    %v651 = vld [vmem:[%s1 + $0x13c8] sm:$0xff]
    %v652 = vld [vmem:[%s1 + $0x13d0] sm:$0xff]
    %v653 = vld [vmem:[%s1 + $0x13d8] sm:$0xff]
    %v654 = vld [vmem:[%s1 + $0x13e0] sm:$0xff]
    %v655 = vld [vmem:[%s1 + $0x13e8] sm:$0xff]
    %v656 = vld [vmem:[%s1 + $0x13f0] sm:$0xff]
    %v657 = vld [vmem:[%s1 + $0x13f8] sm:$0xff]
    %v658 = vld [vmem:[%s1 + $0x1400] sm:$0xff]
    %v659 = vld [vmem:[%s1 + $0x1408] sm:$0xff]
    %v660 = vld [vmem:[%s1 + $0x1410] sm:$0xff]
    %v661 = vld [vmem:[%s1 + $0x1418] sm:$0xff]
    %v662 = vld [vmem:[%s1 + $0x1420] sm:$0xff]
    %v663 = vld [vmem:[%s1 + $0x1428] sm:$0xff]
    %v664 = vld [vmem:[%s1 + $0x1430] sm:$0xff]
    %v665 = vld [vmem:[%s1 + $0x1438] sm:$0xff]
    %v666 = vld [vmem:[%s1 + $0x1440] sm:$0xff]
    %v667 = vld [vmem:[%s1 + $0x1448] sm:$0xff]
    %v668 = vld [vmem:[%s1 + $0x1450] sm:$0xff]
    %v669 = vld [vmem:[%s1 + $0x1458] sm:$0xff]
    %v670 = vld [vmem:[%s1 + $0x1460] sm:$0xff]
    %v671 = vld [vmem:[%s1 + $0x1468] sm:$0xff]
    %v672 = vld [vmem:[%s1 + $0x1470] sm:$0xff]
    %v673 = vld [vmem:[%s1 + $0x1478] sm:$0xff]
    %v674 = vld [vmem:[%s1 + $0x1480] sm:$0xff]
    %v675 = vld [vmem:[%s1 + $0x1488] sm:$0xff]
    %v676 = vld [vmem:[%s1 + $0x1490] sm:$0xff]
    %v677 = vld [vmem:[%s1 + $0x1498] sm:$0xff]
    %v678 = vld [vmem:[%s1 + $0x14a0] sm:$0xff]
    %v679 = vld [vmem:[%s1 + $0x14a8] sm:$0xff]
    %v680 = vld [vmem:[%s1 + $0x14b0] sm:$0xff]
    %v681 = vld [vmem:[%s1 + $0x14b8] sm:$0xff]
    %v682 = vld [vmem:[%s1 + $0x14c0] sm:$0xff]
    %v683 = vld [vmem:[%s1 + $0x14c8] sm:$0xff]
    %v684 = vld [vmem:[%s1 + $0x14d0] sm:$0xff]
    %v685 = vld [vmem:[%s1 + $0x14d8] sm:$0xff]
    %v686 = vld [vmem:[%s1 + $0x14e0] sm:$0xff]
    %v687 = vld [vmem:[%s1 + $0x14e8] sm:$0xff]
    %v688 = vld [vmem:[%s1 + $0x14f0] sm:$0xff]
    %v689 = vld [vmem:[%s1 + $0x14f8] sm:$0xff]
    %v690 = vld [vmem:[%s1 + $0x1500] sm:$0xff]
    %v691 = vld [vmem:[%s1 + $0x1508] sm:$0xff]
    %v692 = vld [vmem:[%s1 + $0x1510] sm:$0xff]
    %v693 = vld [vmem:[%s1 + $0x1518] sm:$0xff]
    %v694 = vld [vmem:[%s1 + $0x1520] sm:$0xff]
    %v695 = vld [vmem:[%s1 + $0x1528] sm:$0xff]
    %v696 = vld [vmem:[%s1 + $0x1530] sm:$0xff]
    %v697 = vld [vmem:[%s1 + $0x1538] sm:$0xff]
    %v698 = vld [vmem:[%s1 + $0x1540] sm:$0xff]
    %v699 = vld [vmem:[%s1 + $0x1548] sm:$0xff]
    %v700 = vld [vmem:[%s1 + $0x1550] sm:$0xff]
    %v701 = vld [vmem:[%s1 + $0x1558] sm:$0xff]
    %v702 = vld [vmem:[%s1 + $0x1560] sm:$0xff]
    %v703 = vld [vmem:[%s1 + $0x1568] sm:$0xff]
    %v704 = vld [vmem:[%s1 + $0x1570] sm:$0xff]
    %v705 = vld [vmem:[%s1 + $0x1578] sm:$0xff]
    %v706 = vld [vmem:[%s1 + $0x1580] sm:$0xff]
    %v707 = vld [vmem:[%s1 + $0x1588] sm:$0xff]
    %v708 = vld [vmem:[%s1 + $0x1590] sm:$0xff]
    %v709 = vld [vmem:[%s1 + $0x1598] sm:$0xff]
    %v710 = vld [vmem:[%s1 + $0x15a0] sm:$0xff]
    %v711 = vld [vmem:[%s1 + $0x15a8] sm:$0xff]
    %v712 = vld [vmem:[%s1 + $0x15b0] sm:$0xff]
    %v713 = vld [vmem:[%s1 + $0x15b8] sm:$0xff]
    %v714 = vld [vmem:[%s1 + $0x15c0] sm:$0xff]
    %v715 = vld [vmem:[%s1 + $0x15c8] sm:$0xff]
    %v716 = vld [vmem:[%s1 + $0x15d0] sm:$0xff]
    %v717 = vld [vmem:[%s1 + $0x15d8] sm:$0xff]
    %v718 = vld [vmem:[%s1 + $0x15e0] sm:$0xff]
    %v719 = vld [vmem:[%s1 + $0x15e8] sm:$0xff]
    %v720 = vld [vmem:[%s1 + $0x15f0] sm:$0xff]
    %v721 = vld [vmem:[%s1 + $0x15f8] sm:$0xff]
    %v722 = vld [vmem:[%s1 + $0x1600] sm:$0xff]
    %v723 = vld [vmem:[%s1 + $0x1608] sm:$0xff]
    %v724 = vld [vmem:[%s1 + $0x1610] sm:$0xff]
    %v725 = vld [vmem:[%s1 + $0x1618] sm:$0xff]
    %v726 = vld [vmem:[%s1 + $0x1620] sm:$0xff]
    %v727 = vld [vmem:[%s1 + $0x1628] sm:$0xff]
    %v728 = vld [vmem:[%s1 + $0x1630] sm:$0xff]
    %v729 = vld [vmem:[%s1 + $0x1638] sm:$0xff]
    %v730 = vld [vmem:[%s1 + $0x1640] sm:$0xff]
    %v731 = vld [vmem:[%s1 + $0x1648] sm:$0xff]
    %v732 = vld [vmem:[%s1 + $0x1650] sm:$0xff]
    %v733 = vld [vmem:[%s1 + $0x1658] sm:$0xff]
    %v734 = vld [vmem:[%s1 + $0x1660] sm:$0xff]
    %v735 = vld [vmem:[%s1 + $0x1668] sm:$0xff]
    %v736 = vld [vmem:[%s1 + $0x1670] sm:$0xff]
    %v737 = vld [vmem:[%s1 + $0x1678] sm:$0xff]
    %v738 = vld [vmem:[%s1 + $0x1680] sm:$0xff]
    %v739 = vld [vmem:[%s1 + $0x1688] sm:$0xff]
    %v740 = vld [vmem:[%s1 + $0x1690] sm:$0xff]
    %v741 = vld [vmem:[%s1 + $0x1698] sm:$0xff]
    %v742 = vld [vmem:[%s1 + $0x16a0] sm:$0xff]
    %v743 = vld [vmem:[%s1 + $0x16a8] sm:$0xff]
    %v744 = vld [vmem:[%s1 + $0x16b0] sm:$0xff]
    %v745 = vld [vmem:[%s1 + $0x16b8] sm:$0xff]
    %v746 = vld [vmem:[%s1 + $0x16c0] sm:$0xff]
    %v747 = vld [vmem:[%s1 + $0x16c8] sm:$0xff]
    %v748 = vld [vmem:[%s1 + $0x16d0] sm:$0xff]
    %v749 = vld [vmem:[%s1 + $0x16d8] sm:$0xff]
    %v750 = vld [vmem:[%s1 + $0x16e0] sm:$0xff]
    %v751 = vld [vmem:[%s1 + $0x16e8] sm:$0xff]
    %v752 = vld [vmem:[%s1 + $0x16f0] sm:$0xff]
    %v753 = vld [vmem:[%s1 + $0x16f8] sm:$0xff]
    %v754 = vld [vmem:[%s1 + $0x1700] sm:$0xff]
    %v755 = vld [vmem:[%s1 + $0x1708] sm:$0xff]
    %v756 = vld [vmem:[%s1 + $0x1710] sm:$0xff]
    %v757 = vld [vmem:[%s1 + $0x1718] sm:$0xff]
    %v758 = vld [vmem:[%s1 + $0x1720] sm:$0xff]
    %v759 = vld [vmem:[%s1 + $0x1728] sm:$0xff]
    %v760 = vld [vmem:[%s1 + $0x1730] sm:$0xff]
    %v761 = vld [vmem:[%s1 + $0x1738] sm:$0xff]
    %v762 = vld [vmem:[%s1 + $0x1740] sm:$0xff]
    %v763 = vld [vmem:[%s1 + $0x1748] sm:$0xff]
    %v764 = vld [vmem:[%s1 + $0x1750] sm:$0xff]
    %v765 = vld [vmem:[%s1 + $0x1758] sm:$0xff]
    %v766 = vld [vmem:[%s1 + $0x1760] sm:$0xff]
    %v767 = vld [vmem:[%s1 + $0x1768] sm:$0xff]
    %v768 = vld [vmem:[%s1 + $0x1770] sm:$0xff]
    %v769 = vld [vmem:[%s1 + $0x1778] sm:$0xff]
    %v770 = vld [vmem:[%s1 + $0x1780] sm:$0xff]
    %v771 = vld [vmem:[%s1 + $0x1788] sm:$0xff]
    %v772 = vld [vmem:[%s1 + $0x1790] sm:$0xff]
    %v773 = vld [vmem:[%s1 + $0x1798] sm:$0xff]
    %v774 = vld [vmem:[%s1 + $0x17a0] sm:$0xff]
    %v775 = vld [vmem:[%s1 + $0x17a8] sm:$0xff]
    %v776 = vld [vmem:[%s1 + $0x17b0] sm:$0xff]
    %v777 = vld [vmem:[%s1 + $0x17b8] sm:$0xff]
    %v778 = vld [vmem:[%s1 + $0x17c0] sm:$0xff]
    %v779 = vld [vmem:[%s1 + $0x17c8] sm:$0xff]
    %v780 = vld [vmem:[%s1 + $0x17d0] sm:$0xff]
    %v781 = vld [vmem:[%s1 + $0x17d8] sm:$0xff]
    %v782 = vld [vmem:[%s1 + $0x17e0] sm:$0xff]
    %v783 = vld [vmem:[%s1 + $0x17e8] sm:$0xff]
    %v784 = vld [vmem:[%s1 + $0x17f0] sm:$0xff]
    %v785 = vld [vmem:[%s1 + $0x17f8] sm:$0xff]
    %v786 = vld [vmem:[%s1 + $0x1800] sm:$0xff]
    %v787 = vld [vmem:[%s1 + $0x1808] sm:$0xff]
    %v788 = vld [vmem:[%s1 + $0x1810] sm:$0xff]
    %v789 = vld [vmem:[%s1 + $0x1818] sm:$0xff]
    %v790 = vld [vmem:[%s1 + $0x1820] sm:$0xff]
    %v791 = vld [vmem:[%s1 + $0x1828] sm:$0xff]
    %v792 = vld [vmem:[%s1 + $0x1830] sm:$0xff]
    %v793 = vld [vmem:[%s1 + $0x1838] sm:$0xff]
    %v794 = vld [vmem:[%s1 + $0x1840] sm:$0xff]
    %v795 = vld [vmem:[%s1 + $0x1848] sm:$0xff]
    %v796 = vld [vmem:[%s1 + $0x1850] sm:$0xff]
    %v797 = vld [vmem:[%s1 + $0x1858] sm:$0xff]
    %v798 = vld [vmem:[%s1 + $0x1860] sm:$0xff]
    %v799 = vld [vmem:[%s1 + $0x1868] sm:$0xff]
    %v800 = vld [vmem:[%s1 + $0x1870] sm:$0xff]
    %v801 = vld [vmem:[%s1 + $0x1878] sm:$0xff]
    %v802 = vld [vmem:[%s1 + $0x1880] sm:$0xff]
    %v803 = vld [vmem:[%s1 + $0x1888] sm:$0xff]
    %v804 = vld [vmem:[%s1 + $0x1890] sm:$0xff]
    %v805 = vld [vmem:[%s1 + $0x1898] sm:$0xff]
    %v806 = vld [vmem:[%s1 + $0x18a0] sm:$0xff]
    %v807 = vld [vmem:[%s1 + $0x18a8] sm:$0xff]
    %v808 = vld [vmem:[%s1 + $0x18b0] sm:$0xff]
    %v809 = vld [vmem:[%s1 + $0x18b8] sm:$0xff]
    %v810 = vld [vmem:[%s1 + $0x18c0] sm:$0xff]
    %v811 = vld [vmem:[%s1 + $0x18c8] sm:$0xff]
    %v812 = vld [vmem:[%s1 + $0x18d0] sm:$0xff]
    %v813 = vld [vmem:[%s1 + $0x18d8] sm:$0xff]
    %v814 = vld [vmem:[%s1 + $0x18e0] sm:$0xff]
    %v815 = vld [vmem:[%s1 + $0x18e8] sm:$0xff]
    %v816 = vld [vmem:[%s1 + $0x18f0] sm:$0xff]
    %v817 = vld [vmem:[%s1 + $0x18f8] sm:$0xff]
    %v818 = vld [vmem:[%s1 + $0x1900] sm:$0xff]
    %v819 = vld [vmem:[%s1 + $0x1908] sm:$0xff]
    %v820 = vld [vmem:[%s1 + $0x1910] sm:$0xff]
    %v821 = vld [vmem:[%s1 + $0x1918] sm:$0xff]
    %v822 = vld [vmem:[%s1 + $0x1920] sm:$0xff]
    %v823 = vld [vmem:[%s1 + $0x1928] sm:$0xff]
    %v824 = vld [vmem:[%s1 + $0x1930] sm:$0xff]
    %v825 = vld [vmem:[%s1 + $0x1938] sm:$0xff]
    %v826 = vld [vmem:[%s1 + $0x1940] sm:$0xff]
    %v827 = vld [vmem:[%s1 + $0x1948] sm:$0xff]
    %v828 = vld [vmem:[%s1 + $0x1950] sm:$0xff]
    %v829 = vld [vmem:[%s1 + $0x1958] sm:$0xff]
    %v830 = vld [vmem:[%s1 + $0x1960] sm:$0xff]
    %v831 = vld [vmem:[%s1 + $0x1968] sm:$0xff]
    %v832 = vld [vmem:[%s1 + $0x1970] sm:$0xff]
    %v833 = vld [vmem:[%s1 + $0x1978] sm:$0xff]
    %v834 = vld [vmem:[%s1 + $0x1980] sm:$0xff]
    %v835 = vld [vmem:[%s1 + $0x1988] sm:$0xff]
    %v836 = vld [vmem:[%s1 + $0x1990] sm:$0xff]
    %v837 = vld [vmem:[%s1 + $0x1998] sm:$0xff]
    %v838 = vld [vmem:[%s1 + $0x19a0] sm:$0xff]
    %v839 = vld [vmem:[%s1 + $0x19a8] sm:$0xff]
    %v840 = vld [vmem:[%s1 + $0x19b0] sm:$0xff]
    %v841 = vld [vmem:[%s1 + $0x19b8] sm:$0xff]
    %v842 = vld [vmem:[%s1 + $0x19c0] sm:$0xff]
    %v843 = vld [vmem:[%s1 + $0x19c8] sm:$0xff]
    %v844 = vld [vmem:[%s1 + $0x19d0] sm:$0xff]
    %v845 = vld [vmem:[%s1 + $0x19d8] sm:$0xff]
    %v846 = vld [vmem:[%s1 + $0x19e0] sm:$0xff]
    %v847 = vld [vmem:[%s1 + $0x19e8] sm:$0xff]
    %v848 = vld [vmem:[%s1 + $0x19f0] sm:$0xff]
    %v849 = vld [vmem:[%s1 + $0x19f8] sm:$0xff]
    %v850 = vld [vmem:[%s1 + $0x1a00] sm:$0xff]
    %v851 = vld [vmem:[%s1 + $0x1a08] sm:$0xff]
    %v852 = vld [vmem:[%s1 + $0x1a10] sm:$0xff]
    %v853 = vld [vmem:[%s1 + $0x1a18] sm:$0xff]
    %v854 = vld [vmem:[%s1 + $0x1a20] sm:$0xff]
    %v855 = vld [vmem:[%s1 + $0x1a28] sm:$0xff]
    %v856 = vld [vmem:[%s1 + $0x1a30] sm:$0xff]
    %v857 = vld [vmem:[%s1 + $0x1a38] sm:$0xff]
    %v858 = vld [vmem:[%s1 + $0x1a40] sm:$0xff]
    %v859 = vld [vmem:[%s1 + $0x1a48] sm:$0xff]
    %v860 = vld [vmem:[%s1 + $0x1a50] sm:$0xff]
    %v861 = vld [vmem:[%s1 + $0x1a58] sm:$0xff]
    %v862 = vld [vmem:[%s1 + $0x1a60] sm:$0xff]
    %v863 = vld [vmem:[%s1 + $0x1a68] sm:$0xff]
    %v864 = vld [vmem:[%s1 + $0x1a70] sm:$0xff]
    %v865 = vld [vmem:[%s1 + $0x1a78] sm:$0xff]
    %v866 = vld [vmem:[%s1 + $0x1a80] sm:$0xff]
    %v867 = vld [vmem:[%s1 + $0x1a88] sm:$0xff]
    %v868 = vld [vmem:[%s1 + $0x1a90] sm:$0xff]
    %v869 = vld [vmem:[%s1 + $0x1a98] sm:$0xff]
    %v870 = vld [vmem:[%s1 + $0x1aa0] sm:$0xff]
    %v871 = vld [vmem:[%s1 + $0x1aa8] sm:$0xff]
    %v872 = vld [vmem:[%s1 + $0x1ab0] sm:$0xff]
    %v873 = vld [vmem:[%s1 + $0x1ab8] sm:$0xff]
    %v874 = vld [vmem:[%s1 + $0x1ac0] sm:$0xff]
    %v875 = vld [vmem:[%s1 + $0x1ac8] sm:$0xff]
    %v876 = vld [vmem:[%s1 + $0x1ad0] sm:$0xff]
    %v877 = vld [vmem:[%s1 + $0x1ad8] sm:$0xff]
    %v878 = vld [vmem:[%s1 + $0x1ae0] sm:$0xff]
    %v879 = vld [vmem:[%s1 + $0x1ae8] sm:$0xff]
    %v880 = vld [vmem:[%s1 + $0x1af0] sm:$0xff]
    %v881 = vld [vmem:[%s1 + $0x1af8] sm:$0xff]
    %v882 = vld [vmem:[%s1 + $0x1b00] sm:$0xff]
    %v883 = vld [vmem:[%s1 + $0x1b08] sm:$0xff]
    %v884 = vld [vmem:[%s1 + $0x1b10] sm:$0xff]
    %v885 = vld [vmem:[%s1 + $0x1b18] sm:$0xff]
    %v886 = vld [vmem:[%s1 + $0x1b20] sm:$0xff]
    %v887 = vld [vmem:[%s1 + $0x1b28] sm:$0xff]
    %v888 = vld [vmem:[%s1 + $0x1b30] sm:$0xff]
    %v889 = vld [vmem:[%s1 + $0x1b38] sm:$0xff]
    %v890 = vld [vmem:[%s1 + $0x1b40] sm:$0xff]
    %v891 = vld [vmem:[%s1 + $0x1b48] sm:$0xff]
    %v892 = vld [vmem:[%s1 + $0x1b50] sm:$0xff]
    %v893 = vld [vmem:[%s1 + $0x1b58] sm:$0xff]
    %v894 = vld [vmem:[%s1 + $0x1b60] sm:$0xff]
    %v895 = vld [vmem:[%s1 + $0x1b68] sm:$0xff]
    %v896 = vld [vmem:[%s1 + $0x1b70] sm:$0xff]
    %v897 = vld [vmem:[%s1 + $0x1b78] sm:$0xff]
    %v898 = vld [vmem:[%s1 + $0x1b80] sm:$0xff]
    %v899 = vld [vmem:[%s1 + $0x1b88] sm:$0xff]
    %v900 = vld [vmem:[%s1 + $0x1b90] sm:$0xff]
    %v901 = vld [vmem:[%s1 + $0x1b98] sm:$0xff]
    %v902 = vld [vmem:[%s1 + $0x1ba0] sm:$0xff]
    %v903 = vld [vmem:[%s1 + $0x1ba8] sm:$0xff]
    %v904 = vld [vmem:[%s1 + $0x1bb0] sm:$0xff]
    %v905 = vld [vmem:[%s1 + $0x1bb8] sm:$0xff]
    %v906 = vld [vmem:[%s1 + $0x1bc0] sm:$0xff]
    %v907 = vld [vmem:[%s1 + $0x1bc8] sm:$0xff]
    %v908 = vld [vmem:[%s1 + $0x1bd0] sm:$0xff]
    %v909 = vld [vmem:[%s1 + $0x1bd8] sm:$0xff]
    %v910 = vld [vmem:[%s1 + $0x1be0] sm:$0xff]
    %v911 = vld [vmem:[%s1 + $0x1be8] sm:$0xff]
    %v912 = vld [vmem:[%s1 + $0x1bf0] sm:$0xff]
    %v913 = vld [vmem:[%s1 + $0x1bf8] sm:$0xff]
    %v914 = vld [vmem:[%s1 + $0x1c00] sm:$0xff]
    %v915 = vld [vmem:[%s1 + $0x1c08] sm:$0xff]
    %v916 = vld [vmem:[%s1 + $0x1c10] sm:$0xff]
    %v917 = vld [vmem:[%s1 + $0x1c18] sm:$0xff]
    %v918 = vld [vmem:[%s1 + $0x1c20] sm:$0xff]
    %v919 = vld [vmem:[%s1 + $0x1c28] sm:$0xff]
    %v920 = vld [vmem:[%s1 + $0x1c30] sm:$0xff]
    %v921 = vld [vmem:[%s1 + $0x1c38] sm:$0xff]
    %v922 = vld [vmem:[%s1 + $0x1c40] sm:$0xff]
    %v923 = vld [vmem:[%s1 + $0x1c48] sm:$0xff]
    %v924 = vld [vmem:[%s1 + $0x1c50] sm:$0xff]
    %v925 = vld [vmem:[%s1 + $0x1c58] sm:$0xff]
    %v926 = vld [vmem:[%s1 + $0x1c60] sm:$0xff]
    %v927 = vld [vmem:[%s1 + $0x1c68] sm:$0xff]
    %v928 = vld [vmem:[%s1 + $0x1c70] sm:$0xff]
    %v929 = vld [vmem:[%s1 + $0x1c78] sm:$0xff]
    %v930 = vld [vmem:[%s1 + $0x1c80] sm:$0xff]
    %v931 = vld [vmem:[%s1 + $0x1c88] sm:$0xff]
    %v932 = vld [vmem:[%s1 + $0x1c90] sm:$0xff]
    %v933 = vld [vmem:[%s1 + $0x1c98] sm:$0xff]
    %v934 = vld [vmem:[%s1 + $0x1ca0] sm:$0xff]
    %v935 = vld [vmem:[%s1 + $0x1ca8] sm:$0xff]
    %v936 = vld [vmem:[%s1 + $0x1cb0] sm:$0xff]
    %v937 = vld [vmem:[%s1 + $0x1cb8] sm:$0xff]
    %v938 = vld [vmem:[%s1 + $0x1cc0] sm:$0xff]
    %v939 = vld [vmem:[%s1 + $0x1cc8] sm:$0xff]
    %v940 = vld [vmem:[%s1 + $0x1cd0] sm:$0xff]
    %v941 = vld [vmem:[%s1 + $0x1cd8] sm:$0xff]
    %v942 = vld [vmem:[%s1 + $0x1ce0] sm:$0xff]
    %v943 = vld [vmem:[%s1 + $0x1ce8] sm:$0xff]
    %v944 = vld [vmem:[%s1 + $0x1cf0] sm:$0xff]
    %v945 = vld [vmem:[%s1 + $0x1cf8] sm:$0xff]
    %v946 = vld [vmem:[%s1 + $0x1d00] sm:$0xff]
    %v947 = vld [vmem:[%s1 + $0x1d08] sm:$0xff]
    %v948 = vld [vmem:[%s1 + $0x1d10] sm:$0xff]
    %v949 = vld [vmem:[%s1 + $0x1d18] sm:$0xff]
    %v950 = vld [vmem:[%s1 + $0x1d20] sm:$0xff]
    %v951 = vld [vmem:[%s1 + $0x1d28] sm:$0xff]
    %v952 = vld [vmem:[%s1 + $0x1d30] sm:$0xff]
    %v953 = vld [vmem:[%s1 + $0x1d38] sm:$0xff]
    %v954 = vld [vmem:[%s1 + $0x1d40] sm:$0xff]
    %v955 = vld [vmem:[%s1 + $0x1d48] sm:$0xff]
    %v956 = vld [vmem:[%s1 + $0x1d50] sm:$0xff]
    %v957 = vld [vmem:[%s1 + $0x1d58] sm:$0xff]
    %v958 = vld [vmem:[%s1 + $0x1d60] sm:$0xff]
    %v959 = vld [vmem:[%s1 + $0x1d68] sm:$0xff]
    %v960 = vld [vmem:[%s1 + $0x1d70] sm:$0xff]
    %v961 = vld [vmem:[%s1 + $0x1d78] sm:$0xff]
    %v962 = vld [vmem:[%s1 + $0x1d80] sm:$0xff]
    %v963 = vld [vmem:[%s1 + $0x1d88] sm:$0xff]
    %v964 = vld [vmem:[%s1 + $0x1d90] sm:$0xff]
    %v965 = vld [vmem:[%s1 + $0x1d98] sm:$0xff]
    %v966 = vld [vmem:[%s1 + $0x1da0] sm:$0xff]
    %v967 = vld [vmem:[%s1 + $0x1da8] sm:$0xff]
    %v968 = vld [vmem:[%s1 + $0x1db0] sm:$0xff]
    %v969 = vld [vmem:[%s1 + $0x1db8] sm:$0xff]
    %v970 = vld [vmem:[%s1 + $0x1dc0] sm:$0xff]
    %v971 = vld [vmem:[%s1 + $0x1dc8] sm:$0xff]
    %v972 = vld [vmem:[%s1 + $0x1dd0] sm:$0xff]
    %v973 = vld [vmem:[%s1 + $0x1dd8] sm:$0xff]
    %v974 = vld [vmem:[%s1 + $0x1de0] sm:$0xff]
    %v975 = vld [vmem:[%s1 + $0x1de8] sm:$0xff]
    %v976 = vld [vmem:[%s1 + $0x1df0] sm:$0xff]
    %v977 = vld [vmem:[%s1 + $0x1df8] sm:$0xff]
    %v978 = vld [vmem:[%s1 + $0x1e00] sm:$0xff]
    %v979 = vld [vmem:[%s1 + $0x1e08] sm:$0xff]
    %v980 = vld [vmem:[%s1 + $0x1e10] sm:$0xff]
    %v981 = vld [vmem:[%s1 + $0x1e18] sm:$0xff]
    %v982 = vld [vmem:[%s1 + $0x1e20] sm:$0xff]
    %v983 = vld [vmem:[%s1 + $0x1e28] sm:$0xff]
    %v984 = vld [vmem:[%s1 + $0x1e30] sm:$0xff]
    %v985 = vld [vmem:[%s1 + $0x1e38] sm:$0xff]
    %v986 = vld [vmem:[%s1 + $0x1e40] sm:$0xff]
    %v987 = vld [vmem:[%s1 + $0x1e48] sm:$0xff]
    %v988 = vld [vmem:[%s1 + $0x1e50] sm:$0xff]
    %v989 = vld [vmem:[%s1 + $0x1e58] sm:$0xff]
    %v990 = vld [vmem:[%s1 + $0x1e60] sm:$0xff]
    %v991 = vld [vmem:[%s1 + $0x1e68] sm:$0xff]
    %v992 = vld [vmem:[%s1 + $0x1e70] sm:$0xff]
    %v993 = vld [vmem:[%s1 + $0x1e78] sm:$0xff]
    %v994 = vld [vmem:[%s1 + $0x1e80] sm:$0xff]
    %v995 = vld [vmem:[%s1 + $0x1e88] sm:$0xff]
    %v996 = vld [vmem:[%s1 + $0x1e90] sm:$0xff]
    %v997 = vld [vmem:[%s1 + $0x1e98] sm:$0xff]
    %v998 = vld [vmem:[%s1 + $0x1ea0] sm:$0xff]
    %v999 = vld [vmem:[%s1 + $0x1ea8] sm:$0xff]
    %v1000 = vld [vmem:[%s1 + $0x1eb0] sm:$0xff]
    %v1001 = vld [vmem:[%s1 + $0x1eb8] sm:$0xff]
    %v1002 = vld [vmem:[%s1 + $0x1ec0] sm:$0xff]
    %v1003 = vld [vmem:[%s1 + $0x1ec8] sm:$0xff]
    %v1004 = vld [vmem:[%s1 + $0x1ed0] sm:$0xff]
    %v1005 = vld [vmem:[%s1 + $0x1ed8] sm:$0xff]
    %v1006 = vld [vmem:[%s1 + $0x1ee0] sm:$0xff]
    %v1007 = vld [vmem:[%s1 + $0x1ee8] sm:$0xff]
    %v1008 = vld [vmem:[%s1 + $0x1ef0] sm:$0xff]
    %v1009 = vld [vmem:[%s1 + $0x1ef8] sm:$0xff]
    %v1010 = vld [vmem:[%s1 + $0x1f00] sm:$0xff]
    %v1011 = vld [vmem:[%s1 + $0x1f08] sm:$0xff]
    %v1012 = vld [vmem:[%s1 + $0x1f10] sm:$0xff]
    %v1013 = vld [vmem:[%s1 + $0x1f18] sm:$0xff]
    %v1014 = vld [vmem:[%s1 + $0x1f20] sm:$0xff]
    %v1015 = vld [vmem:[%s1 + $0x1f28] sm:$0xff]
    %v1016 = vld [vmem:[%s1 + $0x1f30] sm:$0xff]
    %v1017 = vld [vmem:[%s1 + $0x1f38] sm:$0xff]
    %v1018 = vld [vmem:[%s1 + $0x1f40] sm:$0xff]
    %v1019 = vld [vmem:[%s1 + $0x1f48] sm:$0xff]
    %v1020 = vld [vmem:[%s1 + $0x1f50] sm:$0xff]
    %v1021 = vld [vmem:[%s1 + $0x1f58] sm:$0xff]
    %v1022 = vld [vmem:[%s1 + $0x1f60] sm:$0xff]
    %v1023 = vld [vmem:[%s1 + $0x1f68] sm:$0xff]
    %v1024 = vld [vmem:[%s1 + $0x1f70] sm:$0xff]
    %v1025 = vld [vmem:[%s1 + $0x1f78] sm:$0xff]
    %v1026 = vld [vmem:[%s1 + $0x1f80] sm:$0xff]
    %v1027 = vld [vmem:[%s1 + $0x1f88] sm:$0xff]
    %v1028 = vld [vmem:[%s1 + $0x1f90] sm:$0xff]
    %v1029 = vld [vmem:[%s1 + $0x1f98] sm:$0xff]
    %v1030 = vld [vmem:[%s1 + $0x1fa0] sm:$0xff]
    %v1031 = vld [vmem:[%s1 + $0x1fa8] sm:$0xff]
    %v1032 = vld [vmem:[%s1 + $0x1fb0] sm:$0xff]
    %v1033 = vld [vmem:[%s1 + $0x1fb8] sm:$0xff]
    %v1034 = vld [vmem:[%s1 + $0x1fc0] sm:$0xff]
    %v1035 = vld [vmem:[%s1 + $0x1fc8] sm:$0xff]
    %v1036 = vld [vmem:[%s1 + $0x1fd0] sm:$0xff]
    %v1037 = vld [vmem:[%s1 + $0x1fd8] sm:$0xff]
    %v1038 = vld [vmem:[%s1 + $0x1fe0] sm:$0xff]
    %v1039 = vld [vmem:[%s1 + $0x1fe8] sm:$0xff]
    %v1040 = vld [vmem:[%s1 + $0x1ff0] sm:$0xff]
    %v1041 = vld [vmem:[%s1 + $0x1ff8] sm:$0xff]
    %v1042 = vld [vmem:[%s1 + $0x2000] sm:$0xff]
    %v1043 = vld [vmem:[%s1 + $0x2008] sm:$0xff]
    %v1044 = vld [vmem:[%s1 + $0x2010] sm:$0xff]
    %v1045 = vld [vmem:[%s1 + $0x2018] sm:$0xff]
    %v1046 = vld [vmem:[%s1 + $0x2020] sm:$0xff]
    %v1047 = vld [vmem:[%s1 + $0x2028] sm:$0xff]
    %v1048 = vld [vmem:[%s1 + $0x2030] sm:$0xff]
    %v1049 = vld [vmem:[%s1 + $0x2038] sm:$0xff]
    %v1050 = vld [vmem:[%s1 + $0x2040] sm:$0xff]
    %v1051 = vld [vmem:[%s1 + $0x2048] sm:$0xff]
    %v1052 = vld [vmem:[%s1 + $0x2050] sm:$0xff]
    %v1053 = vld [vmem:[%s1 + $0x2058] sm:$0xff]
    %v1054 = vld [vmem:[%s1 + $0x2060] sm:$0xff]
    %v1055 = vld [vmem:[%s1 + $0x2068] sm:$0xff]
    %v1056 = vld [vmem:[%s1 + $0x2070] sm:$0xff]
    %v1057 = vld [vmem:[%s1 + $0x2078] sm:$0xff]
    %v1058 = vld [vmem:[%s1 + $0x2080] sm:$0xff]
    %v1059 = vld [vmem:[%s1 + $0x2088] sm:$0xff]
    %v1060 = vld [vmem:[%s1 + $0x2090] sm:$0xff]
    %v1061 = vld [vmem:[%s1 + $0x2098] sm:$0xff]
    %v1062 = vld [vmem:[%s1 + $0x20a0] sm:$0xff]
    %v1063 = vld [vmem:[%s1 + $0x20a8] sm:$0xff]
    %v1064 = vld [vmem:[%s1 + $0x20b0] sm:$0xff]
    %v1065 = vld [vmem:[%s1 + $0x20b8] sm:$0xff]
    %v1066 = vld [vmem:[%s1 + $0x20c0] sm:$0xff]
    %v1067 = vld [vmem:[%s1 + $0x20c8] sm:$0xff]
    %v1068 = vld [vmem:[%s1 + $0x20d0] sm:$0xff]
    %v1069 = vld [vmem:[%s1 + $0x20d8] sm:$0xff]
    %v1070 = vld [vmem:[%s1 + $0x20e0] sm:$0xff]
    %v1071 = vld [vmem:[%s1 + $0x20e8] sm:$0xff]
    %v1072 = vld [vmem:[%s1 + $0x20f0] sm:$0xff]
    %v1073 = vld [vmem:[%s1 + $0x20f8] sm:$0xff]
    %v1074 = vld [vmem:[%s1 + $0x2100] sm:$0xff]
    %v1075 = vld [vmem:[%s1 + $0x2108] sm:$0xff]
    %v1076 = vld [vmem:[%s1 + $0x2110] sm:$0xff]
    %v1077 = vld [vmem:[%s1 + $0x2118] sm:$0xff]
    %v1078 = vld [vmem:[%s1 + $0x2120] sm:$0xff]
    %v1079 = vld [vmem:[%s1 + $0x2128] sm:$0xff]
    %v1080 = vld [vmem:[%s1 + $0x2130] sm:$0xff]
    %v1081 = vld [vmem:[%s1 + $0x2138] sm:$0xff]
    %v1082 = vld [vmem:[%s1 + $0x2140] sm:$0xff]
    %v1083 = vld [vmem:[%s1 + $0x2148] sm:$0xff]
    %v1084 = vld [vmem:[%s1 + $0x2150] sm:$0xff]
    %v1085 = vld [vmem:[%s1 + $0x2158] sm:$0xff]
    %v1086 = vld [vmem:[%s1 + $0x2160] sm:$0xff]
    %v1087 = vld [vmem:[%s1 + $0x2168] sm:$0xff]
    %v1088 = vld [vmem:[%s1 + $0x2170] sm:$0xff]
    %v1089 = vld [vmem:[%s1 + $0x2178] sm:$0xff]
    %v1090 = vld [vmem:[%s1 + $0x2180] sm:$0xff]
    %v1091 = vld [vmem:[%s1 + $0x2188] sm:$0xff]
    %v1092 = vld [vmem:[%s1 + $0x2190] sm:$0xff]
    %v1093 = vld [vmem:[%s1 + $0x2198] sm:$0xff]
    %v1094 = vld [vmem:[%s1 + $0x21a0] sm:$0xff]
    %v1095 = vld [vmem:[%s1 + $0x21a8] sm:$0xff]
    %v1096 = vld [vmem:[%s1 + $0x21b0] sm:$0xff]
    %v1097 = vld [vmem:[%s1 + $0x21b8] sm:$0xff]
    %v1098 = vld [vmem:[%s1 + $0x21c0] sm:$0xff]
    %v1099 = vld [vmem:[%s1 + $0x21c8] sm:$0xff]
    %v1100 = vld [vmem:[%s1 + $0x21d0] sm:$0xff]
    %v1101 = vld [vmem:[%s1 + $0x21d8] sm:$0xff]
    %v1102 = vld [vmem:[%s1 + $0x21e0] sm:$0xff]
    %v1103 = vld [vmem:[%s1 + $0x21e8] sm:$0xff]
    %v1104 = vld [vmem:[%s1 + $0x21f0] sm:$0xff]
    %v1105 = vld [vmem:[%s1 + $0x21f8] sm:$0xff]
    %v1106 = vld [vmem:[%s1 + $0x2200] sm:$0xff]
    %v1107 = vld [vmem:[%s1 + $0x2208] sm:$0xff]
    %v1108 = vld [vmem:[%s1 + $0x2210] sm:$0xff]
    %v1109 = vld [vmem:[%s1 + $0x2218] sm:$0xff]
    %v1110 = vld [vmem:[%s1 + $0x2220] sm:$0xff]
    %v1111 = vld [vmem:[%s1 + $0x2228] sm:$0xff]
    %v1112 = vld [vmem:[%s1 + $0x2230] sm:$0xff]
    %v1113 = vld [vmem:[%s1 + $0x2238] sm:$0xff]
    %v1114 = vld [vmem:[%s1 + $0x2240] sm:$0xff]
    %v1115 = vld [vmem:[%s1 + $0x2248] sm:$0xff]
    %v1116 = vld [vmem:[%s1 + $0x2250] sm:$0xff]
    %v1117 = vld [vmem:[%s1 + $0x2258] sm:$0xff]
    %v1118 = vld [vmem:[%s1 + $0x2260] sm:$0xff]
    %v1119 = vld [vmem:[%s1 + $0x2268] sm:$0xff]
    %v1120 = vld [vmem:[%s1 + $0x2270] sm:$0xff]
    %v1121 = vld [vmem:[%s1 + $0x2278] sm:$0xff]
    %v1122 = vld [vmem:[%s1 + $0x2280] sm:$0xff]
    %v1123 = vld [vmem:[%s1 + $0x2288] sm:$0xff]
    %v1124 = vld [vmem:[%s1 + $0x2290] sm:$0xff]
    %v1125 = vld [vmem:[%s1 + $0x2298] sm:$0xff]
    %v1126 = vld [vmem:[%s1 + $0x22a0] sm:$0xff]
    %v1127 = vld [vmem:[%s1 + $0x22a8] sm:$0xff]
    %v1128 = vld [vmem:[%s1 + $0x22b0] sm:$0xff]
    %v1129 = vld [vmem:[%s1 + $0x22b8] sm:$0xff]
    %v1130 = vld [vmem:[%s1 + $0x22c0] sm:$0xff]
    %v1131 = vld [vmem:[%s1 + $0x22c8] sm:$0xff]
    %v1132 = vld [vmem:[%s1 + $0x22d0] sm:$0xff]
    %v1133 = vld [vmem:[%s1 + $0x22d8] sm:$0xff]
    %v1134 = vld [vmem:[%s1 + $0x22e0] sm:$0xff]
    %v1135 = vld [vmem:[%s1 + $0x22e8] sm:$0xff]
    %v1136 = vld [vmem:[%s1 + $0x22f0] sm:$0xff]
    %v1137 = vld [vmem:[%s1 + $0x22f8] sm:$0xff]
    %v1138 = vld [vmem:[%s1 + $0x2300] sm:$0xff]
    %v1139 = vld [vmem:[%s1 + $0x2308] sm:$0xff]
    %v1140 = vld [vmem:[%s1 + $0x2310] sm:$0xff]
    %v1141 = vld [vmem:[%s1 + $0x2318] sm:$0xff]
    %v1142 = vld [vmem:[%s1 + $0x2320] sm:$0xff]
    %v1143 = vld [vmem:[%s1 + $0x2328] sm:$0xff]
    %v1144 = vld [vmem:[%s1 + $0x2330] sm:$0xff]
    %v1145 = vld [vmem:[%s1 + $0x2338] sm:$0xff]
    %v1146 = vld [vmem:[%s1 + $0x2340] sm:$0xff]
    %v1147 = vld [vmem:[%s1 + $0x2348] sm:$0xff]
    %v1148 = vld [vmem:[%s1 + $0x2350] sm:$0xff]
    %v1149 = vld [vmem:[%s1 + $0x2358] sm:$0xff]
    %v1150 = vld [vmem:[%s1 + $0x2360] sm:$0xff]
    %v1151 = vld [vmem:[%s1 + $0x2368] sm:$0xff]
    %v1152 = vld [vmem:[%s2] sm:$0xff]
    %v1153 = vld [vmem:[%s2 + $0x8] sm:$0xff]
    %v1154 = vld [vmem:[%s2 + $0x10] sm:$0xff]
    %v1155 = vld [vmem:[%s2 + $0x18] sm:$0xff]
    %v1156 = vld [vmem:[%s2 + $0x20] sm:$0xff]
    %v1157 = vld [vmem:[%s2 + $0x28] sm:$0x3]
    %v1164 = vlaneseq
    %v1165 = vshrl.u32 %v1164, 7
    %v1166 = vsub.s32 0, %v1165
    %v1167 = vrot.slane %v1152, %v1166
    %v1168 = vlaneseq
    %v1169 = vshrl.u32 %v1168, 7
    %v1170 = vsub.s32 1, %v1169
    %v1171 = vrot.slane %v1152, %v1170
    %v1172 = vlaneseq
    %v1173 = vshrl.u32 %v1172, 7
    %v1174 = vsub.s32 2, %v1173
    %v1175 = vrot.slane %v1152, %v1174
    %v1176 = vlaneseq
    %v1177 = vshrl.u32 %v1176, 7
    %v1178 = vsub.s32 3, %v1177
    %v1179 = vrot.slane %v1152, %v1178
    %v1180 = vlaneseq
    %v1181 = vshrl.u32 %v1180, 7
    %v1182 = vsub.s32 4, %v1181
    %v1183 = vrot.slane %v1152, %v1182
    %v1184 = vlaneseq
    %v1185 = vshrl.u32 %v1184, 7
    %v1186 = vsub.s32 5, %v1185
    %v1187 = vrot.slane %v1152, %v1186
    %v1188 = vlaneseq
    %v1189 = vshrl.u32 %v1188, 7
    %v1190 = vsub.s32 6, %v1189
    %v1191 = vrot.slane %v1152, %v1190
    %v1192 = vlaneseq
    %v1193 = vshrl.u32 %v1192, 7
    %v1194 = vsub.s32 7, %v1193
    %v1195 = vrot.slane %v1152, %v1194
    %v1196 = vlaneseq
    %v1197 = vshrl.u32 %v1196, 7
    %v1198 = vsub.s32 0, %v1197
    %v1199 = vrot.slane %v1153, %v1198
    %v1200 = vlaneseq
    %v1201 = vshrl.u32 %v1200, 7
    %v1202 = vsub.s32 1, %v1201
    %v1203 = vrot.slane %v1153, %v1202
    %v1204 = vlaneseq
    %v1205 = vshrl.u32 %v1204, 7
    %v1206 = vsub.s32 2, %v1205
    %v1207 = vrot.slane %v1153, %v1206
    %v1208 = vlaneseq
    %v1209 = vshrl.u32 %v1208, 7
    %v1210 = vsub.s32 3, %v1209
    %v1211 = vrot.slane %v1153, %v1210
    %v1212 = vlaneseq
    %v1213 = vshrl.u32 %v1212, 7
    %v1214 = vsub.s32 4, %v1213
    %v1215 = vrot.slane %v1153, %v1214
    %v1216 = vlaneseq
    %v1217 = vshrl.u32 %v1216, 7
    %v1218 = vsub.s32 5, %v1217
    %v1219 = vrot.slane %v1153, %v1218
    %v1220 = vlaneseq
    %v1221 = vshrl.u32 %v1220, 7
    %v1222 = vsub.s32 6, %v1221
    %v1223 = vrot.slane %v1153, %v1222
    %v1224 = vlaneseq
    %v1225 = vshrl.u32 %v1224, 7
    %v1226 = vsub.s32 7, %v1225
    %v1227 = vrot.slane %v1153, %v1226
    %v1228 = vlaneseq
    %v1229 = vshrl.u32 %v1228, 7
    %v1230 = vsub.s32 0, %v1229
    %v1231 = vrot.slane %v1154, %v1230
    %v1232 = vlaneseq
    %v1233 = vshrl.u32 %v1232, 7
    %v1234 = vsub.s32 1, %v1233
    %v1235 = vrot.slane %v1154, %v1234
    %v1236 = vlaneseq
    %v1237 = vshrl.u32 %v1236, 7
    %v1238 = vsub.s32 2, %v1237
    %v1239 = vrot.slane %v1154, %v1238
    %v1240 = vlaneseq
    %v1241 = vshrl.u32 %v1240, 7
    %v1242 = vsub.s32 3, %v1241
    %v1243 = vrot.slane %v1154, %v1242
    %v1244 = vlaneseq
    %v1245 = vshrl.u32 %v1244, 7
    %v1246 = vsub.s32 4, %v1245
    %v1247 = vrot.slane %v1154, %v1246
    %v1248 = vlaneseq
    %v1249 = vshrl.u32 %v1248, 7
    %v1250 = vsub.s32 5, %v1249
    %v1251 = vrot.slane %v1154, %v1250
    %v1252 = vlaneseq
    %v1253 = vshrl.u32 %v1252, 7
    %v1254 = vsub.s32 6, %v1253
    %v1255 = vrot.slane %v1154, %v1254
    %v1256 = vlaneseq
    %v1257 = vshrl.u32 %v1256, 7
    %v1258 = vsub.s32 7, %v1257
    %v1259 = vrot.slane %v1154, %v1258
    %v1260 = vlaneseq
    %v1261 = vshrl.u32 %v1260, 7
    %v1262 = vsub.s32 0, %v1261
    %v1263 = vrot.slane %v1155, %v1262
    %v1264 = vlaneseq
    %v1265 = vshrl.u32 %v1264, 7
    %v1266 = vsub.s32 1, %v1265
    %v1267 = vrot.slane %v1155, %v1266
    %v1268 = vlaneseq
    %v1269 = vshrl.u32 %v1268, 7
    %v1270 = vsub.s32 2, %v1269
    %v1271 = vrot.slane %v1155, %v1270
    %v1272 = vlaneseq
    %v1273 = vshrl.u32 %v1272, 7
    %v1274 = vsub.s32 3, %v1273
    %v1275 = vrot.slane %v1155, %v1274
    %v1276 = vlaneseq
    %v1277 = vshrl.u32 %v1276, 7
    %v1278 = vsub.s32 4, %v1277
    %v1279 = vrot.slane %v1155, %v1278
    %v1280 = vlaneseq
    %v1281 = vshrl.u32 %v1280, 7
    %v1282 = vsub.s32 5, %v1281
    %v1283 = vrot.slane %v1155, %v1282
    %v1284 = vlaneseq
    %v1285 = vshrl.u32 %v1284, 7
    %v1286 = vsub.s32 6, %v1285
    %v1287 = vrot.slane %v1155, %v1286
    %v1288 = vlaneseq
    %v1289 = vshrl.u32 %v1288, 7
    %v1290 = vsub.s32 7, %v1289
    %v1291 = vrot.slane %v1155, %v1290
    %v1292 = vlaneseq
    %v1293 = vshrl.u32 %v1292, 7
    %v1294 = vsub.s32 0, %v1293
    %v1295 = vrot.slane %v1156, %v1294
    %v1296 = vlaneseq
    %v1297 = vshrl.u32 %v1296, 7
    %v1298 = vsub.s32 1, %v1297
    %v1299 = vrot.slane %v1156, %v1298
    %v1300 = vlaneseq
    %v1301 = vshrl.u32 %v1300, 7
    %v1302 = vsub.s32 2, %v1301
    %v1303 = vrot.slane %v1156, %v1302
    %v1304 = vlaneseq
    %v1305 = vshrl.u32 %v1304, 7
    %v1306 = vsub.s32 3, %v1305
    %v1307 = vrot.slane %v1156, %v1306
    %v1308 = vlaneseq
    %v1309 = vshrl.u32 %v1308, 7
    %v1310 = vsub.s32 4, %v1309
    %v1311 = vrot.slane %v1156, %v1310
    %v1312 = vlaneseq
    %v1313 = vshrl.u32 %v1312, 7
    %v1314 = vsub.s32 5, %v1313
    %v1315 = vrot.slane %v1156, %v1314
    %v1316 = vlaneseq
    %v1317 = vshrl.u32 %v1316, 7
    %v1318 = vsub.s32 6, %v1317
    %v1319 = vrot.slane %v1156, %v1318
    %v1320 = vlaneseq
    %v1321 = vshrl.u32 %v1320, 7
    %v1322 = vsub.s32 7, %v1321
    %v1323 = vrot.slane %v1156, %v1322
    %v1324 = vlaneseq
    %v1325 = vshrl.u32 %v1324, 7
    %v1326 = vsub.s32 0, %v1325
    %v1327 = vrot.slane %v1157, %v1326
    %v1328 = vlaneseq
    %v1329 = vshrl.u32 %v1328, 7
    %v1330 = vsub.s32 1, %v1329
    %v1331 = vrot.slane %v1157, %v1330
    %v1378 = vcombine.low %v14, %v15
    %v1379 = vcombine.low %v16, %v17
    %v1381 = vunpack.c.l.s4 1983009808
    %v1382 = vunpack.c.0.s8 %v1381
    %v1383 = vlaneseq
    %v1384 = vshrl.u32 %v1383, 7
    %v1385 = vsub.s32 %v1382, %v1384
    %v1386 = vrot.slane %v1378, %v1385
    %v1388 = vunpack.c.l.s4 1983009808
    %v1389 = vunpack.c.0.s8 %v1388
    %v1390 = vlaneseq
    %v1391 = vshrl.u32 %v1390, 7
    %v1392 = vsub.s32 %v1389, %v1391
    %v1393 = vrot.slane %v1379, %v1392
    %v1394 = vcombine.low %v1386, %v1393
    %v1395 = vcombine.high %v1386, %v1393
    %vm1397 = vcmask 719872
    %v1398 = vsel %vm1397, %v1395, 0
    %1400 = vmatprep.subr.mxu0 %v649
    %1401 = vmatpush1.msra.mxu0 %v648
    %1402 = vmatprep.subr.mxu0 %v607
    %1403 = vmatpush1.msra.mxu0 %v606
    %1404 = vmatprep.subr.mxu0 %v565
    %1405 = vmatpush1.msra.mxu0 %v564
    %1406 = vmatprep.subr.mxu0 %v523
    %1407 = vmatpush1.msra.mxu0 %v522
    %1408 = vmatprep.subr.mxu0 %v481
    %1409 = vmatpush1.msra.mxu0 %v480
    %1410 = vmatprep.subr.mxu0 %v439
    %1411 = vmatpush1.msra.mxu0 %v438
    %1412 = vmatprep.subr.mxu0 %v397
    %1413 = vmatpush1.msra.mxu0 %v396
    %1414 = vmatprep.subr.mxu0 %v355
    %1415 = vmatpush1.msra.mxu0 %v354
    %1416 = vmatprep.subr.mxu0 %v313
    %1417 = vmatpush1.msra.mxu0 %v312
    %1418 = vmatprep.subr.mxu0 %v271
    %1419 = vmatpush1.msra.mxu0 %v270
    %1420 = vmatprep.subr.mxu0 %v229
    %1421 = vmatpush1.msra.mxu0 %v228
    %1422 = vmatprep.subr.mxu0 %v187
    %1423 = vmatpush1.msra.mxu0 %v186
    %1424 = vmatprep.subr.mxu0 %v145
    %1425 = vmatpush1.msra.mxu0 %v144
    %1426 = vmatprep.subr.mxu0 %v103
    %1427 = vmatpush1.msra.mxu0 %v102
    %1428 = vmatprep.subr.mxu0 %v61
    %1429 = vmatpush1.msra.mxu0 %v60
    %1430 = vmatprep.subr.mxu0 %v19
    %1431 = vmatpush1.msra.mxu0 %v18
    %1432 = vmatprep.subr.mxu0 0.0
    %1433 = vmatpush2.msra.mxu0 0.0
    %1434 = vmatprep.subr.mxu0 0.0
    %1435 = vmatpush2.msra.mxu0 0.0
    %1436 = vmatprep.subr.mxu0 0.0
    %1437 = vmatpush2.msra.mxu0 0.0
    %1438 = vmatprep.subr.mxu0 0.0
    %1439 = vmatpush2.msra.mxu0 0.0
    %1440 = vmatprep.subr.mxu0 0.0
    %1441 = vmatpush2.msra.mxu0 0.0
    %1442 = vmatprep.subr.mxu0 %v1111
    %1443 = vmatpush2.msra.mxu0 %v1110
    %1444 = vmatprep.subr.mxu0 %v1069
    %1445 = vmatpush2.msra.mxu0 %v1068
    %1446 = vmatprep.subr.mxu0 %v1027
    %1447 = vmatpush2.msra.mxu0 %v1026
    %1448 = vmatprep.subr.mxu0 %v985
    %1449 = vmatpush2.msra.mxu0 %v984
    %1450 = vmatprep.subr.mxu0 %v943
    %1451 = vmatpush2.msra.mxu0 %v942
    %1452 = vmatprep.subr.mxu0 %v901
    %1453 = vmatpush2.msra.mxu0 %v900
    %1454 = vmatprep.subr.mxu0 %v859
    %1455 = vmatpush2.msra.mxu0 %v858
    %1456 = vmatprep.subr.mxu0 %v817
    %1457 = vmatpush2.msra.mxu0 %v816
    %1458 = vmatprep.subr.mxu0 %v775
    %1459 = vmatpush2.msra.mxu0 %v774
    %1460 = vmatprep.subr.mxu0 %v733
    %1461 = vmatpush2.msra.mxu0 %v732
    %1462 = vmatprep.subr.mxu0 %v691
    %1463 = vmatpush2.msra.mxu0 %v690
    %1464 = vmatprep.mubr.f32.mxu0 %v1398
    %1465 = vmatmul.mubr.f32.gmra.mxu0 %v1394
    %v1466 = vpop.f32.mrf.mxu0
    %v1467 = vadd.f32 %v1167, %v1466
    %v1468 = vpop.f32.mrf.mxu0
    %v1469 = vadd.f32 %v1171, %v1468
    %1470 = vdwg.mxu0
    %1471 = vmatprep.subr.mxu0 %v651
    %1472 = vmatpush1.msra.mxu0 %v650
    %1473 = vmatprep.subr.mxu0 %v609
    %1474 = vmatpush1.msra.mxu0 %v608
    %1475 = vmatprep.subr.mxu0 %v567
    %1476 = vmatpush1.msra.mxu0 %v566
    %1477 = vmatprep.subr.mxu0 %v525
    %1478 = vmatpush1.msra.mxu0 %v524
    %1479 = vmatprep.subr.mxu0 %v483
    %1480 = vmatpush1.msra.mxu0 %v482
    %1481 = vmatprep.subr.mxu0 %v441
    %1482 = vmatpush1.msra.mxu0 %v440
    %1483 = vmatprep.subr.mxu0 %v399
    %1484 = vmatpush1.msra.mxu0 %v398
    %1485 = vmatprep.subr.mxu0 %v357
    %1486 = vmatpush1.msra.mxu0 %v356
    %1487 = vmatprep.subr.mxu0 %v315
    %1488 = vmatpush1.msra.mxu0 %v314
    %1489 = vmatprep.subr.mxu0 %v273
    %1490 = vmatpush1.msra.mxu0 %v272
    %1491 = vmatprep.subr.mxu0 %v231
    %1492 = vmatpush1.msra.mxu0 %v230
    %1493 = vmatprep.subr.mxu0 %v189
    %1494 = vmatpush1.msra.mxu0 %v188
    %1495 = vmatprep.subr.mxu0 %v147
    %1496 = vmatpush1.msra.mxu0 %v146
    %1497 = vmatprep.subr.mxu0 %v105
    %1498 = vmatpush1.msra.mxu0 %v104
    %1499 = vmatprep.subr.mxu0 %v63
    %1500 = vmatpush1.msra.mxu0 %v62
    %1501 = vmatprep.subr.mxu0 %v21
    %1502 = vmatpush1.msra.mxu0 %v20
    %1503 = vmatprep.subr.mxu0 0.0
    %1504 = vmatpush2.msra.mxu0 0.0
    %1505 = vmatprep.subr.mxu0 0.0
    %1506 = vmatpush2.msra.mxu0 0.0
    %1507 = vmatprep.subr.mxu0 0.0
    %1508 = vmatpush2.msra.mxu0 0.0
    %1509 = vmatprep.subr.mxu0 0.0
    %1510 = vmatpush2.msra.mxu0 0.0
    %1511 = vmatprep.subr.mxu0 0.0
    %1512 = vmatpush2.msra.mxu0 0.0
    %1513 = vmatprep.subr.mxu0 %v1113
    %1514 = vmatpush2.msra.mxu0 %v1112
    %1515 = vmatprep.subr.mxu0 %v1071
    %1516 = vmatpush2.msra.mxu0 %v1070
    %1517 = vmatprep.subr.mxu0 %v1029
    %1518 = vmatpush2.msra.mxu0 %v1028
    %1519 = vmatprep.subr.mxu0 %v987
    %1520 = vmatpush2.msra.mxu0 %v986
    %1521 = vmatprep.subr.mxu0 %v945
    %1522 = vmatpush2.msra.mxu0 %v944
    %1523 = vmatprep.subr.mxu0 %v903
    %1524 = vmatpush2.msra.mxu0 %v902
    %1525 = vmatprep.subr.mxu0 %v861
    %1526 = vmatpush2.msra.mxu0 %v860
    %1527 = vmatprep.subr.mxu0 %v819
    %1528 = vmatpush2.msra.mxu0 %v818
    %1529 = vmatprep.subr.mxu0 %v777
    %1530 = vmatpush2.msra.mxu0 %v776
    %1531 = vmatprep.subr.mxu0 %v735
    %1532 = vmatpush2.msra.mxu0 %v734
    %1533 = vmatprep.subr.mxu0 %v693
    %1534 = vmatpush2.msra.mxu0 %v692
    %1535 = vmatprep.mubr.f32.mxu0 %v1398
    %1536 = vmatmul.mubr.f32.gmra.mxu0 %v1394
    %v1537 = vpop.f32.mrf.mxu0
    %v1538 = vadd.f32 %v1175, %v1537
    %v1539 = vpop.f32.mrf.mxu0
    %v1540 = vadd.f32 %v1179, %v1539
    %1541 = vdwg.mxu0
    %1542 = vmatprep.subr.mxu0 %v653
    %1543 = vmatpush1.msra.mxu0 %v652
    %1544 = vmatprep.subr.mxu0 %v611
    %1545 = vmatpush1.msra.mxu0 %v610
    %1546 = vmatprep.subr.mxu0 %v569
    %1547 = vmatpush1.msra.mxu0 %v568
    %1548 = vmatprep.subr.mxu0 %v527
    %1549 = vmatpush1.msra.mxu0 %v526
    %1550 = vmatprep.subr.mxu0 %v485
    %1551 = vmatpush1.msra.mxu0 %v484
    %1552 = vmatprep.subr.mxu0 %v443
    %1553 = vmatpush1.msra.mxu0 %v442
    %1554 = vmatprep.subr.mxu0 %v401
    %1555 = vmatpush1.msra.mxu0 %v400
    %1556 = vmatprep.subr.mxu0 %v359
    %1557 = vmatpush1.msra.mxu0 %v358
    %1558 = vmatprep.subr.mxu0 %v317
    %1559 = vmatpush1.msra.mxu0 %v316
    %1560 = vmatprep.subr.mxu0 %v275
    %1561 = vmatpush1.msra.mxu0 %v274
    %1562 = vmatprep.subr.mxu0 %v233
    %1563 = vmatpush1.msra.mxu0 %v232
    %1564 = vmatprep.subr.mxu0 %v191
    %1565 = vmatpush1.msra.mxu0 %v190
    %1566 = vmatprep.subr.mxu0 %v149
    %1567 = vmatpush1.msra.mxu0 %v148
    %1568 = vmatprep.subr.mxu0 %v107
    %1569 = vmatpush1.msra.mxu0 %v106
    %1570 = vmatprep.subr.mxu0 %v65
    %1571 = vmatpush1.msra.mxu0 %v64
    %1572 = vmatprep.subr.mxu0 %v23
    %1573 = vmatpush1.msra.mxu0 %v22
    %1574 = vmatprep.subr.mxu0 0.0
    %1575 = vmatpush2.msra.mxu0 0.0
    %1576 = vmatprep.subr.mxu0 0.0
    %1577 = vmatpush2.msra.mxu0 0.0
    %1578 = vmatprep.subr.mxu0 0.0
    %1579 = vmatpush2.msra.mxu0 0.0
    %1580 = vmatprep.subr.mxu0 0.0
    %1581 = vmatpush2.msra.mxu0 0.0
    %1582 = vmatprep.subr.mxu0 0.0
    %1583 = vmatpush2.msra.mxu0 0.0
    %1584 = vmatprep.subr.mxu0 %v1115
    %1585 = vmatpush2.msra.mxu0 %v1114
    %1586 = vmatprep.subr.mxu0 %v1073
    %1587 = vmatpush2.msra.mxu0 %v1072
    %1588 = vmatprep.subr.mxu0 %v1031
    %1589 = vmatpush2.msra.mxu0 %v1030
    %1590 = vmatprep.subr.mxu0 %v989
    %1591 = vmatpush2.msra.mxu0 %v988
    %1592 = vmatprep.subr.mxu0 %v947
    %1593 = vmatpush2.msra.mxu0 %v946
    %1594 = vmatprep.subr.mxu0 %v905
    %1595 = vmatpush2.msra.mxu0 %v904
    %1596 = vmatprep.subr.mxu0 %v863
    %1597 = vmatpush2.msra.mxu0 %v862
    %1598 = vmatprep.subr.mxu0 %v821
    %1599 = vmatpush2.msra.mxu0 %v820
    %1600 = vmatprep.subr.mxu0 %v779
    %1601 = vmatpush2.msra.mxu0 %v778
    %1602 = vmatprep.subr.mxu0 %v737
    %1603 = vmatpush2.msra.mxu0 %v736
    %1604 = vmatprep.subr.mxu0 %v695
    %1605 = vmatpush2.msra.mxu0 %v694
    %1606 = vmatprep.mubr.f32.mxu0 %v1398
    %1607 = vmatmul.mubr.f32.gmra.mxu0 %v1394
    %v1608 = vpop.f32.mrf.mxu0
    %v1609 = vadd.f32 %v1183, %v1608
    %v1610 = vpop.f32.mrf.mxu0
    %v1611 = vadd.f32 %v1187, %v1610
    %1612 = vdwg.mxu0
    %1613 = vmatprep.subr.mxu0 %v655
    %1614 = vmatpush1.msra.mxu0 %v654
    %1615 = vmatprep.subr.mxu0 %v613
    %1616 = vmatpush1.msra.mxu0 %v612
    %1617 = vmatprep.subr.mxu0 %v571
    %1618 = vmatpush1.msra.mxu0 %v570
    %1619 = vmatprep.subr.mxu0 %v529
    %1620 = vmatpush1.msra.mxu0 %v528
    %1621 = vmatprep.subr.mxu0 %v487
    %1622 = vmatpush1.msra.mxu0 %v486
    %1623 = vmatprep.subr.mxu0 %v445
    %1624 = vmatpush1.msra.mxu0 %v444
    %1625 = vmatprep.subr.mxu0 %v403
    %1626 = vmatpush1.msra.mxu0 %v402
    %1627 = vmatprep.subr.mxu0 %v361
    %1628 = vmatpush1.msra.mxu0 %v360
    %1629 = vmatprep.subr.mxu0 %v319
    %1630 = vmatpush1.msra.mxu0 %v318
    %1631 = vmatprep.subr.mxu0 %v277
    %1632 = vmatpush1.msra.mxu0 %v276
    %1633 = vmatprep.subr.mxu0 %v235
    %1634 = vmatpush1.msra.mxu0 %v234
    %1635 = vmatprep.subr.mxu0 %v193
    %1636 = vmatpush1.msra.mxu0 %v192
    %1637 = vmatprep.subr.mxu0 %v151
    %1638 = vmatpush1.msra.mxu0 %v150
    %1639 = vmatprep.subr.mxu0 %v109
    %1640 = vmatpush1.msra.mxu0 %v108
    %1641 = vmatprep.subr.mxu0 %v67
    %1642 = vmatpush1.msra.mxu0 %v66
    %1643 = vmatprep.subr.mxu0 %v25
    %1644 = vmatpush1.msra.mxu0 %v24
    %1645 = vmatprep.subr.mxu0 0.0
    %1646 = vmatpush2.msra.mxu0 0.0
    %1647 = vmatprep.subr.mxu0 0.0
    %1648 = vmatpush2.msra.mxu0 0.0
    %1649 = vmatprep.subr.mxu0 0.0
    %1650 = vmatpush2.msra.mxu0 0.0
    %1651 = vmatprep.subr.mxu0 0.0
    %1652 = vmatpush2.msra.mxu0 0.0
    %1653 = vmatprep.subr.mxu0 0.0
    %1654 = vmatpush2.msra.mxu0 0.0
    %1655 = vmatprep.subr.mxu0 %v1117
    %1656 = vmatpush2.msra.mxu0 %v1116
    %1657 = vmatprep.subr.mxu0 %v1075
    %1658 = vmatpush2.msra.mxu0 %v1074
    %1659 = vmatprep.subr.mxu0 %v1033
    %1660 = vmatpush2.msra.mxu0 %v1032
    %1661 = vmatprep.subr.mxu0 %v991
    %1662 = vmatpush2.msra.mxu0 %v990
    %1663 = vmatprep.subr.mxu0 %v949
    %1664 = vmatpush2.msra.mxu0 %v948
    %1665 = vmatprep.subr.mxu0 %v907
    %1666 = vmatpush2.msra.mxu0 %v906
    %1667 = vmatprep.subr.mxu0 %v865
    %1668 = vmatpush2.msra.mxu0 %v864
    %1669 = vmatprep.subr.mxu0 %v823
    %1670 = vmatpush2.msra.mxu0 %v822
    %1671 = vmatprep.subr.mxu0 %v781
    %1672 = vmatpush2.msra.mxu0 %v780
    %1673 = vmatprep.subr.mxu0 %v739
    %1674 = vmatpush2.msra.mxu0 %v738
    %1675 = vmatprep.subr.mxu0 %v697
    %1676 = vmatpush2.msra.mxu0 %v696
    %1677 = vmatprep.mubr.f32.mxu0 %v1398
    %1678 = vmatmul.mubr.f32.gmra.mxu0 %v1394
    %v1679 = vpop.f32.mrf.mxu0
    %v1680 = vadd.f32 %v1191, %v1679
    %v1681 = vpop.f32.mrf.mxu0
    %v1682 = vadd.f32 %v1195, %v1681
    %1683 = vdwg.mxu0
    %1684 = vmatprep.subr.mxu0 %v657
    %1685 = vmatpush1.msra.mxu0 %v656
    %1686 = vmatprep.subr.mxu0 %v615
    %1687 = vmatpush1.msra.mxu0 %v614
    %1688 = vmatprep.subr.mxu0 %v573
    %1689 = vmatpush1.msra.mxu0 %v572
    %1690 = vmatprep.subr.mxu0 %v531
    %1691 = vmatpush1.msra.mxu0 %v530
    %1692 = vmatprep.subr.mxu0 %v489
    %1693 = vmatpush1.msra.mxu0 %v488
    %1694 = vmatprep.subr.mxu0 %v447
    %1695 = vmatpush1.msra.mxu0 %v446
    %1696 = vmatprep.subr.mxu0 %v405
    %1697 = vmatpush1.msra.mxu0 %v404
    %1698 = vmatprep.subr.mxu0 %v363
    %1699 = vmatpush1.msra.mxu0 %v362
    %1700 = vmatprep.subr.mxu0 %v321
    %1701 = vmatpush1.msra.mxu0 %v320
    %1702 = vmatprep.subr.mxu0 %v279
    %1703 = vmatpush1.msra.mxu0 %v278
    %1704 = vmatprep.subr.mxu0 %v237
    %1705 = vmatpush1.msra.mxu0 %v236
    %1706 = vmatprep.subr.mxu0 %v195
    %1707 = vmatpush1.msra.mxu0 %v194
    %1708 = vmatprep.subr.mxu0 %v153
    %1709 = vmatpush1.msra.mxu0 %v152
    %1710 = vmatprep.subr.mxu0 %v111
    %1711 = vmatpush1.msra.mxu0 %v110
    %1712 = vmatprep.subr.mxu0 %v69
    %1713 = vmatpush1.msra.mxu0 %v68
    %1714 = vmatprep.subr.mxu0 %v27
    %1715 = vmatpush1.msra.mxu0 %v26
    %1716 = vmatprep.subr.mxu0 0.0
    %1717 = vmatpush2.msra.mxu0 0.0
    %1718 = vmatprep.subr.mxu0 0.0
    %1719 = vmatpush2.msra.mxu0 0.0
    %1720 = vmatprep.subr.mxu0 0.0
    %1721 = vmatpush2.msra.mxu0 0.0
    %1722 = vmatprep.subr.mxu0 0.0
    %1723 = vmatpush2.msra.mxu0 0.0
    %1724 = vmatprep.subr.mxu0 0.0
    %1725 = vmatpush2.msra.mxu0 0.0
    %1726 = vmatprep.subr.mxu0 %v1119
    %1727 = vmatpush2.msra.mxu0 %v1118
    %1728 = vmatprep.subr.mxu0 %v1077
    %1729 = vmatpush2.msra.mxu0 %v1076
    %1730 = vmatprep.subr.mxu0 %v1035
    %1731 = vmatpush2.msra.mxu0 %v1034
    %1732 = vmatprep.subr.mxu0 %v993
    %1733 = vmatpush2.msra.mxu0 %v992
    %1734 = vmatprep.subr.mxu0 %v951
    %1735 = vmatpush2.msra.mxu0 %v950
    %1736 = vmatprep.subr.mxu0 %v909
    %1737 = vmatpush2.msra.mxu0 %v908
    %1738 = vmatprep.subr.mxu0 %v867
    %1739 = vmatpush2.msra.mxu0 %v866
    %1740 = vmatprep.subr.mxu0 %v825
    %1741 = vmatpush2.msra.mxu0 %v824
    %1742 = vmatprep.subr.mxu0 %v783
    %1743 = vmatpush2.msra.mxu0 %v782
    %1744 = vmatprep.subr.mxu0 %v741
    %1745 = vmatpush2.msra.mxu0 %v740
    %1746 = vmatprep.subr.mxu0 %v699
    %1747 = vmatpush2.msra.mxu0 %v698
    %1748 = vmatprep.mubr.f32.mxu0 %v1398
    %1749 = vmatmul.mubr.f32.gmra.mxu0 %v1394
    %v1750 = vpop.f32.mrf.mxu0
    %v1751 = vadd.f32 %v1199, %v1750
    %v1752 = vpop.f32.mrf.mxu0
    %v1753 = vadd.f32 %v1203, %v1752
    %1754 = vdwg.mxu0
    %1755 = vmatprep.subr.mxu0 %v659
    %1756 = vmatpush1.msra.mxu0 %v658
    %1757 = vmatprep.subr.mxu0 %v617
    %1758 = vmatpush1.msra.mxu0 %v616
    %1759 = vmatprep.subr.mxu0 %v575
    %1760 = vmatpush1.msra.mxu0 %v574
    %1761 = vmatprep.subr.mxu0 %v533
    %1762 = vmatpush1.msra.mxu0 %v532
    %1763 = vmatprep.subr.mxu0 %v491
    %1764 = vmatpush1.msra.mxu0 %v490
    %1765 = vmatprep.subr.mxu0 %v449
    %1766 = vmatpush1.msra.mxu0 %v448
    %1767 = vmatprep.subr.mxu0 %v407
    %1768 = vmatpush1.msra.mxu0 %v406
    %1769 = vmatprep.subr.mxu0 %v365
    %1770 = vmatpush1.msra.mxu0 %v364
    %1771 = vmatprep.subr.mxu0 %v323
    %1772 = vmatpush1.msra.mxu0 %v322
    %1773 = vmatprep.subr.mxu0 %v281
    %1774 = vmatpush1.msra.mxu0 %v280
    %1775 = vmatprep.subr.mxu0 %v239
    %1776 = vmatpush1.msra.mxu0 %v238
    %1777 = vmatprep.subr.mxu0 %v197
    %1778 = vmatpush1.msra.mxu0 %v196
    %1779 = vmatprep.subr.mxu0 %v155
    %1780 = vmatpush1.msra.mxu0 %v154
    %1781 = vmatprep.subr.mxu0 %v113
    %1782 = vmatpush1.msra.mxu0 %v112
    %1783 = vmatprep.subr.mxu0 %v71
    %1784 = vmatpush1.msra.mxu0 %v70
    %1785 = vmatprep.subr.mxu0 %v29
    %1786 = vmatpush1.msra.mxu0 %v28
    %1787 = vmatprep.subr.mxu0 0.0
    %1788 = vmatpush2.msra.mxu0 0.0
    %1789 = vmatprep.subr.mxu0 0.0
    %1790 = vmatpush2.msra.mxu0 0.0
    %1791 = vmatprep.subr.mxu0 0.0
    %1792 = vmatpush2.msra.mxu0 0.0
    %1793 = vmatprep.subr.mxu0 0.0
    %1794 = vmatpush2.msra.mxu0 0.0
    %1795 = vmatprep.subr.mxu0 0.0
    %1796 = vmatpush2.msra.mxu0 0.0
    %1797 = vmatprep.subr.mxu0 %v1121
    %1798 = vmatpush2.msra.mxu0 %v1120
    %1799 = vmatprep.subr.mxu0 %v1079
    %1800 = vmatpush2.msra.mxu0 %v1078
    %1801 = vmatprep.subr.mxu0 %v1037
    %1802 = vmatpush2.msra.mxu0 %v1036
    %1803 = vmatprep.subr.mxu0 %v995
    %1804 = vmatpush2.msra.mxu0 %v994
    %1805 = vmatprep.subr.mxu0 %v953
    %1806 = vmatpush2.msra.mxu0 %v952
    %1807 = vmatprep.subr.mxu0 %v911
    %1808 = vmatpush2.msra.mxu0 %v910
    %1809 = vmatprep.subr.mxu0 %v869
    %1810 = vmatpush2.msra.mxu0 %v868
    %1811 = vmatprep.subr.mxu0 %v827
    %1812 = vmatpush2.msra.mxu0 %v826
    %1813 = vmatprep.subr.mxu0 %v785
    %1814 = vmatpush2.msra.mxu0 %v784
    %1815 = vmatprep.subr.mxu0 %v743
    %1816 = vmatpush2.msra.mxu0 %v742
    %1817 = vmatprep.subr.mxu0 %v701
    %1818 = vmatpush2.msra.mxu0 %v700
    %1819 = vmatprep.mubr.f32.mxu0 %v1398
    %1820 = vmatmul.mubr.f32.gmra.mxu0 %v1394
    %v1821 = vpop.f32.mrf.mxu0
    %v1822 = vadd.f32 %v1207, %v1821
    %v1823 = vpop.f32.mrf.mxu0
    %v1824 = vadd.f32 %v1211, %v1823
    %1825 = vdwg.mxu0
    %1826 = vmatprep.subr.mxu0 %v661
    %1827 = vmatpush1.msra.mxu0 %v660
    %1828 = vmatprep.subr.mxu0 %v619
    %1829 = vmatpush1.msra.mxu0 %v618
    %1830 = vmatprep.subr.mxu0 %v577
    %1831 = vmatpush1.msra.mxu0 %v576
    %1832 = vmatprep.subr.mxu0 %v535
    %1833 = vmatpush1.msra.mxu0 %v534
    %1834 = vmatprep.subr.mxu0 %v493
    %1835 = vmatpush1.msra.mxu0 %v492
    %1836 = vmatprep.subr.mxu0 %v451
    %1837 = vmatpush1.msra.mxu0 %v450
    %1838 = vmatprep.subr.mxu0 %v409
    %1839 = vmatpush1.msra.mxu0 %v408
    %1840 = vmatprep.subr.mxu0 %v367
    %1841 = vmatpush1.msra.mxu0 %v366
    %1842 = vmatprep.subr.mxu0 %v325
    %1843 = vmatpush1.msra.mxu0 %v324
    %1844 = vmatprep.subr.mxu0 %v283
    %1845 = vmatpush1.msra.mxu0 %v282
    %1846 = vmatprep.subr.mxu0 %v241
    %1847 = vmatpush1.msra.mxu0 %v240
    %1848 = vmatprep.subr.mxu0 %v199
    %1849 = vmatpush1.msra.mxu0 %v198
    %1850 = vmatprep.subr.mxu0 %v157
    %1851 = vmatpush1.msra.mxu0 %v156
    %1852 = vmatprep.subr.mxu0 %v115
    %1853 = vmatpush1.msra.mxu0 %v114
    %1854 = vmatprep.subr.mxu0 %v73
    %1855 = vmatpush1.msra.mxu0 %v72
    %1856 = vmatprep.subr.mxu0 %v31
    %1857 = vmatpush1.msra.mxu0 %v30
    %1858 = vmatprep.subr.mxu0 0.0
    %1859 = vmatpush2.msra.mxu0 0.0
    %1860 = vmatprep.subr.mxu0 0.0
    %1861 = vmatpush2.msra.mxu0 0.0
    %1862 = vmatprep.subr.mxu0 0.0
    %1863 = vmatpush2.msra.mxu0 0.0
    %1864 = vmatprep.subr.mxu0 0.0
    %1865 = vmatpush2.msra.mxu0 0.0
    %1866 = vmatprep.subr.mxu0 0.0
    %1867 = vmatpush2.msra.mxu0 0.0
    %1868 = vmatprep.subr.mxu0 %v1123
    %1869 = vmatpush2.msra.mxu0 %v1122
    %1870 = vmatprep.subr.mxu0 %v1081
    %1871 = vmatpush2.msra.mxu0 %v1080
    %1872 = vmatprep.subr.mxu0 %v1039
    %1873 = vmatpush2.msra.mxu0 %v1038
    %1874 = vmatprep.subr.mxu0 %v997
    %1875 = vmatpush2.msra.mxu0 %v996
    %1876 = vmatprep.subr.mxu0 %v955
    %1877 = vmatpush2.msra.mxu0 %v954
    %1878 = vmatprep.subr.mxu0 %v913
    %1879 = vmatpush2.msra.mxu0 %v912
    %1880 = vmatprep.subr.mxu0 %v871
    %1881 = vmatpush2.msra.mxu0 %v870
    %1882 = vmatprep.subr.mxu0 %v829
    %1883 = vmatpush2.msra.mxu0 %v828
    %1884 = vmatprep.subr.mxu0 %v787
    %1885 = vmatpush2.msra.mxu0 %v786
    %1886 = vmatprep.subr.mxu0 %v745
    %1887 = vmatpush2.msra.mxu0 %v744
    %1888 = vmatprep.subr.mxu0 %v703
    %1889 = vmatpush2.msra.mxu0 %v702
    %1890 = vmatprep.mubr.f32.mxu0 %v1398
    %1891 = vmatmul.mubr.f32.gmra.mxu0 %v1394
    %v1892 = vpop.f32.mrf.mxu0
    %v1893 = vadd.f32 %v1215, %v1892
    %v1894 = vpop.f32.mrf.mxu0
    %v1895 = vadd.f32 %v1219, %v1894
    %1896 = vdwg.mxu0
    %1897 = vmatprep.subr.mxu0 %v663
    %1898 = vmatpush1.msra.mxu0 %v662
    %1899 = vmatprep.subr.mxu0 %v621
    %1900 = vmatpush1.msra.mxu0 %v620
    %1901 = vmatprep.subr.mxu0 %v579
    %1902 = vmatpush1.msra.mxu0 %v578
    %1903 = vmatprep.subr.mxu0 %v537
    %1904 = vmatpush1.msra.mxu0 %v536
    %1905 = vmatprep.subr.mxu0 %v495
    %1906 = vmatpush1.msra.mxu0 %v494
    %1907 = vmatprep.subr.mxu0 %v453
    %1908 = vmatpush1.msra.mxu0 %v452
    %1909 = vmatprep.subr.mxu0 %v411
    %1910 = vmatpush1.msra.mxu0 %v410
    %1911 = vmatprep.subr.mxu0 %v369
    %1912 = vmatpush1.msra.mxu0 %v368
    %1913 = vmatprep.subr.mxu0 %v327
    %1914 = vmatpush1.msra.mxu0 %v326
    %1915 = vmatprep.subr.mxu0 %v285
    %1916 = vmatpush1.msra.mxu0 %v284
    %1917 = vmatprep.subr.mxu0 %v243
    %1918 = vmatpush1.msra.mxu0 %v242
    %1919 = vmatprep.subr.mxu0 %v201
    %1920 = vmatpush1.msra.mxu0 %v200
    %1921 = vmatprep.subr.mxu0 %v159
    %1922 = vmatpush1.msra.mxu0 %v158
    %1923 = vmatprep.subr.mxu0 %v117
    %1924 = vmatpush1.msra.mxu0 %v116
    %1925 = vmatprep.subr.mxu0 %v75
    %1926 = vmatpush1.msra.mxu0 %v74
    %1927 = vmatprep.subr.mxu0 %v33
    %1928 = vmatpush1.msra.mxu0 %v32
    %1929 = vmatprep.subr.mxu0 0.0
    %1930 = vmatpush2.msra.mxu0 0.0
    %1931 = vmatprep.subr.mxu0 0.0
    %1932 = vmatpush2.msra.mxu0 0.0
    %1933 = vmatprep.subr.mxu0 0.0
    %1934 = vmatpush2.msra.mxu0 0.0
    %1935 = vmatprep.subr.mxu0 0.0
    %1936 = vmatpush2.msra.mxu0 0.0
    %1937 = vmatprep.subr.mxu0 0.0
    %1938 = vmatpush2.msra.mxu0 0.0
    %1939 = vmatprep.subr.mxu0 %v1125
    %1940 = vmatpush2.msra.mxu0 %v1124
    %1941 = vmatprep.subr.mxu0 %v1083
    %1942 = vmatpush2.msra.mxu0 %v1082
    %1943 = vmatprep.subr.mxu0 %v1041
    %1944 = vmatpush2.msra.mxu0 %v1040
    %1945 = vmatprep.subr.mxu0 %v999
    %1946 = vmatpush2.msra.mxu0 %v998
    %1947 = vmatprep.subr.mxu0 %v957
    %1948 = vmatpush2.msra.mxu0 %v956
    %1949 = vmatprep.subr.mxu0 %v915
    %1950 = vmatpush2.msra.mxu0 %v914
    %1951 = vmatprep.subr.mxu0 %v873
    %1952 = vmatpush2.msra.mxu0 %v872
    %1953 = vmatprep.subr.mxu0 %v831
    %1954 = vmatpush2.msra.mxu0 %v830
    %1955 = vmatprep.subr.mxu0 %v789
    %1956 = vmatpush2.msra.mxu0 %v788
    %1957 = vmatprep.subr.mxu0 %v747
    %1958 = vmatpush2.msra.mxu0 %v746
    %1959 = vmatprep.subr.mxu0 %v705
    %1960 = vmatpush2.msra.mxu0 %v704
    %1961 = vmatprep.mubr.f32.mxu0 %v1398
    %1962 = vmatmul.mubr.f32.gmra.mxu0 %v1394
    %v1963 = vpop.f32.mrf.mxu0
    %v1964 = vadd.f32 %v1223, %v1963
    %v1965 = vpop.f32.mrf.mxu0
    %v1966 = vadd.f32 %v1227, %v1965
    %1967 = vdwg.mxu0
    %1968 = vmatprep.subr.mxu0 %v665
    %1969 = vmatpush1.msra.mxu0 %v664
    %1970 = vmatprep.subr.mxu0 %v623
    %1971 = vmatpush1.msra.mxu0 %v622
    %1972 = vmatprep.subr.mxu0 %v581
    %1973 = vmatpush1.msra.mxu0 %v580
    %1974 = vmatprep.subr.mxu0 %v539
    %1975 = vmatpush1.msra.mxu0 %v538
    %1976 = vmatprep.subr.mxu0 %v497
    %1977 = vmatpush1.msra.mxu0 %v496
    %1978 = vmatprep.subr.mxu0 %v455
    %1979 = vmatpush1.msra.mxu0 %v454
    %1980 = vmatprep.subr.mxu0 %v413
    %1981 = vmatpush1.msra.mxu0 %v412
    %1982 = vmatprep.subr.mxu0 %v371
    %1983 = vmatpush1.msra.mxu0 %v370
    %1984 = vmatprep.subr.mxu0 %v329
    %1985 = vmatpush1.msra.mxu0 %v328
    %1986 = vmatprep.subr.mxu0 %v287
    %1987 = vmatpush1.msra.mxu0 %v286
    %1988 = vmatprep.subr.mxu0 %v245
    %1989 = vmatpush1.msra.mxu0 %v244
    %1990 = vmatprep.subr.mxu0 %v203
    %1991 = vmatpush1.msra.mxu0 %v202
    %1992 = vmatprep.subr.mxu0 %v161
    %1993 = vmatpush1.msra.mxu0 %v160
    %1994 = vmatprep.subr.mxu0 %v119
    %1995 = vmatpush1.msra.mxu0 %v118
    %1996 = vmatprep.subr.mxu0 %v77
    %1997 = vmatpush1.msra.mxu0 %v76
    %1998 = vmatprep.subr.mxu0 %v35
    %1999 = vmatpush1.msra.mxu0 %v34
    %2000 = vmatprep.subr.mxu0 0.0
    %2001 = vmatpush2.msra.mxu0 0.0
    %2002 = vmatprep.subr.mxu0 0.0
    %2003 = vmatpush2.msra.mxu0 0.0
    %2004 = vmatprep.subr.mxu0 0.0
    %2005 = vmatpush2.msra.mxu0 0.0
    %2006 = vmatprep.subr.mxu0 0.0
    %2007 = vmatpush2.msra.mxu0 0.0
    %2008 = vmatprep.subr.mxu0 0.0
    %2009 = vmatpush2.msra.mxu0 0.0
    %2010 = vmatprep.subr.mxu0 %v1127
    %2011 = vmatpush2.msra.mxu0 %v1126
    %2012 = vmatprep.subr.mxu0 %v1085
    %2013 = vmatpush2.msra.mxu0 %v1084
    %2014 = vmatprep.subr.mxu0 %v1043
    %2015 = vmatpush2.msra.mxu0 %v1042
    %2016 = vmatprep.subr.mxu0 %v1001
    %2017 = vmatpush2.msra.mxu0 %v1000
    %2018 = vmatprep.subr.mxu0 %v959
    %2019 = vmatpush2.msra.mxu0 %v958
    %2020 = vmatprep.subr.mxu0 %v917
    %2021 = vmatpush2.msra.mxu0 %v916
    %2022 = vmatprep.subr.mxu0 %v875
    %2023 = vmatpush2.msra.mxu0 %v874
    %2024 = vmatprep.subr.mxu0 %v833
    %2025 = vmatpush2.msra.mxu0 %v832
    %2026 = vmatprep.subr.mxu0 %v791
    %2027 = vmatpush2.msra.mxu0 %v790
    %2028 = vmatprep.subr.mxu0 %v749
    %2029 = vmatpush2.msra.mxu0 %v748
    %2030 = vmatprep.subr.mxu0 %v707
    %2031 = vmatpush2.msra.mxu0 %v706
    %2032 = vmatprep.mubr.f32.mxu0 %v1398
    %2033 = vmatmul.mubr.f32.gmra.mxu0 %v1394
    %v2034 = vpop.f32.mrf.mxu0
    %v2035 = vadd.f32 %v1231, %v2034
    %v2036 = vpop.f32.mrf.mxu0
    %v2037 = vadd.f32 %v1235, %v2036
    %2038 = vdwg.mxu0
    %2039 = vmatprep.subr.mxu0 %v667
    %2040 = vmatpush1.msra.mxu0 %v666
    %2041 = vmatprep.subr.mxu0 %v625
    %2042 = vmatpush1.msra.mxu0 %v624
    %2043 = vmatprep.subr.mxu0 %v583
    %2044 = vmatpush1.msra.mxu0 %v582
    %2045 = vmatprep.subr.mxu0 %v541
    %2046 = vmatpush1.msra.mxu0 %v540
    %2047 = vmatprep.subr.mxu0 %v499
    %2048 = vmatpush1.msra.mxu0 %v498
    %2049 = vmatprep.subr.mxu0 %v457
    %2050 = vmatpush1.msra.mxu0 %v456
    %2051 = vmatprep.subr.mxu0 %v415
    %2052 = vmatpush1.msra.mxu0 %v414
    %2053 = vmatprep.subr.mxu0 %v373
    %2054 = vmatpush1.msra.mxu0 %v372
    %2055 = vmatprep.subr.mxu0 %v331
    %2056 = vmatpush1.msra.mxu0 %v330
    %2057 = vmatprep.subr.mxu0 %v289
    %2058 = vmatpush1.msra.mxu0 %v288
    %2059 = vmatprep.subr.mxu0 %v247
    %2060 = vmatpush1.msra.mxu0 %v246
    %2061 = vmatprep.subr.mxu0 %v205
    %2062 = vmatpush1.msra.mxu0 %v204
    %2063 = vmatprep.subr.mxu0 %v163
    %2064 = vmatpush1.msra.mxu0 %v162
    %2065 = vmatprep.subr.mxu0 %v121
    %2066 = vmatpush1.msra.mxu0 %v120
    %2067 = vmatprep.subr.mxu0 %v79
    %2068 = vmatpush1.msra.mxu0 %v78
    %2069 = vmatprep.subr.mxu0 %v37
    %2070 = vmatpush1.msra.mxu0 %v36
    %2071 = vmatprep.subr.mxu0 0.0
    %2072 = vmatpush2.msra.mxu0 0.0
    %2073 = vmatprep.subr.mxu0 0.0
    %2074 = vmatpush2.msra.mxu0 0.0
    %2075 = vmatprep.subr.mxu0 0.0
    %2076 = vmatpush2.msra.mxu0 0.0
    %2077 = vmatprep.subr.mxu0 0.0
    %2078 = vmatpush2.msra.mxu0 0.0
    %2079 = vmatprep.subr.mxu0 0.0
    %2080 = vmatpush2.msra.mxu0 0.0
    %2081 = vmatprep.subr.mxu0 %v1129
    %2082 = vmatpush2.msra.mxu0 %v1128
    %2083 = vmatprep.subr.mxu0 %v1087
    %2084 = vmatpush2.msra.mxu0 %v1086
    %2085 = vmatprep.subr.mxu0 %v1045
    %2086 = vmatpush2.msra.mxu0 %v1044
    %2087 = vmatprep.subr.mxu0 %v1003
    %2088 = vmatpush2.msra.mxu0 %v1002
    %2089 = vmatprep.subr.mxu0 %v961
    %2090 = vmatpush2.msra.mxu0 %v960
    %2091 = vmatprep.subr.mxu0 %v919
    %2092 = vmatpush2.msra.mxu0 %v918
    %2093 = vmatprep.subr.mxu0 %v877
    %2094 = vmatpush2.msra.mxu0 %v876
    %2095 = vmatprep.subr.mxu0 %v835
    %2096 = vmatpush2.msra.mxu0 %v834
    %2097 = vmatprep.subr.mxu0 %v793
    %2098 = vmatpush2.msra.mxu0 %v792
    %2099 = vmatprep.subr.mxu0 %v751
    %2100 = vmatpush2.msra.mxu0 %v750
    %2101 = vmatprep.subr.mxu0 %v709
    %2102 = vmatpush2.msra.mxu0 %v708
    %2103 = vmatprep.mubr.f32.mxu0 %v1398
    %2104 = vmatmul.mubr.f32.gmra.mxu0 %v1394
    %v2105 = vpop.f32.mrf.mxu0
    %v2106 = vadd.f32 %v1239, %v2105
    %v2107 = vpop.f32.mrf.mxu0
    %v2108 = vadd.f32 %v1243, %v2107
    %2109 = vdwg.mxu0
    %2110 = vmatprep.subr.mxu0 %v669
    %2111 = vmatpush1.msra.mxu0 %v668
    %2112 = vmatprep.subr.mxu0 %v627
    %2113 = vmatpush1.msra.mxu0 %v626
    %2114 = vmatprep.subr.mxu0 %v585
    %2115 = vmatpush1.msra.mxu0 %v584
    %2116 = vmatprep.subr.mxu0 %v543
    %2117 = vmatpush1.msra.mxu0 %v542
    %2118 = vmatprep.subr.mxu0 %v501
    %2119 = vmatpush1.msra.mxu0 %v500
    %2120 = vmatprep.subr.mxu0 %v459
    %2121 = vmatpush1.msra.mxu0 %v458
    %2122 = vmatprep.subr.mxu0 %v417
    %2123 = vmatpush1.msra.mxu0 %v416
    %2124 = vmatprep.subr.mxu0 %v375
    %2125 = vmatpush1.msra.mxu0 %v374
    %2126 = vmatprep.subr.mxu0 %v333
    %2127 = vmatpush1.msra.mxu0 %v332
    %2128 = vmatprep.subr.mxu0 %v291
    %2129 = vmatpush1.msra.mxu0 %v290
    %2130 = vmatprep.subr.mxu0 %v249
    %2131 = vmatpush1.msra.mxu0 %v248
    %2132 = vmatprep.subr.mxu0 %v207
    %2133 = vmatpush1.msra.mxu0 %v206
    %2134 = vmatprep.subr.mxu0 %v165
    %2135 = vmatpush1.msra.mxu0 %v164
    %2136 = vmatprep.subr.mxu0 %v123
    %2137 = vmatpush1.msra.mxu0 %v122
    %2138 = vmatprep.subr.mxu0 %v81
    %2139 = vmatpush1.msra.mxu0 %v80
    %2140 = vmatprep.subr.mxu0 %v39
    %2141 = vmatpush1.msra.mxu0 %v38
    %2142 = vmatprep.subr.mxu0 0.0
    %2143 = vmatpush2.msra.mxu0 0.0
    %2144 = vmatprep.subr.mxu0 0.0
    %2145 = vmatpush2.msra.mxu0 0.0
    %2146 = vmatprep.subr.mxu0 0.0
    %2147 = vmatpush2.msra.mxu0 0.0
    %2148 = vmatprep.subr.mxu0 0.0
    %2149 = vmatpush2.msra.mxu0 0.0
    %2150 = vmatprep.subr.mxu0 0.0
    %2151 = vmatpush2.msra.mxu0 0.0
    %2152 = vmatprep.subr.mxu0 %v1131
    %2153 = vmatpush2.msra.mxu0 %v1130
    %2154 = vmatprep.subr.mxu0 %v1089
    %2155 = vmatpush2.msra.mxu0 %v1088
    %2156 = vmatprep.subr.mxu0 %v1047
    %2157 = vmatpush2.msra.mxu0 %v1046
    %2158 = vmatprep.subr.mxu0 %v1005
    %2159 = vmatpush2.msra.mxu0 %v1004
    %2160 = vmatprep.subr.mxu0 %v963
    %2161 = vmatpush2.msra.mxu0 %v962
    %2162 = vmatprep.subr.mxu0 %v921
    %2163 = vmatpush2.msra.mxu0 %v920
    %2164 = vmatprep.subr.mxu0 %v879
    %2165 = vmatpush2.msra.mxu0 %v878
    %2166 = vmatprep.subr.mxu0 %v837
    %2167 = vmatpush2.msra.mxu0 %v836
    %2168 = vmatprep.subr.mxu0 %v795
    %2169 = vmatpush2.msra.mxu0 %v794
    %2170 = vmatprep.subr.mxu0 %v753
    %2171 = vmatpush2.msra.mxu0 %v752
    %2172 = vmatprep.subr.mxu0 %v711
    %2173 = vmatpush2.msra.mxu0 %v710
    %2174 = vmatprep.mubr.f32.mxu0 %v1398
    %2175 = vmatmul.mubr.f32.gmra.mxu0 %v1394
    %v2176 = vpop.f32.mrf.mxu0
    %v2177 = vadd.f32 %v1247, %v2176
    %v2178 = vpop.f32.mrf.mxu0
    %v2179 = vadd.f32 %v1251, %v2178
    %2180 = vdwg.mxu0
    %2181 = vmatprep.subr.mxu0 %v671
    %2182 = vmatpush1.msra.mxu0 %v670
    %2183 = vmatprep.subr.mxu0 %v629
    %2184 = vmatpush1.msra.mxu0 %v628
    %2185 = vmatprep.subr.mxu0 %v587
    %2186 = vmatpush1.msra.mxu0 %v586
    %2187 = vmatprep.subr.mxu0 %v545
    %2188 = vmatpush1.msra.mxu0 %v544
    %2189 = vmatprep.subr.mxu0 %v503
    %2190 = vmatpush1.msra.mxu0 %v502
    %2191 = vmatprep.subr.mxu0 %v461
    %2192 = vmatpush1.msra.mxu0 %v460
    %2193 = vmatprep.subr.mxu0 %v419
    %2194 = vmatpush1.msra.mxu0 %v418
    %2195 = vmatprep.subr.mxu0 %v377
    %2196 = vmatpush1.msra.mxu0 %v376
    %2197 = vmatprep.subr.mxu0 %v335
    %2198 = vmatpush1.msra.mxu0 %v334
    %2199 = vmatprep.subr.mxu0 %v293
    %2200 = vmatpush1.msra.mxu0 %v292
    %2201 = vmatprep.subr.mxu0 %v251
    %2202 = vmatpush1.msra.mxu0 %v250
    %2203 = vmatprep.subr.mxu0 %v209
    %2204 = vmatpush1.msra.mxu0 %v208
    %2205 = vmatprep.subr.mxu0 %v167
    %2206 = vmatpush1.msra.mxu0 %v166
    %2207 = vmatprep.subr.mxu0 %v125
    %2208 = vmatpush1.msra.mxu0 %v124
    %2209 = vmatprep.subr.mxu0 %v83
    %2210 = vmatpush1.msra.mxu0 %v82
    %2211 = vmatprep.subr.mxu0 %v41
    %2212 = vmatpush1.msra.mxu0 %v40
    %2213 = vmatprep.subr.mxu0 0.0
    %2214 = vmatpush2.msra.mxu0 0.0
    %2215 = vmatprep.subr.mxu0 0.0
    %2216 = vmatpush2.msra.mxu0 0.0
    %2217 = vmatprep.subr.mxu0 0.0
    %2218 = vmatpush2.msra.mxu0 0.0
    %2219 = vmatprep.subr.mxu0 0.0
    %2220 = vmatpush2.msra.mxu0 0.0
    %2221 = vmatprep.subr.mxu0 0.0
    %2222 = vmatpush2.msra.mxu0 0.0
    %2223 = vmatprep.subr.mxu0 %v1133
    %2224 = vmatpush2.msra.mxu0 %v1132
    %2225 = vmatprep.subr.mxu0 %v1091
    %2226 = vmatpush2.msra.mxu0 %v1090
    %2227 = vmatprep.subr.mxu0 %v1049
    %2228 = vmatpush2.msra.mxu0 %v1048
    %2229 = vmatprep.subr.mxu0 %v1007
    %2230 = vmatpush2.msra.mxu0 %v1006
    %2231 = vmatprep.subr.mxu0 %v965
    %2232 = vmatpush2.msra.mxu0 %v964
    %2233 = vmatprep.subr.mxu0 %v923
    %2234 = vmatpush2.msra.mxu0 %v922
    %2235 = vmatprep.subr.mxu0 %v881
    %2236 = vmatpush2.msra.mxu0 %v880
    %2237 = vmatprep.subr.mxu0 %v839
    %2238 = vmatpush2.msra.mxu0 %v838
    %2239 = vmatprep.subr.mxu0 %v797
    %2240 = vmatpush2.msra.mxu0 %v796
    %2241 = vmatprep.subr.mxu0 %v755
    %2242 = vmatpush2.msra.mxu0 %v754
    %2243 = vmatprep.subr.mxu0 %v713
    %2244 = vmatpush2.msra.mxu0 %v712
    %2245 = vmatprep.mubr.f32.mxu0 %v1398
    %2246 = vmatmul.mubr.f32.gmra.mxu0 %v1394
    %v2247 = vpop.f32.mrf.mxu0
    %v2248 = vadd.f32 %v1255, %v2247
    %v2249 = vpop.f32.mrf.mxu0
    %v2250 = vadd.f32 %v1259, %v2249
    %2251 = vdwg.mxu0
    %2252 = vmatprep.subr.mxu0 %v673
    %2253 = vmatpush1.msra.mxu0 %v672
    %2254 = vmatprep.subr.mxu0 %v631
    %2255 = vmatpush1.msra.mxu0 %v630
    %2256 = vmatprep.subr.mxu0 %v589
    %2257 = vmatpush1.msra.mxu0 %v588
    %2258 = vmatprep.subr.mxu0 %v547
    %2259 = vmatpush1.msra.mxu0 %v546
    %2260 = vmatprep.subr.mxu0 %v505
    %2261 = vmatpush1.msra.mxu0 %v504
    %2262 = vmatprep.subr.mxu0 %v463
    %2263 = vmatpush1.msra.mxu0 %v462
    %2264 = vmatprep.subr.mxu0 %v421
    %2265 = vmatpush1.msra.mxu0 %v420
    %2266 = vmatprep.subr.mxu0 %v379
    %2267 = vmatpush1.msra.mxu0 %v378
    %2268 = vmatprep.subr.mxu0 %v337
    %2269 = vmatpush1.msra.mxu0 %v336
    %2270 = vmatprep.subr.mxu0 %v295
    %2271 = vmatpush1.msra.mxu0 %v294
    %2272 = vmatprep.subr.mxu0 %v253
    %2273 = vmatpush1.msra.mxu0 %v252
    %2274 = vmatprep.subr.mxu0 %v211
    %2275 = vmatpush1.msra.mxu0 %v210
    %2276 = vmatprep.subr.mxu0 %v169
    %2277 = vmatpush1.msra.mxu0 %v168
    %2278 = vmatprep.subr.mxu0 %v127
    %2279 = vmatpush1.msra.mxu0 %v126
    %2280 = vmatprep.subr.mxu0 %v85
    %2281 = vmatpush1.msra.mxu0 %v84
    %2282 = vmatprep.subr.mxu0 %v43
    %2283 = vmatpush1.msra.mxu0 %v42
    %2284 = vmatprep.subr.mxu0 0.0
    %2285 = vmatpush2.msra.mxu0 0.0
    %2286 = vmatprep.subr.mxu0 0.0
    %2287 = vmatpush2.msra.mxu0 0.0
    %2288 = vmatprep.subr.mxu0 0.0
    %2289 = vmatpush2.msra.mxu0 0.0
    %2290 = vmatprep.subr.mxu0 0.0
    %2291 = vmatpush2.msra.mxu0 0.0
    %2292 = vmatprep.subr.mxu0 0.0
    %2293 = vmatpush2.msra.mxu0 0.0
    %2294 = vmatprep.subr.mxu0 %v1135
    %2295 = vmatpush2.msra.mxu0 %v1134
    %2296 = vmatprep.subr.mxu0 %v1093
    %2297 = vmatpush2.msra.mxu0 %v1092
    %2298 = vmatprep.subr.mxu0 %v1051
    %2299 = vmatpush2.msra.mxu0 %v1050
    %2300 = vmatprep.subr.mxu0 %v1009
    %2301 = vmatpush2.msra.mxu0 %v1008
    %2302 = vmatprep.subr.mxu0 %v967
    %2303 = vmatpush2.msra.mxu0 %v966
    %2304 = vmatprep.subr.mxu0 %v925
    %2305 = vmatpush2.msra.mxu0 %v924
    %2306 = vmatprep.subr.mxu0 %v883
    %2307 = vmatpush2.msra.mxu0 %v882
    %2308 = vmatprep.subr.mxu0 %v841
    %2309 = vmatpush2.msra.mxu0 %v840
    %2310 = vmatprep.subr.mxu0 %v799
    %2311 = vmatpush2.msra.mxu0 %v798
    %2312 = vmatprep.subr.mxu0 %v757
    %2313 = vmatpush2.msra.mxu0 %v756
    %2314 = vmatprep.subr.mxu0 %v715
    %2315 = vmatpush2.msra.mxu0 %v714
    %2316 = vmatprep.mubr.f32.mxu0 %v1398
    %2317 = vmatmul.mubr.f32.gmra.mxu0 %v1394
    %v2318 = vpop.f32.mrf.mxu0
    %v2319 = vadd.f32 %v1263, %v2318
    %v2320 = vpop.f32.mrf.mxu0
    %v2321 = vadd.f32 %v1267, %v2320
    %2322 = vdwg.mxu0
    %2323 = vmatprep.subr.mxu0 %v675
    %2324 = vmatpush1.msra.mxu0 %v674
    %2325 = vmatprep.subr.mxu0 %v633
    %2326 = vmatpush1.msra.mxu0 %v632
    %2327 = vmatprep.subr.mxu0 %v591
    %2328 = vmatpush1.msra.mxu0 %v590
    %2329 = vmatprep.subr.mxu0 %v549
    %2330 = vmatpush1.msra.mxu0 %v548
    %2331 = vmatprep.subr.mxu0 %v507
    %2332 = vmatpush1.msra.mxu0 %v506
    %2333 = vmatprep.subr.mxu0 %v465
    %2334 = vmatpush1.msra.mxu0 %v464
    %2335 = vmatprep.subr.mxu0 %v423
    %2336 = vmatpush1.msra.mxu0 %v422
    %2337 = vmatprep.subr.mxu0 %v381
    %2338 = vmatpush1.msra.mxu0 %v380
    %2339 = vmatprep.subr.mxu0 %v339
    %2340 = vmatpush1.msra.mxu0 %v338
    %2341 = vmatprep.subr.mxu0 %v297
    %2342 = vmatpush1.msra.mxu0 %v296
    %2343 = vmatprep.subr.mxu0 %v255
    %2344 = vmatpush1.msra.mxu0 %v254
    %2345 = vmatprep.subr.mxu0 %v213
    %2346 = vmatpush1.msra.mxu0 %v212
    %2347 = vmatprep.subr.mxu0 %v171
    %2348 = vmatpush1.msra.mxu0 %v170
    %2349 = vmatprep.subr.mxu0 %v129
    %2350 = vmatpush1.msra.mxu0 %v128
    %2351 = vmatprep.subr.mxu0 %v87
    %2352 = vmatpush1.msra.mxu0 %v86
    %2353 = vmatprep.subr.mxu0 %v45
    %2354 = vmatpush1.msra.mxu0 %v44
    %2355 = vmatprep.subr.mxu0 0.0
    %2356 = vmatpush2.msra.mxu0 0.0
    %2357 = vmatprep.subr.mxu0 0.0
    %2358 = vmatpush2.msra.mxu0 0.0
    %2359 = vmatprep.subr.mxu0 0.0
    %2360 = vmatpush2.msra.mxu0 0.0
    %2361 = vmatprep.subr.mxu0 0.0
    %2362 = vmatpush2.msra.mxu0 0.0
    %2363 = vmatprep.subr.mxu0 0.0
    %2364 = vmatpush2.msra.mxu0 0.0
    %2365 = vmatprep.subr.mxu0 %v1137
    %2366 = vmatpush2.msra.mxu0 %v1136
    %2367 = vmatprep.subr.mxu0 %v1095
    %2368 = vmatpush2.msra.mxu0 %v1094
    %2369 = vmatprep.subr.mxu0 %v1053
    %2370 = vmatpush2.msra.mxu0 %v1052
    %2371 = vmatprep.subr.mxu0 %v1011
    %2372 = vmatpush2.msra.mxu0 %v1010
    %2373 = vmatprep.subr.mxu0 %v969
    %2374 = vmatpush2.msra.mxu0 %v968
    %2375 = vmatprep.subr.mxu0 %v927
    %2376 = vmatpush2.msra.mxu0 %v926
    %2377 = vmatprep.subr.mxu0 %v885
    %2378 = vmatpush2.msra.mxu0 %v884
    %2379 = vmatprep.subr.mxu0 %v843
    %2380 = vmatpush2.msra.mxu0 %v842
    %2381 = vmatprep.subr.mxu0 %v801
    %2382 = vmatpush2.msra.mxu0 %v800
    %2383 = vmatprep.subr.mxu0 %v759
    %2384 = vmatpush2.msra.mxu0 %v758
    %2385 = vmatprep.subr.mxu0 %v717
    %2386 = vmatpush2.msra.mxu0 %v716
    %2387 = vmatprep.mubr.f32.mxu0 %v1398
    %2388 = vmatmul.mubr.f32.gmra.mxu0 %v1394
    %v2389 = vpop.f32.mrf.mxu0
    %v2390 = vadd.f32 %v1271, %v2389
    %v2391 = vpop.f32.mrf.mxu0
    %v2392 = vadd.f32 %v1275, %v2391
    %2393 = vdwg.mxu0
    %2394 = vmatprep.subr.mxu0 %v677
    %2395 = vmatpush1.msra.mxu0 %v676
    %2396 = vmatprep.subr.mxu0 %v635
    %2397 = vmatpush1.msra.mxu0 %v634
    %2398 = vmatprep.subr.mxu0 %v593
    %2399 = vmatpush1.msra.mxu0 %v592
    %2400 = vmatprep.subr.mxu0 %v551
    %2401 = vmatpush1.msra.mxu0 %v550
    %2402 = vmatprep.subr.mxu0 %v509
    %2403 = vmatpush1.msra.mxu0 %v508
    %2404 = vmatprep.subr.mxu0 %v467
    %2405 = vmatpush1.msra.mxu0 %v466
    %2406 = vmatprep.subr.mxu0 %v425
    %2407 = vmatpush1.msra.mxu0 %v424
    %2408 = vmatprep.subr.mxu0 %v383
    %2409 = vmatpush1.msra.mxu0 %v382
    %2410 = vmatprep.subr.mxu0 %v341
    %2411 = vmatpush1.msra.mxu0 %v340
    %2412 = vmatprep.subr.mxu0 %v299
    %2413 = vmatpush1.msra.mxu0 %v298
    %2414 = vmatprep.subr.mxu0 %v257
    %2415 = vmatpush1.msra.mxu0 %v256
    %2416 = vmatprep.subr.mxu0 %v215
    %2417 = vmatpush1.msra.mxu0 %v214
    %2418 = vmatprep.subr.mxu0 %v173
    %2419 = vmatpush1.msra.mxu0 %v172
    %2420 = vmatprep.subr.mxu0 %v131
    %2421 = vmatpush1.msra.mxu0 %v130
    %2422 = vmatprep.subr.mxu0 %v89
    %2423 = vmatpush1.msra.mxu0 %v88
    %2424 = vmatprep.subr.mxu0 %v47
    %2425 = vmatpush1.msra.mxu0 %v46
    %2426 = vmatprep.subr.mxu0 0.0
    %2427 = vmatpush2.msra.mxu0 0.0
    %2428 = vmatprep.subr.mxu0 0.0
    %2429 = vmatpush2.msra.mxu0 0.0
    %2430 = vmatprep.subr.mxu0 0.0
    %2431 = vmatpush2.msra.mxu0 0.0
    %2432 = vmatprep.subr.mxu0 0.0
    %2433 = vmatpush2.msra.mxu0 0.0
    %2434 = vmatprep.subr.mxu0 0.0
    %2435 = vmatpush2.msra.mxu0 0.0
    %2436 = vmatprep.subr.mxu0 %v1139
    %2437 = vmatpush2.msra.mxu0 %v1138
    %2438 = vmatprep.subr.mxu0 %v1097
    %2439 = vmatpush2.msra.mxu0 %v1096
    %2440 = vmatprep.subr.mxu0 %v1055
    %2441 = vmatpush2.msra.mxu0 %v1054
    %2442 = vmatprep.subr.mxu0 %v1013
    %2443 = vmatpush2.msra.mxu0 %v1012
    %2444 = vmatprep.subr.mxu0 %v971
    %2445 = vmatpush2.msra.mxu0 %v970
    %2446 = vmatprep.subr.mxu0 %v929
    %2447 = vmatpush2.msra.mxu0 %v928
    %2448 = vmatprep.subr.mxu0 %v887
    %2449 = vmatpush2.msra.mxu0 %v886
    %2450 = vmatprep.subr.mxu0 %v845
    %2451 = vmatpush2.msra.mxu0 %v844
    %2452 = vmatprep.subr.mxu0 %v803
    %2453 = vmatpush2.msra.mxu0 %v802
    %2454 = vmatprep.subr.mxu0 %v761
    %2455 = vmatpush2.msra.mxu0 %v760
    %2456 = vmatprep.subr.mxu0 %v719
    %2457 = vmatpush2.msra.mxu0 %v718
    %2458 = vmatprep.mubr.f32.mxu0 %v1398
    %2459 = vmatmul.mubr.f32.gmra.mxu0 %v1394
    %v2460 = vpop.f32.mrf.mxu0
    %v2461 = vadd.f32 %v1279, %v2460
    %v2462 = vpop.f32.mrf.mxu0
    %v2463 = vadd.f32 %v1283, %v2462
    %2464 = vdwg.mxu0
    %2465 = vmatprep.subr.mxu0 %v679
    %2466 = vmatpush1.msra.mxu0 %v678
    %2467 = vmatprep.subr.mxu0 %v637
    %2468 = vmatpush1.msra.mxu0 %v636
    %2469 = vmatprep.subr.mxu0 %v595
    %2470 = vmatpush1.msra.mxu0 %v594
    %2471 = vmatprep.subr.mxu0 %v553
    %2472 = vmatpush1.msra.mxu0 %v552
    %2473 = vmatprep.subr.mxu0 %v511
    %2474 = vmatpush1.msra.mxu0 %v510
    %2475 = vmatprep.subr.mxu0 %v469
    %2476 = vmatpush1.msra.mxu0 %v468
    %2477 = vmatprep.subr.mxu0 %v427
    %2478 = vmatpush1.msra.mxu0 %v426
    %2479 = vmatprep.subr.mxu0 %v385
    %2480 = vmatpush1.msra.mxu0 %v384
    %2481 = vmatprep.subr.mxu0 %v343
    %2482 = vmatpush1.msra.mxu0 %v342
    %2483 = vmatprep.subr.mxu0 %v301
    %2484 = vmatpush1.msra.mxu0 %v300
    %2485 = vmatprep.subr.mxu0 %v259
    %2486 = vmatpush1.msra.mxu0 %v258
    %2487 = vmatprep.subr.mxu0 %v217
    %2488 = vmatpush1.msra.mxu0 %v216
    %2489 = vmatprep.subr.mxu0 %v175
    %2490 = vmatpush1.msra.mxu0 %v174
    %2491 = vmatprep.subr.mxu0 %v133
    %2492 = vmatpush1.msra.mxu0 %v132
    %2493 = vmatprep.subr.mxu0 %v91
    %2494 = vmatpush1.msra.mxu0 %v90
    %2495 = vmatprep.subr.mxu0 %v49
    %2496 = vmatpush1.msra.mxu0 %v48
    %2497 = vmatprep.subr.mxu0 0.0
    %2498 = vmatpush2.msra.mxu0 0.0
    %2499 = vmatprep.subr.mxu0 0.0
    %2500 = vmatpush2.msra.mxu0 0.0
    %2501 = vmatprep.subr.mxu0 0.0
    %2502 = vmatpush2.msra.mxu0 0.0
    %2503 = vmatprep.subr.mxu0 0.0
    %2504 = vmatpush2.msra.mxu0 0.0
    %2505 = vmatprep.subr.mxu0 0.0
    %2506 = vmatpush2.msra.mxu0 0.0
    %2507 = vmatprep.subr.mxu0 %v1141
    %2508 = vmatpush2.msra.mxu0 %v1140
    %2509 = vmatprep.subr.mxu0 %v1099
    %2510 = vmatpush2.msra.mxu0 %v1098
    %2511 = vmatprep.subr.mxu0 %v1057
    %2512 = vmatpush2.msra.mxu0 %v1056
    %2513 = vmatprep.subr.mxu0 %v1015
    %2514 = vmatpush2.msra.mxu0 %v1014
    %2515 = vmatprep.subr.mxu0 %v973
    %2516 = vmatpush2.msra.mxu0 %v972
    %2517 = vmatprep.subr.mxu0 %v931
    %2518 = vmatpush2.msra.mxu0 %v930
    %2519 = vmatprep.subr.mxu0 %v889
    %2520 = vmatpush2.msra.mxu0 %v888
    %2521 = vmatprep.subr.mxu0 %v847
    %2522 = vmatpush2.msra.mxu0 %v846
    %2523 = vmatprep.subr.mxu0 %v805
    %2524 = vmatpush2.msra.mxu0 %v804
    %2525 = vmatprep.subr.mxu0 %v763
    %2526 = vmatpush2.msra.mxu0 %v762
    %2527 = vmatprep.subr.mxu0 %v721
    %2528 = vmatpush2.msra.mxu0 %v720
    %2529 = vmatprep.mubr.f32.mxu0 %v1398
    %2530 = vmatmul.mubr.f32.gmra.mxu0 %v1394
    %v2531 = vpop.f32.mrf.mxu0
    %v2532 = vadd.f32 %v1287, %v2531
    %v2533 = vpop.f32.mrf.mxu0
    %v2534 = vadd.f32 %v1291, %v2533
    %2535 = vdwg.mxu0
    %2536 = vmatprep.subr.mxu0 %v681
    %2537 = vmatpush1.msra.mxu0 %v680
    %2538 = vmatprep.subr.mxu0 %v639
    %2539 = vmatpush1.msra.mxu0 %v638
    %2540 = vmatprep.subr.mxu0 %v597
    %2541 = vmatpush1.msra.mxu0 %v596
    %2542 = vmatprep.subr.mxu0 %v555
    %2543 = vmatpush1.msra.mxu0 %v554
    %2544 = vmatprep.subr.mxu0 %v513
    %2545 = vmatpush1.msra.mxu0 %v512
    %2546 = vmatprep.subr.mxu0 %v471
    %2547 = vmatpush1.msra.mxu0 %v470
    %2548 = vmatprep.subr.mxu0 %v429
    %2549 = vmatpush1.msra.mxu0 %v428
    %2550 = vmatprep.subr.mxu0 %v387
    %2551 = vmatpush1.msra.mxu0 %v386
    %2552 = vmatprep.subr.mxu0 %v345
    %2553 = vmatpush1.msra.mxu0 %v344
    %2554 = vmatprep.subr.mxu0 %v303
    %2555 = vmatpush1.msra.mxu0 %v302
    %2556 = vmatprep.subr.mxu0 %v261
    %2557 = vmatpush1.msra.mxu0 %v260
    %2558 = vmatprep.subr.mxu0 %v219
    %2559 = vmatpush1.msra.mxu0 %v218
    %2560 = vmatprep.subr.mxu0 %v177
    %2561 = vmatpush1.msra.mxu0 %v176
    %2562 = vmatprep.subr.mxu0 %v135
    %2563 = vmatpush1.msra.mxu0 %v134
    %2564 = vmatprep.subr.mxu0 %v93
    %2565 = vmatpush1.msra.mxu0 %v92
    %2566 = vmatprep.subr.mxu0 %v51
    %2567 = vmatpush1.msra.mxu0 %v50
    %2568 = vmatprep.subr.mxu0 0.0
    %2569 = vmatpush2.msra.mxu0 0.0
    %2570 = vmatprep.subr.mxu0 0.0
    %2571 = vmatpush2.msra.mxu0 0.0
    %2572 = vmatprep.subr.mxu0 0.0
    %2573 = vmatpush2.msra.mxu0 0.0
    %2574 = vmatprep.subr.mxu0 0.0
    %2575 = vmatpush2.msra.mxu0 0.0
    %2576 = vmatprep.subr.mxu0 0.0
    %2577 = vmatpush2.msra.mxu0 0.0
    %2578 = vmatprep.subr.mxu0 %v1143
    %2579 = vmatpush2.msra.mxu0 %v1142
    %2580 = vmatprep.subr.mxu0 %v1101
    %2581 = vmatpush2.msra.mxu0 %v1100
    %2582 = vmatprep.subr.mxu0 %v1059
    %2583 = vmatpush2.msra.mxu0 %v1058
    %2584 = vmatprep.subr.mxu0 %v1017
    %2585 = vmatpush2.msra.mxu0 %v1016
    %2586 = vmatprep.subr.mxu0 %v975
    %2587 = vmatpush2.msra.mxu0 %v974
    %2588 = vmatprep.subr.mxu0 %v933
    %2589 = vmatpush2.msra.mxu0 %v932
    %2590 = vmatprep.subr.mxu0 %v891
    %2591 = vmatpush2.msra.mxu0 %v890
    %2592 = vmatprep.subr.mxu0 %v849
    %2593 = vmatpush2.msra.mxu0 %v848
    %2594 = vmatprep.subr.mxu0 %v807
    %2595 = vmatpush2.msra.mxu0 %v806
    %2596 = vmatprep.subr.mxu0 %v765
    %2597 = vmatpush2.msra.mxu0 %v764
    %2598 = vmatprep.subr.mxu0 %v723
    %2599 = vmatpush2.msra.mxu0 %v722
    %2600 = vmatprep.mubr.f32.mxu0 %v1398
    %2601 = vmatmul.mubr.f32.gmra.mxu0 %v1394
    %v2602 = vpop.f32.mrf.mxu0
    %v2603 = vadd.f32 %v1295, %v2602
    %v2604 = vpop.f32.mrf.mxu0
    %v2605 = vadd.f32 %v1299, %v2604
    %2606 = vdwg.mxu0
    %2607 = vmatprep.subr.mxu0 %v683
    %2608 = vmatpush1.msra.mxu0 %v682
    %2609 = vmatprep.subr.mxu0 %v641
    %2610 = vmatpush1.msra.mxu0 %v640
    %2611 = vmatprep.subr.mxu0 %v599
    %2612 = vmatpush1.msra.mxu0 %v598
    %2613 = vmatprep.subr.mxu0 %v557
    %2614 = vmatpush1.msra.mxu0 %v556
    %2615 = vmatprep.subr.mxu0 %v515
    %2616 = vmatpush1.msra.mxu0 %v514
    %2617 = vmatprep.subr.mxu0 %v473
    %2618 = vmatpush1.msra.mxu0 %v472
    %2619 = vmatprep.subr.mxu0 %v431
    %2620 = vmatpush1.msra.mxu0 %v430
    %2621 = vmatprep.subr.mxu0 %v389
    %2622 = vmatpush1.msra.mxu0 %v388
    %2623 = vmatprep.subr.mxu0 %v347
    %2624 = vmatpush1.msra.mxu0 %v346
    %2625 = vmatprep.subr.mxu0 %v305
    %2626 = vmatpush1.msra.mxu0 %v304
    %2627 = vmatprep.subr.mxu0 %v263
    %2628 = vmatpush1.msra.mxu0 %v262
    %2629 = vmatprep.subr.mxu0 %v221
    %2630 = vmatpush1.msra.mxu0 %v220
    %2631 = vmatprep.subr.mxu0 %v179
    %2632 = vmatpush1.msra.mxu0 %v178
    %2633 = vmatprep.subr.mxu0 %v137
    %2634 = vmatpush1.msra.mxu0 %v136
    %2635 = vmatprep.subr.mxu0 %v95
    %2636 = vmatpush1.msra.mxu0 %v94
    %2637 = vmatprep.subr.mxu0 %v53
    %2638 = vmatpush1.msra.mxu0 %v52
    %2639 = vmatprep.subr.mxu0 0.0
    %2640 = vmatpush2.msra.mxu0 0.0
    %2641 = vmatprep.subr.mxu0 0.0
    %2642 = vmatpush2.msra.mxu0 0.0
    %2643 = vmatprep.subr.mxu0 0.0
    %2644 = vmatpush2.msra.mxu0 0.0
    %2645 = vmatprep.subr.mxu0 0.0
    %2646 = vmatpush2.msra.mxu0 0.0
    %2647 = vmatprep.subr.mxu0 0.0
    %2648 = vmatpush2.msra.mxu0 0.0
    %2649 = vmatprep.subr.mxu0 %v1145
    %2650 = vmatpush2.msra.mxu0 %v1144
    %2651 = vmatprep.subr.mxu0 %v1103
    %2652 = vmatpush2.msra.mxu0 %v1102
    %2653 = vmatprep.subr.mxu0 %v1061
    %2654 = vmatpush2.msra.mxu0 %v1060
    %2655 = vmatprep.subr.mxu0 %v1019
    %2656 = vmatpush2.msra.mxu0 %v1018
    %2657 = vmatprep.subr.mxu0 %v977
    %2658 = vmatpush2.msra.mxu0 %v976
    %2659 = vmatprep.subr.mxu0 %v935
    %2660 = vmatpush2.msra.mxu0 %v934
    %2661 = vmatprep.subr.mxu0 %v893
    %2662 = vmatpush2.msra.mxu0 %v892
    %2663 = vmatprep.subr.mxu0 %v851
    %2664 = vmatpush2.msra.mxu0 %v850
    %2665 = vmatprep.subr.mxu0 %v809
    %2666 = vmatpush2.msra.mxu0 %v808
    %2667 = vmatprep.subr.mxu0 %v767
    %2668 = vmatpush2.msra.mxu0 %v766
    %2669 = vmatprep.subr.mxu0 %v725
    %2670 = vmatpush2.msra.mxu0 %v724
    %2671 = vmatprep.mubr.f32.mxu0 %v1398
    %2672 = vmatmul.mubr.f32.gmra.mxu0 %v1394
    %v2673 = vpop.f32.mrf.mxu0
    %v2674 = vadd.f32 %v1303, %v2673
    %v2675 = vpop.f32.mrf.mxu0
    %v2676 = vadd.f32 %v1307, %v2675
    %2677 = vdwg.mxu0
    %2678 = vmatprep.subr.mxu0 %v685
    %2679 = vmatpush1.msra.mxu0 %v684
    %2680 = vmatprep.subr.mxu0 %v643
    %2681 = vmatpush1.msra.mxu0 %v642
    %2682 = vmatprep.subr.mxu0 %v601
    %2683 = vmatpush1.msra.mxu0 %v600
    %2684 = vmatprep.subr.mxu0 %v559
    %2685 = vmatpush1.msra.mxu0 %v558
    %2686 = vmatprep.subr.mxu0 %v517
    %2687 = vmatpush1.msra.mxu0 %v516
    %2688 = vmatprep.subr.mxu0 %v475
    %2689 = vmatpush1.msra.mxu0 %v474
    %2690 = vmatprep.subr.mxu0 %v433
    %2691 = vmatpush1.msra.mxu0 %v432
    %2692 = vmatprep.subr.mxu0 %v391
    %2693 = vmatpush1.msra.mxu0 %v390
    %2694 = vmatprep.subr.mxu0 %v349
    %2695 = vmatpush1.msra.mxu0 %v348
    %2696 = vmatprep.subr.mxu0 %v307
    %2697 = vmatpush1.msra.mxu0 %v306
    %2698 = vmatprep.subr.mxu0 %v265
    %2699 = vmatpush1.msra.mxu0 %v264
    %2700 = vmatprep.subr.mxu0 %v223
    %2701 = vmatpush1.msra.mxu0 %v222
    %2702 = vmatprep.subr.mxu0 %v181
    %2703 = vmatpush1.msra.mxu0 %v180
    %2704 = vmatprep.subr.mxu0 %v139
    %2705 = vmatpush1.msra.mxu0 %v138
    %2706 = vmatprep.subr.mxu0 %v97
    %2707 = vmatpush1.msra.mxu0 %v96
    %2708 = vmatprep.subr.mxu0 %v55
    %2709 = vmatpush1.msra.mxu0 %v54
    %2710 = vmatprep.subr.mxu0 0.0
    %2711 = vmatpush2.msra.mxu0 0.0
    %2712 = vmatprep.subr.mxu0 0.0
    %2713 = vmatpush2.msra.mxu0 0.0
    %2714 = vmatprep.subr.mxu0 0.0
    %2715 = vmatpush2.msra.mxu0 0.0
    %2716 = vmatprep.subr.mxu0 0.0
    %2717 = vmatpush2.msra.mxu0 0.0
    %2718 = vmatprep.subr.mxu0 0.0
    %2719 = vmatpush2.msra.mxu0 0.0
    %2720 = vmatprep.subr.mxu0 %v1147
    %2721 = vmatpush2.msra.mxu0 %v1146
    %2722 = vmatprep.subr.mxu0 %v1105
    %2723 = vmatpush2.msra.mxu0 %v1104
    %2724 = vmatprep.subr.mxu0 %v1063
    %2725 = vmatpush2.msra.mxu0 %v1062
    %2726 = vmatprep.subr.mxu0 %v1021
    %2727 = vmatpush2.msra.mxu0 %v1020
    %2728 = vmatprep.subr.mxu0 %v979
    %2729 = vmatpush2.msra.mxu0 %v978
    %2730 = vmatprep.subr.mxu0 %v937
    %2731 = vmatpush2.msra.mxu0 %v936
    %2732 = vmatprep.subr.mxu0 %v895
    %2733 = vmatpush2.msra.mxu0 %v894
    %2734 = vmatprep.subr.mxu0 %v853
    %2735 = vmatpush2.msra.mxu0 %v852
    %2736 = vmatprep.subr.mxu0 %v811
    %2737 = vmatpush2.msra.mxu0 %v810
    %2738 = vmatprep.subr.mxu0 %v769
    %2739 = vmatpush2.msra.mxu0 %v768
    %2740 = vmatprep.subr.mxu0 %v727
    %2741 = vmatpush2.msra.mxu0 %v726
    %2742 = vmatprep.mubr.f32.mxu0 %v1398
    %2743 = vmatmul.mubr.f32.gmra.mxu0 %v1394
    %v2744 = vpop.f32.mrf.mxu0
    %v2745 = vadd.f32 %v1311, %v2744
    %v2746 = vpop.f32.mrf.mxu0
    %v2747 = vadd.f32 %v1315, %v2746
    %2748 = vdwg.mxu0
    %2749 = vmatprep.subr.mxu0 %v687
    %2750 = vmatpush1.msra.mxu0 %v686
    %2751 = vmatprep.subr.mxu0 %v645
    %2752 = vmatpush1.msra.mxu0 %v644
    %2753 = vmatprep.subr.mxu0 %v603
    %2754 = vmatpush1.msra.mxu0 %v602
    %2755 = vmatprep.subr.mxu0 %v561
    %2756 = vmatpush1.msra.mxu0 %v560
    %2757 = vmatprep.subr.mxu0 %v519
    %2758 = vmatpush1.msra.mxu0 %v518
    %2759 = vmatprep.subr.mxu0 %v477
    %2760 = vmatpush1.msra.mxu0 %v476
    %2761 = vmatprep.subr.mxu0 %v435
    %2762 = vmatpush1.msra.mxu0 %v434
    %2763 = vmatprep.subr.mxu0 %v393
    %2764 = vmatpush1.msra.mxu0 %v392
    %2765 = vmatprep.subr.mxu0 %v351
    %2766 = vmatpush1.msra.mxu0 %v350
    %2767 = vmatprep.subr.mxu0 %v309
    %2768 = vmatpush1.msra.mxu0 %v308
    %2769 = vmatprep.subr.mxu0 %v267
    %2770 = vmatpush1.msra.mxu0 %v266
    %2771 = vmatprep.subr.mxu0 %v225
    %2772 = vmatpush1.msra.mxu0 %v224
    %2773 = vmatprep.subr.mxu0 %v183
    %2774 = vmatpush1.msra.mxu0 %v182
    %2775 = vmatprep.subr.mxu0 %v141
    %2776 = vmatpush1.msra.mxu0 %v140
    %2777 = vmatprep.subr.mxu0 %v99
    %2778 = vmatpush1.msra.mxu0 %v98
    %2779 = vmatprep.subr.mxu0 %v57
    %2780 = vmatpush1.msra.mxu0 %v56
    %2781 = vmatprep.subr.mxu0 0.0
    %2782 = vmatpush2.msra.mxu0 0.0
    %2783 = vmatprep.subr.mxu0 0.0
    %2784 = vmatpush2.msra.mxu0 0.0
    %2785 = vmatprep.subr.mxu0 0.0
    %2786 = vmatpush2.msra.mxu0 0.0
    %2787 = vmatprep.subr.mxu0 0.0
    %2788 = vmatpush2.msra.mxu0 0.0
    %2789 = vmatprep.subr.mxu0 0.0
    %2790 = vmatpush2.msra.mxu0 0.0
    %2791 = vmatprep.subr.mxu0 %v1149
    %2792 = vmatpush2.msra.mxu0 %v1148
    %2793 = vmatprep.subr.mxu0 %v1107
    %2794 = vmatpush2.msra.mxu0 %v1106
    %2795 = vmatprep.subr.mxu0 %v1065
    %2796 = vmatpush2.msra.mxu0 %v1064
    %2797 = vmatprep.subr.mxu0 %v1023
    %2798 = vmatpush2.msra.mxu0 %v1022
    %2799 = vmatprep.subr.mxu0 %v981
    %2800 = vmatpush2.msra.mxu0 %v980
    %2801 = vmatprep.subr.mxu0 %v939
    %2802 = vmatpush2.msra.mxu0 %v938
    %2803 = vmatprep.subr.mxu0 %v897
    %2804 = vmatpush2.msra.mxu0 %v896
    %2805 = vmatprep.subr.mxu0 %v855
    %2806 = vmatpush2.msra.mxu0 %v854
    %2807 = vmatprep.subr.mxu0 %v813
    %2808 = vmatpush2.msra.mxu0 %v812
    %2809 = vmatprep.subr.mxu0 %v771
    %2810 = vmatpush2.msra.mxu0 %v770
    %2811 = vmatprep.subr.mxu0 %v729
    %2812 = vmatpush2.msra.mxu0 %v728
    %2813 = vmatprep.mubr.f32.mxu0 %v1398
    %2814 = vmatmul.mubr.f32.gmra.mxu0 %v1394
    %v2815 = vpop.f32.mrf.mxu0
    %v2816 = vadd.f32 %v1319, %v2815
    %v2817 = vpop.f32.mrf.mxu0
    %v2818 = vadd.f32 %v1323, %v2817
    %2819 = vdwg.mxu0
    %2820 = vmatprep.subr.mxu0 %v689
    %2821 = vmatpush1.msra.mxu0 %v688
    %2822 = vmatprep.subr.mxu0 %v647
    %2823 = vmatpush1.msra.mxu0 %v646
    %2824 = vmatprep.subr.mxu0 %v605
    %2825 = vmatpush1.msra.mxu0 %v604
    %2826 = vmatprep.subr.mxu0 %v563
    %2827 = vmatpush1.msra.mxu0 %v562
    %2828 = vmatprep.subr.mxu0 %v521
    %2829 = vmatpush1.msra.mxu0 %v520
    %2830 = vmatprep.subr.mxu0 %v479
    %2831 = vmatpush1.msra.mxu0 %v478
    %2832 = vmatprep.subr.mxu0 %v437
    %2833 = vmatpush1.msra.mxu0 %v436
    %2834 = vmatprep.subr.mxu0 %v395
    %2835 = vmatpush1.msra.mxu0 %v394
    %2836 = vmatprep.subr.mxu0 %v353
    %2837 = vmatpush1.msra.mxu0 %v352
    %2838 = vmatprep.subr.mxu0 %v311
    %2839 = vmatpush1.msra.mxu0 %v310
    %2840 = vmatprep.subr.mxu0 %v269
    %2841 = vmatpush1.msra.mxu0 %v268
    %2842 = vmatprep.subr.mxu0 %v227
    %2843 = vmatpush1.msra.mxu0 %v226
    %2844 = vmatprep.subr.mxu0 %v185
    %2845 = vmatpush1.msra.mxu0 %v184
    %2846 = vmatprep.subr.mxu0 %v143
    %2847 = vmatpush1.msra.mxu0 %v142
    %2848 = vmatprep.subr.mxu0 %v101
    %2849 = vmatpush1.msra.mxu0 %v100
    %2850 = vmatprep.subr.mxu0 %v59
    %2851 = vmatpush1.msra.mxu0 %v58
    %2852 = vmatprep.subr.mxu0 0.0
    %2853 = vmatpush2.msra.mxu0 0.0
    %2854 = vmatprep.subr.mxu0 0.0
    %2855 = vmatpush2.msra.mxu0 0.0
    %2856 = vmatprep.subr.mxu0 0.0
    %2857 = vmatpush2.msra.mxu0 0.0
    %2858 = vmatprep.subr.mxu0 0.0
    %2859 = vmatpush2.msra.mxu0 0.0
    %2860 = vmatprep.subr.mxu0 0.0
    %2861 = vmatpush2.msra.mxu0 0.0
    %2862 = vmatprep.subr.mxu0 %v1151
    %2863 = vmatpush2.msra.mxu0 %v1150
    %2864 = vmatprep.subr.mxu0 %v1109
    %2865 = vmatpush2.msra.mxu0 %v1108
    %2866 = vmatprep.subr.mxu0 %v1067
    %2867 = vmatpush2.msra.mxu0 %v1066
    %2868 = vmatprep.subr.mxu0 %v1025
    %2869 = vmatpush2.msra.mxu0 %v1024
    %2870 = vmatprep.subr.mxu0 %v983
    %2871 = vmatpush2.msra.mxu0 %v982
    %2872 = vmatprep.subr.mxu0 %v941
    %2873 = vmatpush2.msra.mxu0 %v940
    %2874 = vmatprep.subr.mxu0 %v899
    %2875 = vmatpush2.msra.mxu0 %v898
    %2876 = vmatprep.subr.mxu0 %v857
    %2877 = vmatpush2.msra.mxu0 %v856
    %2878 = vmatprep.subr.mxu0 %v815
    %2879 = vmatpush2.msra.mxu0 %v814
    %2880 = vmatprep.subr.mxu0 %v773
    %2881 = vmatpush2.msra.mxu0 %v772
    %2882 = vmatprep.subr.mxu0 %v731
    %2883 = vmatpush2.msra.mxu0 %v730
    %2884 = vmatprep.mubr.f32.mxu0 %v1398
    %2885 = vmatmul.mubr.f32.gmra.mxu0 %v1394
    %v2886 = vpop.f32.mrf.mxu0
    %v2887 = vadd.f32 %v1327, %v2886
    %v2888 = vpop.f32.mrf.mxu0
    %v2889 = vadd.f32 %v1331, %v2888
    %2890 = vdwg.mxu0
    %v2891 = vmax.f32 %v1467, 0.0
    %v2892 = vmax.f32 %v1469, 0.0
    %v2893 = vmax.f32 %v1538, 0.0
    %v2894 = vmax.f32 %v1540, 0.0
    %v2895 = vmax.f32 %v1609, 0.0
    %v2896 = vmax.f32 %v1611, 0.0
    %v2897 = vmax.f32 %v1680, 0.0
    %v2898 = vmax.f32 %v1682, 0.0
    %v2899 = vmax.f32 %v1751, 0.0
    %v2900 = vmax.f32 %v1753, 0.0
    %v2901 = vmax.f32 %v1822, 0.0
    %v2902 = vmax.f32 %v1824, 0.0
    %v2903 = vmax.f32 %v1893, 0.0
    %v2904 = vmax.f32 %v1895, 0.0
    %v2905 = vmax.f32 %v1964, 0.0
    %v2906 = vmax.f32 %v1966, 0.0
    %v2907 = vmax.f32 %v2035, 0.0
    %v2908 = vmax.f32 %v2037, 0.0
    %v2909 = vmax.f32 %v2106, 0.0
    %v2910 = vmax.f32 %v2108, 0.0
    %v2911 = vmax.f32 %v2177, 0.0
    %v2912 = vmax.f32 %v2179, 0.0
    %v2913 = vmax.f32 %v2248, 0.0
    %v2914 = vmax.f32 %v2250, 0.0
    %v2915 = vmax.f32 %v2319, 0.0
    %v2916 = vmax.f32 %v2321, 0.0
    %v2917 = vmax.f32 %v2390, 0.0
    %v2918 = vmax.f32 %v2392, 0.0
    %v2919 = vmax.f32 %v2461, 0.0
    %v2920 = vmax.f32 %v2463, 0.0
    %v2921 = vmax.f32 %v2532, 0.0
    %v2922 = vmax.f32 %v2534, 0.0
    %v2923 = vmax.f32 %v2603, 0.0
    %v2924 = vmax.f32 %v2605, 0.0
    %v2925 = vmax.f32 %v2674, 0.0
    %v2926 = vmax.f32 %v2676, 0.0
    %v2927 = vmax.f32 %v2745, 0.0
    %v2928 = vmax.f32 %v2747, 0.0
    %v2929 = vmax.f32 %v2816, 0.0
    %v2930 = vmax.f32 %v2818, 0.0
    %v2931 = vmax.f32 %v2887, 0.0
    %v2932 = vmax.f32 %v2889, 0.0
    %v2975 = vcombine.low %v2891, %v2892
    %v2976 = vcombine.high %v2891, %v2892
    %v2977 = vcombine.low %v2893, %v2894
    %v2978 = vcombine.high %v2893, %v2894
    %v2980 = vunpack.c.l.s4 1983009808
    %v2981 = vunpack.c.0.s8 %v2980
    %v2982 = vlaneseq
    %v2983 = vshrl.u32 %v2982, 7
    %v2984 = vsub.s32 %v2981, %v2983
    %v2985 = vrot.slane %v2975, %v2984
    %v2987 = vunpack.c.l.s4 1983009808
    %v2988 = vunpack.c.0.s8 %v2987
    %v2989 = vlaneseq
    %v2990 = vshrl.u32 %v2989, 7
    %v2991 = vsub.s32 %v2988, %v2990
    %v2992 = vrot.slane %v2976, %v2991
    %v2994 = vunpack.c.l.s4 1983009808
    %v2995 = vunpack.c.0.s8 %v2994
    %v2996 = vlaneseq
    %v2997 = vshrl.u32 %v2996, 7
    %v2998 = vsub.s32 %v2995, %v2997
    %v2999 = vrot.slane %v2977, %v2998
    %v3001 = vunpack.c.l.s4 1983009808
    %v3002 = vunpack.c.0.s8 %v3001
    %v3003 = vlaneseq
    %v3004 = vshrl.u32 %v3003, 7
    %v3005 = vsub.s32 %v3002, %v3004
    %v3006 = vrot.slane %v2978, %v3005
    %v3007 = vcombine.low %v2985, %v2999
    %v3008 = vcombine.high %v2985, %v2999
    %v3009 = vcombine.low %v2992, %v3006
    %v3010 = vcombine.high %v2992, %v3006
    %v3011 = vcombine.low %v2895, %v2896
    %v3012 = vcombine.high %v2895, %v2896
    %v3013 = vcombine.low %v2897, %v2898
    %v3014 = vcombine.high %v2897, %v2898
    %v3016 = vunpack.c.l.s4 1983009808
    %v3017 = vunpack.c.0.s8 %v3016
    %v3018 = vlaneseq
    %v3019 = vshrl.u32 %v3018, 7
    %v3020 = vsub.s32 %v3017, %v3019
    %v3021 = vrot.slane %v3011, %v3020
    %v3023 = vunpack.c.l.s4 1983009808
    %v3024 = vunpack.c.0.s8 %v3023
    %v3025 = vlaneseq
    %v3026 = vshrl.u32 %v3025, 7
    %v3027 = vsub.s32 %v3024, %v3026
    %v3028 = vrot.slane %v3012, %v3027
    %v3030 = vunpack.c.l.s4 1983009808
    %v3031 = vunpack.c.0.s8 %v3030
    %v3032 = vlaneseq
    %v3033 = vshrl.u32 %v3032, 7
    %v3034 = vsub.s32 %v3031, %v3033
    %v3035 = vrot.slane %v3013, %v3034
    %v3037 = vunpack.c.l.s4 1983009808
    %v3038 = vunpack.c.0.s8 %v3037
    %v3039 = vlaneseq
    %v3040 = vshrl.u32 %v3039, 7
    %v3041 = vsub.s32 %v3038, %v3040
    %v3042 = vrot.slane %v3014, %v3041
    %v3043 = vcombine.low %v3021, %v3035
    %v3044 = vcombine.high %v3021, %v3035
    %v3045 = vcombine.low %v3028, %v3042
    %v3046 = vcombine.high %v3028, %v3042
    %v3047 = vcombine.low %v2899, %v2900
    %v3048 = vcombine.high %v2899, %v2900
    %v3049 = vcombine.low %v2901, %v2902
    %v3050 = vcombine.high %v2901, %v2902
    %v3052 = vunpack.c.l.s4 1983009808
    %v3053 = vunpack.c.0.s8 %v3052
    %v3054 = vlaneseq
    %v3055 = vshrl.u32 %v3054, 7
    %v3056 = vsub.s32 %v3053, %v3055
    %v3057 = vrot.slane %v3047, %v3056
    %v3059 = vunpack.c.l.s4 1983009808
    %v3060 = vunpack.c.0.s8 %v3059
    %v3061 = vlaneseq
    %v3062 = vshrl.u32 %v3061, 7
    %v3063 = vsub.s32 %v3060, %v3062
    %v3064 = vrot.slane %v3048, %v3063
    %v3066 = vunpack.c.l.s4 1983009808
    %v3067 = vunpack.c.0.s8 %v3066
    %v3068 = vlaneseq
    %v3069 = vshrl.u32 %v3068, 7
    %v3070 = vsub.s32 %v3067, %v3069
    %v3071 = vrot.slane %v3049, %v3070
    %v3073 = vunpack.c.l.s4 1983009808
    %v3074 = vunpack.c.0.s8 %v3073
    %v3075 = vlaneseq
    %v3076 = vshrl.u32 %v3075, 7
    %v3077 = vsub.s32 %v3074, %v3076
    %v3078 = vrot.slane %v3050, %v3077
    %v3079 = vcombine.low %v3057, %v3071
    %v3080 = vcombine.high %v3057, %v3071
    %v3081 = vcombine.low %v3064, %v3078
    %v3082 = vcombine.high %v3064, %v3078
    %v3083 = vcombine.low %v2903, %v2904
    %v3084 = vcombine.high %v2903, %v2904
    %v3085 = vcombine.low %v2905, %v2906
    %v3086 = vcombine.high %v2905, %v2906
    %v3088 = vunpack.c.l.s4 1983009808
    %v3089 = vunpack.c.0.s8 %v3088
    %v3090 = vlaneseq
    %v3091 = vshrl.u32 %v3090, 7
    %v3092 = vsub.s32 %v3089, %v3091
    %v3093 = vrot.slane %v3083, %v3092
    %v3095 = vunpack.c.l.s4 1983009808
    %v3096 = vunpack.c.0.s8 %v3095
    %v3097 = vlaneseq
    %v3098 = vshrl.u32 %v3097, 7
    %v3099 = vsub.s32 %v3096, %v3098
    %v3100 = vrot.slane %v3084, %v3099
    %v3102 = vunpack.c.l.s4 1983009808
    %v3103 = vunpack.c.0.s8 %v3102
    %v3104 = vlaneseq
    %v3105 = vshrl.u32 %v3104, 7
    %v3106 = vsub.s32 %v3103, %v3105
    %v3107 = vrot.slane %v3085, %v3106
    %v3109 = vunpack.c.l.s4 1983009808
    %v3110 = vunpack.c.0.s8 %v3109
    %v3111 = vlaneseq
    %v3112 = vshrl.u32 %v3111, 7
    %v3113 = vsub.s32 %v3110, %v3112
    %v3114 = vrot.slane %v3086, %v3113
    %v3115 = vcombine.low %v3093, %v3107
    %v3116 = vcombine.high %v3093, %v3107
    %v3117 = vcombine.low %v3100, %v3114
    %v3118 = vcombine.high %v3100, %v3114
    %v3119 = vcombine.low %v2907, %v2908
    %v3120 = vcombine.high %v2907, %v2908
    %v3121 = vcombine.low %v2909, %v2910
    %v3122 = vcombine.high %v2909, %v2910
    %v3124 = vunpack.c.l.s4 1983009808
    %v3125 = vunpack.c.0.s8 %v3124
    %v3126 = vlaneseq
    %v3127 = vshrl.u32 %v3126, 7
    %v3128 = vsub.s32 %v3125, %v3127
    %v3129 = vrot.slane %v3119, %v3128
    %v3131 = vunpack.c.l.s4 1983009808
    %v3132 = vunpack.c.0.s8 %v3131
    %v3133 = vlaneseq
    %v3134 = vshrl.u32 %v3133, 7
    %v3135 = vsub.s32 %v3132, %v3134
    %v3136 = vrot.slane %v3120, %v3135
    %v3138 = vunpack.c.l.s4 1983009808
    %v3139 = vunpack.c.0.s8 %v3138
    %v3140 = vlaneseq
    %v3141 = vshrl.u32 %v3140, 7
    %v3142 = vsub.s32 %v3139, %v3141
    %v3143 = vrot.slane %v3121, %v3142
    %v3145 = vunpack.c.l.s4 1983009808
    %v3146 = vunpack.c.0.s8 %v3145
    %v3147 = vlaneseq
    %v3148 = vshrl.u32 %v3147, 7
    %v3149 = vsub.s32 %v3146, %v3148
    %v3150 = vrot.slane %v3122, %v3149
    %v3151 = vcombine.low %v3129, %v3143
    %v3152 = vcombine.high %v3129, %v3143
    %v3153 = vcombine.low %v3136, %v3150
    %v3154 = vcombine.high %v3136, %v3150
    %v3155 = vcombine.low %v2911, %v2912
    %v3156 = vcombine.high %v2911, %v2912
    %v3157 = vcombine.low %v2913, %v2914
    %v3158 = vcombine.high %v2913, %v2914
    %v3160 = vunpack.c.l.s4 1983009808
    %v3161 = vunpack.c.0.s8 %v3160
    %v3162 = vlaneseq
    %v3163 = vshrl.u32 %v3162, 7
    %v3164 = vsub.s32 %v3161, %v3163
    %v3165 = vrot.slane %v3155, %v3164
    %v3167 = vunpack.c.l.s4 1983009808
    %v3168 = vunpack.c.0.s8 %v3167
    %v3169 = vlaneseq
    %v3170 = vshrl.u32 %v3169, 7
    %v3171 = vsub.s32 %v3168, %v3170
    %v3172 = vrot.slane %v3156, %v3171
    %v3174 = vunpack.c.l.s4 1983009808
    %v3175 = vunpack.c.0.s8 %v3174
    %v3176 = vlaneseq
    %v3177 = vshrl.u32 %v3176, 7
    %v3178 = vsub.s32 %v3175, %v3177
    %v3179 = vrot.slane %v3157, %v3178
    %v3181 = vunpack.c.l.s4 1983009808
    %v3182 = vunpack.c.0.s8 %v3181
    %v3183 = vlaneseq
    %v3184 = vshrl.u32 %v3183, 7
    %v3185 = vsub.s32 %v3182, %v3184
    %v3186 = vrot.slane %v3158, %v3185
    %v3187 = vcombine.low %v3165, %v3179
    %v3188 = vcombine.high %v3165, %v3179
    %v3189 = vcombine.low %v3172, %v3186
    %v3190 = vcombine.high %v3172, %v3186
    %v3191 = vcombine.low %v2915, %v2916
    %v3192 = vcombine.high %v2915, %v2916
    %v3193 = vcombine.low %v2917, %v2918
    %v3194 = vcombine.high %v2917, %v2918
    %v3196 = vunpack.c.l.s4 1983009808
    %v3197 = vunpack.c.0.s8 %v3196
    %v3198 = vlaneseq
    %v3199 = vshrl.u32 %v3198, 7
    %v3200 = vsub.s32 %v3197, %v3199
    %v3201 = vrot.slane %v3191, %v3200
    %v3203 = vunpack.c.l.s4 1983009808
    %v3204 = vunpack.c.0.s8 %v3203
    %v3205 = vlaneseq
    %v3206 = vshrl.u32 %v3205, 7
    %v3207 = vsub.s32 %v3204, %v3206
    %v3208 = vrot.slane %v3192, %v3207
    %v3210 = vunpack.c.l.s4 1983009808
    %v3211 = vunpack.c.0.s8 %v3210
    %v3212 = vlaneseq
    %v3213 = vshrl.u32 %v3212, 7
    %v3214 = vsub.s32 %v3211, %v3213
    %v3215 = vrot.slane %v3193, %v3214
    %v3217 = vunpack.c.l.s4 1983009808
    %v3218 = vunpack.c.0.s8 %v3217
    %v3219 = vlaneseq
    %v3220 = vshrl.u32 %v3219, 7
    %v3221 = vsub.s32 %v3218, %v3220
    %v3222 = vrot.slane %v3194, %v3221
    %v3223 = vcombine.low %v3201, %v3215
    %v3224 = vcombine.high %v3201, %v3215
    %v3225 = vcombine.low %v3208, %v3222
    %v3226 = vcombine.high %v3208, %v3222
    %v3227 = vcombine.low %v2919, %v2920
    %v3228 = vcombine.high %v2919, %v2920
    %v3229 = vcombine.low %v2921, %v2922
    %v3230 = vcombine.high %v2921, %v2922
    %v3232 = vunpack.c.l.s4 1983009808
    %v3233 = vunpack.c.0.s8 %v3232
    %v3234 = vlaneseq
    %v3235 = vshrl.u32 %v3234, 7
    %v3236 = vsub.s32 %v3233, %v3235
    %v3237 = vrot.slane %v3227, %v3236
    %v3239 = vunpack.c.l.s4 1983009808
    %v3240 = vunpack.c.0.s8 %v3239
    %v3241 = vlaneseq
    %v3242 = vshrl.u32 %v3241, 7
    %v3243 = vsub.s32 %v3240, %v3242
    %v3244 = vrot.slane %v3228, %v3243
    %v3246 = vunpack.c.l.s4 1983009808
    %v3247 = vunpack.c.0.s8 %v3246
    %v3248 = vlaneseq
    %v3249 = vshrl.u32 %v3248, 7
    %v3250 = vsub.s32 %v3247, %v3249
    %v3251 = vrot.slane %v3229, %v3250
    %v3253 = vunpack.c.l.s4 1983009808
    %v3254 = vunpack.c.0.s8 %v3253
    %v3255 = vlaneseq
    %v3256 = vshrl.u32 %v3255, 7
    %v3257 = vsub.s32 %v3254, %v3256
    %v3258 = vrot.slane %v3230, %v3257
    %v3259 = vcombine.low %v3237, %v3251
    %v3260 = vcombine.high %v3237, %v3251
    %v3261 = vcombine.low %v3244, %v3258
    %v3262 = vcombine.high %v3244, %v3258
    %v3263 = vcombine.low %v2923, %v2924
    %v3264 = vcombine.high %v2923, %v2924
    %v3265 = vcombine.low %v2925, %v2926
    %v3266 = vcombine.high %v2925, %v2926
    %v3268 = vunpack.c.l.s4 1983009808
    %v3269 = vunpack.c.0.s8 %v3268
    %v3270 = vlaneseq
    %v3271 = vshrl.u32 %v3270, 7
    %v3272 = vsub.s32 %v3269, %v3271
    %v3273 = vrot.slane %v3263, %v3272
    %v3275 = vunpack.c.l.s4 1983009808
    %v3276 = vunpack.c.0.s8 %v3275
    %v3277 = vlaneseq
    %v3278 = vshrl.u32 %v3277, 7
    %v3279 = vsub.s32 %v3276, %v3278
    %v3280 = vrot.slane %v3264, %v3279
    %v3282 = vunpack.c.l.s4 1983009808
    %v3283 = vunpack.c.0.s8 %v3282
    %v3284 = vlaneseq
    %v3285 = vshrl.u32 %v3284, 7
    %v3286 = vsub.s32 %v3283, %v3285
    %v3287 = vrot.slane %v3265, %v3286
    %v3289 = vunpack.c.l.s4 1983009808
    %v3290 = vunpack.c.0.s8 %v3289
    %v3291 = vlaneseq
    %v3292 = vshrl.u32 %v3291, 7
    %v3293 = vsub.s32 %v3290, %v3292
    %v3294 = vrot.slane %v3266, %v3293
    %v3295 = vcombine.low %v3273, %v3287
    %v3296 = vcombine.high %v3273, %v3287
    %v3297 = vcombine.low %v3280, %v3294
    %v3298 = vcombine.high %v3280, %v3294
    %v3299 = vcombine.low %v2927, %v2928
    %v3300 = vcombine.high %v2927, %v2928
    %v3301 = vcombine.low %v2929, %v2930
    %v3302 = vcombine.high %v2929, %v2930
    %v3304 = vunpack.c.l.s4 1983009808
    %v3305 = vunpack.c.0.s8 %v3304
    %v3306 = vlaneseq
    %v3307 = vshrl.u32 %v3306, 7
    %v3308 = vsub.s32 %v3305, %v3307
    %v3309 = vrot.slane %v3299, %v3308
    %v3311 = vunpack.c.l.s4 1983009808
    %v3312 = vunpack.c.0.s8 %v3311
    %v3313 = vlaneseq
    %v3314 = vshrl.u32 %v3313, 7
    %v3315 = vsub.s32 %v3312, %v3314
    %v3316 = vrot.slane %v3300, %v3315
    %v3318 = vunpack.c.l.s4 1983009808
    %v3319 = vunpack.c.0.s8 %v3318
    %v3320 = vlaneseq
    %v3321 = vshrl.u32 %v3320, 7
    %v3322 = vsub.s32 %v3319, %v3321
    %v3323 = vrot.slane %v3301, %v3322
    %v3325 = vunpack.c.l.s4 1983009808
    %v3326 = vunpack.c.0.s8 %v3325
    %v3327 = vlaneseq
    %v3328 = vshrl.u32 %v3327, 7
    %v3329 = vsub.s32 %v3326, %v3328
    %v3330 = vrot.slane %v3302, %v3329
    %v3331 = vcombine.low %v3309, %v3323
    %v3332 = vcombine.high %v3309, %v3323
    %v3333 = vcombine.low %v3316, %v3330
    %v3334 = vcombine.high %v3316, %v3330
    %v3335 = vcombine.low %v2931, %v2932
    %v3336 = vcombine.high %v2931, %v2932
    %v3338 = vunpack.c.l.s4 1983009808
    %v3339 = vunpack.c.0.s8 %v3338
    %v3340 = vlaneseq
    %v3341 = vshrl.u32 %v3340, 7
    %v3342 = vsub.s32 %v3339, %v3341
    %v3343 = vrot.slane %v3335, %v3342
    %v3345 = vunpack.c.l.s4 1983009808
    %v3346 = vunpack.c.0.s8 %v3345
    %v3347 = vlaneseq
    %v3348 = vshrl.u32 %v3347, 7
    %v3349 = vsub.s32 %v3346, %v3348
    %v3350 = vrot.slane %v3336, %v3349
    %v3351 = vcombine.high %v3343, %v3343
    %v3352 = vcombine.high %v3350, %v3350
    %3397 = vst [vmem:[#allocation2] sm:$0xff] %v3007
    %3398 = vst [vmem:[#allocation2 + $0x8] sm:$0xff] %v3043
    %3399 = vst [vmem:[#allocation2 + $0x10] sm:$0xff] %v3079
    %3400 = vst [vmem:[#allocation2 + $0x18] sm:$0xff] %v3115
    %3401 = vst [vmem:[#allocation2 + $0x20] sm:$0xff] %v3151
    %3402 = vst [vmem:[#allocation2 + $0x28] sm:$0xff] %v3187
    %3403 = vst [vmem:[#allocation2 + $0x30] sm:$0xff] %v3223
    %3404 = vst [vmem:[#allocation2 + $0x38] sm:$0xff] %v3259
    %3405 = vst [vmem:[#allocation2 + $0x40] sm:$0xff] %v3295
    %3406 = vst [vmem:[#allocation2 + $0x48] sm:$0xff] %v3331
    %3407 = vst [vmem:[#allocation2 + $0x50] sm:$0xf] %v3343
    %3408 = vst [vmem:[#allocation2 + $0x54] sm:$0xff] %v3008
    %3409 = vst [vmem:[#allocation2 + $0x5c] sm:$0xff] %v3044
    %3410 = vst [vmem:[#allocation2 + $0x64] sm:$0xff] %v3080
    %3411 = vst [vmem:[#allocation2 + $0x6c] sm:$0xff] %v3116
    %3412 = vst [vmem:[#allocation2 + $0x74] sm:$0xff] %v3152
    %3413 = vst [vmem:[#allocation2 + $0x7c] sm:$0xff] %v3188
    %3414 = vst [vmem:[#allocation2 + $0x84] sm:$0xff] %v3224
    %3415 = vst [vmem:[#allocation2 + $0x8c] sm:$0xff] %v3260
    %3416 = vst [vmem:[#allocation2 + $0x94] sm:$0xff] %v3296
    %3417 = vst [vmem:[#allocation2 + $0x9c] sm:$0xff] %v3332
    %3418 = vst [vmem:[#allocation2 + $0xa4] sm:$0xf] %v3351
    %3419 = vst [vmem:[#allocation2 + $0xa8] sm:$0xff] %v3009
    %3420 = vst [vmem:[#allocation2 + $0xb0] sm:$0xff] %v3045
    %3421 = vst [vmem:[#allocation2 + $0xb8] sm:$0xff] %v3081
    %3422 = vst [vmem:[#allocation2 + $0xc0] sm:$0xff] %v3117
    %3423 = vst [vmem:[#allocation2 + $0xc8] sm:$0xff] %v3153
    %3424 = vst [vmem:[#allocation2 + $0xd0] sm:$0xff] %v3189
    %3425 = vst [vmem:[#allocation2 + $0xd8] sm:$0xff] %v3225
    %3426 = vst [vmem:[#allocation2 + $0xe0] sm:$0xff] %v3261
    %3427 = vst [vmem:[#allocation2 + $0xe8] sm:$0xff] %v3297
    %3428 = vst [vmem:[#allocation2 + $0xf0] sm:$0xff] %v3333
    %3429 = vst [vmem:[#allocation2 + $0xf8] sm:$0xf] %v3350
    %3430 = vst [vmem:[#allocation2 + $0xfc] sm:$0xff] %v3010
    %3431 = vst [vmem:[#allocation2 + $0x104] sm:$0xff] %v3046
    %3432 = vst [vmem:[#allocation2 + $0x10c] sm:$0xff] %v3082
    %3433 = vst [vmem:[#allocation2 + $0x114] sm:$0xff] %v3118
    %3434 = vst [vmem:[#allocation2 + $0x11c] sm:$0xff] %v3154
    %3435 = vst [vmem:[#allocation2 + $0x124] sm:$0xff] %v3190
    %3436 = vst [vmem:[#allocation2 + $0x12c] sm:$0xff] %v3226
    %3437 = vst [vmem:[#allocation2 + $0x134] sm:$0xff] %v3262
    %3438 = vst [vmem:[#allocation2 + $0x13c] sm:$0xff] %v3298
    %3439 = vst [vmem:[#allocation2 + $0x144] sm:$0xff] %v3334
    %3440 = vst [vmem:[#allocation2 + $0x14c] sm:$0xf] %v3352
    // Predicated region
    $region14: #{conv_block_forward.1} parent=1 // pred_check
      _
    $region15: #{conv_block_forward.1} parent=1 // pred_check_branch
      %3442 = sbr.rel (0) target = $region17
    $region16: #{conv_block_forward.1} parent=1 // pred_region
      // Predicated region
      $region18: #{conv_block_forward.1} parent=16 // pred_check
        _
      $region19: #{conv_block_forward.1} parent=16 // pred_check_branch
        %3444 = sbr.rel (0) target = $region21
      $region20: #{conv_block_forward.1} parent=16 // pred_region
        // Predicated region
        $region22: #{conv_block_forward.1} parent=20 // pred_check
          _
        $region23: #{conv_block_forward.1} parent=20 // pred_check_branch
          %3446 = sbr.rel (0) target = $region25
        $region24: #{conv_block_forward.1} parent=20 // pred_region
          %s3447 = scalar_lea.vmem [#allocation2], 80
          %s3448 = scalar_lea.vmem %s3, 80
          loop: start=0, step=1, limit=1
          $region26: #{conv_block_forward.1} parent=24 // loop_pre_header
            _
          $region27: #{conv_block_forward.1} parent=24 // loop_header
            %s3450 = sphi 0, %s3454
            %p3451 = scmp.ge.s32.totalorder %s3450, 1
            %s3455 = sphi [#allocation2], [#allocation2]
            %s3456 = sphi %s3, %s3
          $region28: #{conv_block_forward.1} parent=24 // loop_header_branch
            %3453 = sbr.rel (%p3451) target = $region32
          $region29: #{conv_block_forward.1} parent=24 // loop_body
            %v3457 = vld [vmem:[%s3455] sm:$0xff]
            %3458 = vst [vmem:[%s3456] sm:$0xff] %v3457
            %v3459 = vld [vmem:[%s3455 + $0x8] sm:$0xff]
            %3460 = vst [vmem:[%s3456 + $0x8] sm:$0xff] %v3459
            %v3461 = vld [vmem:[%s3455 + $0x10] sm:$0xff]
            %3462 = vst [vmem:[%s3456 + $0x10] sm:$0xff] %v3461
            %v3463 = vld [vmem:[%s3455 + $0x18] sm:$0xff]
            %3464 = vst [vmem:[%s3456 + $0x18] sm:$0xff] %v3463
            %v3465 = vld [vmem:[%s3455 + $0x20] sm:$0xff]
            %3466 = vst [vmem:[%s3456 + $0x20] sm:$0xff] %v3465
            %v3467 = vld [vmem:[%s3455 + $0x28] sm:$0xff]
            %3468 = vst [vmem:[%s3456 + $0x28] sm:$0xff] %v3467
            %v3469 = vld [vmem:[%s3455 + $0x30] sm:$0xff]
            %3470 = vst [vmem:[%s3456 + $0x30] sm:$0xff] %v3469
            %v3471 = vld [vmem:[%s3455 + $0x38] sm:$0xff]
            %3472 = vst [vmem:[%s3456 + $0x38] sm:$0xff] %v3471
            %v3473 = vld [vmem:[%s3455 + $0x40] sm:$0xff]
            %3474 = vst [vmem:[%s3456 + $0x40] sm:$0xff] %v3473
            %v3475 = vld [vmem:[%s3455 + $0x48] sm:$0xff]
            %3476 = vst [vmem:[%s3456 + $0x48] sm:$0xff] %v3475
          $region30: #{conv_block_forward.1} parent=24 // loop_footer
            %s3454 = sadd.s32 1, %s3450
          $region31: #{conv_block_forward.1} parent=24 // loop_footer_branch
            %3449 = sbr.rel target = $region27
          $region32: #{conv_block_forward.1} parent=24 // loop_exit
            _
          %s3478 = ssub.s32 16, 1
          loop: start=0, step=1, limit=1
          $region33: #{conv_block_forward.1} parent=24 // loop_pre_header
            _
          $region34: #{conv_block_forward.1} parent=24 // loop_header
            %s3480 = sphi 0, %s3484
            %p3481 = scmp.ge.s32.totalorder %s3480, 1
            %s3485 = sphi %s3447, %s3447
            %s3486 = sphi %s3448, %s3448
          $region35: #{conv_block_forward.1} parent=24 // loop_header_branch
            %3483 = sbr.rel (%p3481) target = $region39
          $region36: #{conv_block_forward.1} parent=24 // loop_body
            %v3487 = vld [vmem:[%s3485] sm:%s3478]
            %3488 = vst [vmem:[%s3486] sm:%s3478] %v3487
          $region37: #{conv_block_forward.1} parent=24 // loop_footer
            %s3484 = sadd.s32 1, %s3480
          $region38: #{conv_block_forward.1} parent=24 // loop_footer_branch
            %3479 = sbr.rel target = $region34
          $region39: #{conv_block_forward.1} parent=24 // loop_exit
            _
        $region25: #{conv_block_forward.1} parent=20 // pred_fallthru
          _
      $region21: #{conv_block_forward.1} parent=16 // pred_fallthru
        _
      %3489 = vnop
    $region17: #{conv_block_forward.1} parent=1 // pred_fallthru
      _
    // Predicated region
    $region40: #{conv_block_forward.1} parent=1 // pred_check
      _
    $region41: #{conv_block_forward.1} parent=1 // pred_check_branch
      %3491 = sbr.rel (0) target = $region43
    $region42: #{conv_block_forward.1} parent=1 // pred_region
      _
    $region43: #{conv_block_forward.1} parent=1 // pred_fallthru
      _

</llo_original>
